<compile_context>
chip_gen: v5e
topology: v5e:2x2
jax: 0.10.0
libtpu: 0.0.40
codegen_flags: <defaults>
</compile_context>

<pallas_src>
import functools

import jax
import jax.numpy as jnp
from jax import lax
from jax.experimental import pallas as pl
from jax.experimental.pallas import tpu as pltpu


def _round_up(x, m):
    return (x + m - 1) // m * m


def _make_lstm_kernel(num_layers: int, t_chunk: int, hidden_dim: int,
                      compute_dtype, unroll: int):
    H = hidden_dim
    Tc = t_chunk
    # bf16 gate nonlinearities only when the bf16 MXU path is selected
    # (v6e/v7x EUP is bf16-native; keep f32 everywhere on v5e via compute_dtype=f32).
    act_dtype = (jnp.bfloat16
                 if jnp.dtype(compute_dtype) == jnp.dtype(jnp.bfloat16)
                 else jnp.float32)

    def kernel(x_ref, *refs):
        # refs: [w_ih_0, w_hh_0, b_0, ..., fc_w, fc_b, out_ref,
        #        gx_scratch, seq_scratch, h_state, c_state]
        layer_refs = refs[: 3 * num_layers]
        fc_w_ref = refs[3 * num_layers]
        fc_b_ref = refs[3 * num_layers + 1]
        out_ref = refs[3 * num_layers + 2]
        gx_ref = refs[3 * num_layers + 3]    # VMEM [Tc, B_TILE, 4H] f32
        seq_ref = refs[3 * num_layers + 4]   # VMEM [Tc, B_TILE, H]  compute_dtype
        h_ref = refs[3 * num_layers + 5]     # VMEM [L, B_TILE, H]   f32 (persistent)
        c_ref = refs[3 * num_layers + 6]     # VMEM [L, B_TILE, H]   f32 (persistent)

        B = x_ref.shape[1]                   # B_TILE
        t_idx = pl.program_id(1)

        # Reset the recurrent carry at the start of every batch tile's time sweep.
        @pl.when(t_idx == 0)
        def _():
            h_ref[...] = jnp.zeros_like(h_ref)
            c_ref[...] = jnp.zeros_like(c_ref)

        for layer in range(num_layers):
            w_ih = layer_refs[3 * layer][...]       # [in_l, 4H] compute_dtype
            w_hh = layer_refs[3 * layer + 1][...]   # [H, 4H]    compute_dtype
            b = layer_refs[3 * layer + 2][...]      # [1, 4H]    f32 (b_ih + b_hh)

            # ---- Hoisted input projection: one large MXU matmul per layer/chunk ----
            if layer == 0:
                x_all = x_ref[...]                  # [Tc, B, D_in] compute_dtype
            else:
                x_all = seq_ref[...]                # [Tc, B, H]    compute_dtype
            in_l = x_all.shape[-1]
            x_flat = x_all.reshape(Tc * B, in_l).astype(compute_dtype)
            gx = jnp.dot(x_flat, w_ih, preferred_element_type=jnp.float32) + b
            gx_ref[...] = gx.reshape(Tc, B, 4 * H)

            write_seq = layer < num_layers - 1      # top layer only needs h_T

            def step(t, carry, _w_hh=w_hh, _write_seq=write_seq):
                h, c = carry
                gates = gx_ref[t] + jnp.dot(
                    h.astype(compute_dtype), _w_hh,
                    preferred_element_type=jnp.float32)          # [B, 4H] f32
                g = gates.astype(act_dtype)
                # PyTorch gate order: i, f, g, o
                i_g = jax.nn.sigmoid(g[:, 0 * H:1 * H]).astype(jnp.float32)
                f_g = jax.nn.sigmoid(g[:, 1 * H:2 * H]).astype(jnp.float32)
                g_g = jnp.tanh(g[:, 2 * H:3 * H]).astype(jnp.float32)
                o_g = jax.nn.sigmoid(g[:, 3 * H:4 * H]).astype(jnp.float32)
                c_new = f_g * c + i_g * g_g
                h_new = o_g * jnp.tanh(c_new)
                if _write_seq:
                    seq_ref[t] = h_new.astype(compute_dtype)     # next layer's input
                return h_new, c_new

            h_new, c_new = lax.fori_loop(
                0, Tc, step, (h_ref[layer], c_ref[layer]), unroll=unroll)
            h_ref[layer] = h_new
            c_ref[layer] = c_new

        # Final FC on the top layer's last hidden state (only after the last chunk;
        # the output block is resident across the "arbitrary" time axis).
        @pl.when(t_idx == pl.num_programs(1) - 1)
        def _():
            out_ref[...] = (
                jnp.dot(h_ref[num_layers - 1].astype(compute_dtype), fc_w_ref[...],
                        preferred_element_type=jnp.float32)
                + fc_b_ref[...]
            )

    return kernel


def init_params(key, input_size, hidden_dim, num_layers, output_dim):
    """Deterministic init mimicking PyTorch's U(-1/sqrt(H), 1/sqrt(H))."""
    H = hidden_dim
    bound = 1.0 / jnp.sqrt(jnp.float32(H))
    params = {"layers": [], "fc_w": None, "fc_b": None}
    in_size = input_size
    for _ in range(num_layers):
        key, k1, k2, k3, k4 = jax.random.split(key, 5)
        w_ih = jax.random.uniform(k1, (4 * H, in_size), jnp.float32, -bound, bound)
        w_hh = jax.random.uniform(k2, (4 * H, H), jnp.float32, -bound, bound)
        b_ih = jax.random.uniform(k3, (4 * H,), jnp.float32, -bound, bound)
        b_hh = jax.random.uniform(k4, (4 * H,), jnp.float32, -bound, bound)
        params["layers"].append((w_ih, w_hh, b_ih, b_hh))
        in_size = H
    key, k1, k2 = jax.random.split(key, 3)
    fb = 1.0 / jnp.sqrt(jnp.float32(H))
    params["fc_w"] = jax.random.uniform(k1, (output_dim, H), jnp.float32, -fb, fb)
    params["fc_b"] = jax.random.uniform(k2, (output_dim,), jnp.float32, -fb, fb)
    return params


_VMEM_BUDGET = 40 * 1024 * 1024   # target live VMEM (<= ~48 MiB on v7x's 64 MiB/TC)


@functools.partial(
    jax.jit,
    static_argnames=("hidden_dim", "num_layers", "output_dim", "compute_dtype",
                     "single_buffer_weights"))
def multi_step_lstm_forward(x, params, *, hidden_dim, num_layers, output_dim,
                            compute_dtype=jnp.bfloat16,
                            single_buffer_weights=True):
    """x: [B, T, D_in] (batch-first, like PyTorch). Returns [B, output_dim].

    compute_dtype: dtype of MXU matmul operands / inter-layer activations
    (accumulation, cell state and hidden state stay f32).  bf16 is the
    recommended default on v6e/v7x; use f32 on v5e or for bit-exact checks.
    """
    B, T, D_in = x.shape
    H = hidden_dim
    H4 = 4 * H
    OUT_PAD = _round_up(max(output_dim, 1), 128)     # lane-dense FC output
    cbytes = jnp.dtype(compute_dtype).itemsize

    # ---- Batch tiling: >=2 tiles for v7x dual-TC occupancy when batch allows,
    #      256-wide tiles for very large batches to fill the v6e/v7x MXU. ----
    B_pad8 = _round_up(B, 8)
    if B_pad8 <= 128:
        B_TILE = B_pad8                               # single tile (small batch)
    elif B_pad8 < 512:
        B_TILE = min(128, _round_up((B_pad8 + 1) // 2, 16))
    else:
        B_TILE = 256
    B_pad = _round_up(B_pad8, B_TILE)
    num_b_tiles = B_pad // B_TILE

    # ---- Time chunking against the VMEM budget. ----
    # Per-timestep bytes: x chunk (double-buffered) + gx (f32) + seq (compute dtype).
    per_t = B_TILE * (D_in * cbytes * 2 + H4 * 4 + H * cbytes)
    # Fixed bytes: weights (+fc), persistent h/c carry, output block, gate temps.
    wbytes = 0
    in_l = D_in
    for _ in range(num_layers):
        wbytes += (in_l * H4 + H * H4) * cbytes + H4 * 4
        in_l = H
    wbytes += H * OUT_PAD * cbytes + OUT_PAD * 4
    wbuf = 1 if single_buffer_weights else 2
    fixed = (wbytes * wbuf
             + 2 * num_layers * B_TILE * H * 4
             + B_TILE * OUT_PAD * 4
             + 8 * B_TILE * H4 * 4)                   # headroom for gate temporaries

    T_CHUNK = 1
    for d in range(1, T + 1):
        if T % d == 0 and fixed + d * per_t <= _VMEM_BUDGET:
            T_CHUNK = d
    num_t_chunks = T // T_CHUNK
    unroll = T_CHUNK if T_CHUNK <= 8 else 4           # partial unroll at production T

    need = fixed + T_CHUNK * per_t
    vmem_limit = int(min(max(need * 1.3 + (4 << 20), 32 << 20), 64 << 20))

    # ---- Host-side data prep. ----
    x_tm = jnp.transpose(x, (1, 0, 2)).astype(compute_dtype)   # time-major [T, B, D]
    x_tm = jnp.pad(x_tm, ((0, 0), (0, B_pad - B), (0, 0)))     # zero-pad batch

    def _const_spec(shape):
        # Weight/bias blocks never change across the grid: single-buffer them.
        if single_buffer_weights:
            return pl.BlockSpec(shape, lambda b, t: (0, 0),
                                pipeline_mode=pl.Buffered(1))
        return pl.BlockSpec(shape, lambda b, t: (0, 0))

    args = [x_tm]
    in_specs = [pl.BlockSpec((T_CHUNK, B_TILE, D_in), lambda b, t: (t, b, 0))]
    for (w_ih, w_hh, b_ih, b_hh) in params["layers"]:
        in_l = w_ih.shape[1]
        args.append(jnp.transpose(w_ih).astype(compute_dtype))          # [in_l, 4H]
        args.append(jnp.transpose(w_hh).astype(compute_dtype))          # [H, 4H]
        args.append((b_ih + b_hh).reshape(1, H4).astype(jnp.float32))   # fused bias
        in_specs.append(_const_spec((in_l, H4)))
        in_specs.append(_const_spec((H, H4)))
        in_specs.append(_const_spec((1, H4)))
    fc_w = jnp.transpose(params["fc_w"]).astype(compute_dtype)          # [H, out]
    fc_w = jnp.pad(fc_w, ((0, 0), (0, OUT_PAD - output_dim)))
    fc_b = jnp.pad(params["fc_b"].astype(jnp.float32),
                   ((0, OUT_PAD - output_dim),)).reshape(1, OUT_PAD)
    args.append(fc_w)
    args.append(fc_b)
    in_specs.append(_const_spec((H, OUT_PAD)))
    in_specs.append(_const_spec((1, OUT_PAD)))

    kernel = _make_lstm_kernel(num_layers, T_CHUNK, H, compute_dtype, unroll)

    out = pl.pallas_call(
        kernel,
        out_shape=jax.ShapeDtypeStruct((B_pad, OUT_PAD), jnp.float32),
        grid=(num_b_tiles, num_t_chunks),
        in_specs=in_specs,
        out_specs=pl.BlockSpec((B_TILE, OUT_PAD), lambda b, t: (b, 0)),
        scratch_shapes=[
            pltpu.VMEM((T_CHUNK, B_TILE, H4), jnp.float32),      # hoisted gates_x
            pltpu.VMEM((T_CHUNK, B_TILE, H), compute_dtype),     # layer-to-layer seq
            pltpu.VMEM((num_layers, B_TILE, H), jnp.float32),    # persistent h carry
            pltpu.VMEM((num_layers, B_TILE, H), jnp.float32),    # persistent c carry
        ],
        compiler_params=pltpu.CompilerParams(
            dimension_semantics=("parallel", "arbitrary"),
            vmem_limit_bytes=vmem_limit),
    )(*args)
    return out[:B, :output_dim]


def _reference_forward(x, params, hidden_dim, num_layers, output_dim):
    """Pure-JAX reference with identical math, for a sanity check."""
    H = hidden_dim
    B, T, _ = x.shape
    inp = x.astype(jnp.float32)
    for (w_ih, w_hh, b_ih, b_hh) in params["layers"]:
        h = jnp.zeros((B, H), jnp.float32)
        c = jnp.zeros((B, H), jnp.float32)
        outs = []
        for t in range(T):
            g = inp[:, t, :] @ w_ih.T + h @ w_hh.T + b_ih + b_hh
            i_g = jax.nn.sigmoid(g[:, 0 * H:1 * H])
            f_g = jax.nn.sigmoid(g[:, 1 * H:2 * H])
            g_g = jnp.tanh(g[:, 2 * H:3 * H])
            o_g = jax.nn.sigmoid(g[:, 3 * H:4 * H])
            c = f_g * c + i_g * g_g
            h = o_g * jnp.tanh(c)
            outs.append(h)
        inp = jnp.stack(outs, axis=1)
    return inp[:, -1, :] @ params["fc_w"].T + params["fc_b"]


if __name__ == "__main__":
    # Small shapes implied by the module's forward: x is [B, T, input_size].
    B, T = 2, 8
    INPUT_SIZE, HIDDEN_DIM, NUM_LAYERS, OUTPUT_DIM = 16, 32, 2, 4

    key = jax.random.PRNGKey(0)
    key, kx, kp = jax.random.split(key, 3)
    x = jax.random.normal(kx, (B, T, INPUT_SIZE), jnp.float32)
    params = init_params(kp, INPUT_SIZE, HIDDEN_DIM, NUM_LAYERS, OUTPUT_DIM)

    def run(compute_dtype, single_buffer_weights):
        return multi_step_lstm_forward(
            x, params, hidden_dim=HIDDEN_DIM, num_layers=NUM_LAYERS,
            output_dim=OUTPUT_DIM, compute_dtype=compute_dtype,
            single_buffer_weights=single_buffer_weights)

    # Single-buffered (pl.Buffered(1)) weight specs save VMEM; fall back to the
    # default double-buffered specs if this jax/libtpu build rejects pipeline_mode.
    try:
        out_f32 = jax.block_until_ready(run(jnp.float32, True))
        sbw = True
    except Exception:
        out_f32 = jax.block_until_ready(run(jnp.float32, False))
        sbw = False

    ref = _reference_forward(x, params, HIDDEN_DIM, NUM_LAYERS, OUTPUT_DIM)
    assert out_f32.shape == (B, OUTPUT_DIM)
    assert jnp.allclose(out_f32, ref, atol=1e-4, rtol=1e-4), \
        "f32 Pallas output mismatch vs reference"

    # bf16 MXU-operand path (recommended production default on v6e/v7x).
    out_bf16 = jax.block_until_ready(run(jnp.bfloat16, sbw))
    assert out_bf16.shape == (B, OUTPUT_DIM)
    assert jnp.allclose(out_bf16, ref, atol=1e-1, rtol=1e-1), \
        "bf16 Pallas output mismatch vs reference"

    print("KERNEL_OK")
</pallas_src>

<mosaic_0001>
module attributes {stable_mosaic.version = 11 : i64} {
  func.func @kernel(%arg0: i32, %arg1: i32, %arg2: memref<8x8x16xf32, #tpu.memory_space<vmem>>, %arg3: memref<16x128xf32, #tpu.memory_space<vmem>>, %arg4: memref<32x128xf32, #tpu.memory_space<vmem>>, %arg5: memref<1x128xf32, #tpu.memory_space<vmem>>, %arg6: memref<32x128xf32, #tpu.memory_space<vmem>>, %arg7: memref<32x128xf32, #tpu.memory_space<vmem>>, %arg8: memref<1x128xf32, #tpu.memory_space<vmem>>, %arg9: memref<32x128xf32, #tpu.memory_space<vmem>>, %arg10: memref<1x128xf32, #tpu.memory_space<vmem>>, %arg11: memref<8x128xf32, #tpu.memory_space<vmem>>, %arg12: memref<8x8x128xf32, #tpu.memory_space<vmem>>, %arg13: memref<8x8x32xf32, #tpu.memory_space<vmem>>, %arg14: memref<2x8x32xf32, #tpu.memory_space<vmem>>, %arg15: memref<2x8x32xf32, #tpu.memory_space<vmem>>) attributes {dimension_semantics = [#tpu.dimension_semantics<parallel>, #tpu.dimension_semantics<arbitrary>], iteration_bounds = array<i64: 1, 1>, scalar_prefetch = 0 : i64, scratch_operands = 4 : i64, tpu.core_type = #tpu.core_type<tc>, window_params = [{transform_indices = @transform_0, window_bounds = array<i64: 8, 8, 16>}, {pipeline_mode = #tpu.pipeline_mode<synchronous>, transform_indices = @transform_1, window_bounds = array<i64: 16, 128>}, {pipeline_mode = #tpu.pipeline_mode<synchronous>, transform_indices = @transform_2, window_bounds = array<i64: 32, 128>}, {pipeline_mode = #tpu.pipeline_mode<synchronous>, transform_indices = @transform_3, window_bounds = array<i64: 1, 128>}, {pipeline_mode = #tpu.pipeline_mode<synchronous>, transform_indices = @transform_4, window_bounds = array<i64: 32, 128>}, {pipeline_mode = #tpu.pipeline_mode<synchronous>, transform_indices = @transform_5, window_bounds = array<i64: 32, 128>}, {pipeline_mode = #tpu.pipeline_mode<synchronous>, transform_indices = @transform_6, window_bounds = array<i64: 1, 128>}, {pipeline_mode = #tpu.pipeline_mode<synchronous>, transform_indices = @transform_7, window_bounds = array<i64: 32, 128>}, {pipeline_mode = #tpu.pipeline_mode<synchronous>, transform_indices = @transform_8, window_bounds = array<i64: 1, 128>}, {transform_indices = @transform_9, window_bounds = array<i64: 8, 128>}]} {
    %c0_i32 = arith.constant 0 : i32
    %0 = arith.cmpi eq, %arg1, %c0_i32 : i32
    %1 = arith.extui %0 : i1 to i32
    %c0_i32_0 = arith.constant 0 : i32
    %2 = arith.cmpi ne, %1, %c0_i32_0 : i32
    scf.if %2 {
      %cst_172 = arith.constant 0.000000e+00 : f32
      %558 = vector.broadcast %cst_172 : f32 to vector<2x8x32xf32>
      %c0_173 = arith.constant 0 : index
      %c0_174 = arith.constant 0 : index
      %c0_175 = arith.constant 0 : index
      %559 = vector.load %arg14[%c0_173, %c0_174, %c0_175] : memref<2x8x32xf32, #tpu.memory_space<vmem>>, vector<2x8x32xf32>
      tpu.vector_store %arg14[%c0_173, %c0_174, %c0_175], %558 {strides = array<i32>} : memref<2x8x32xf32, #tpu.memory_space<vmem>>, vector<2x8x32xf32>,
      %cst_176 = arith.constant 0.000000e+00 : f32
      %560 = vector.broadcast %cst_176 : f32 to vector<2x8x32xf32>
      %c0_177 = arith.constant 0 : index
      %c0_178 = arith.constant 0 : index
      %c0_179 = arith.constant 0 : index
      %561 = vector.load %arg15[%c0_177, %c0_178, %c0_179] : memref<2x8x32xf32, #tpu.memory_space<vmem>>, vector<2x8x32xf32>
      tpu.vector_store %arg15[%c0_177, %c0_178, %c0_179], %560 {strides = array<i32>} : memref<2x8x32xf32, #tpu.memory_space<vmem>>, vector<2x8x32xf32>,
    } else {
    }
    %c0 = arith.constant 0 : index
    %c0_1 = arith.constant 0 : index
    %3 = vector.load %arg3[%c0, %c0_1] : memref<16x128xf32, #tpu.memory_space<vmem>>, vector<16x128xf32>
    %c0_2 = arith.constant 0 : index
    %c0_3 = arith.constant 0 : index
    %4 = vector.load %arg4[%c0_2, %c0_3] : memref<32x128xf32, #tpu.memory_space<vmem>>, vector<32x128xf32>
    %c0_4 = arith.constant 0 : index
    %c0_5 = arith.constant 0 : index
    %5 = vector.load %arg5[%c0_4, %c0_5] : memref<1x128xf32, #tpu.memory_space<vmem>>, vector<1x128xf32>
    %c0_6 = arith.constant 0 : index
    %c0_7 = arith.constant 0 : index
    %c0_8 = arith.constant 0 : index
    %6 = vector.load %arg2[%c0_6, %c0_7, %c0_8] : memref<8x8x16xf32, #tpu.memory_space<vmem>>, vector<8x8x16xf32>
    %7 = vector.shape_cast %6 : vector<8x8x16xf32> to vector<64x16xf32>
    %cst = arith.constant dense<0.000000e+00> : vector<64x128xf32>
    %8 = tpu.matmul %7, %3, %cst {dimension_numbers = #tpu.dot_dimension_numbers<[1], [0], [0], [1], [0, 0, 1, 1], [], []>} : vector<64x16xf32>, vector<16x128xf32>, vector<64x128xf32> -> vector<64x128xf32>
    %9 = vector.broadcast %5 : vector<1x128xf32> to vector<64x128xf32>
    %10 = arith.addf %8, %9 : vector<64x128xf32>
    %11 = vector.shape_cast %10 : vector<64x128xf32> to vector<8x8x128xf32>
    %c0_9 = arith.constant 0 : index
    %c0_10 = arith.constant 0 : index
    %c0_11 = arith.constant 0 : index
    %12 = vector.load %arg12[%c0_9, %c0_10, %c0_11] : memref<8x8x128xf32, #tpu.memory_space<vmem>>, vector<8x8x128xf32>
    tpu.vector_store %arg12[%c0_9, %c0_10, %c0_11], %11 {strides = array<i32>} : memref<8x8x128xf32, #tpu.memory_space<vmem>>, vector<8x8x128xf32>,
    %c0_12 = arith.constant 0 : index
    %c0_13 = arith.constant 0 : index
    %c0_14 = arith.constant 0 : index
    %13 = vector.load %arg14[%c0_12, %c0_13, %c0_14] : memref<2x8x32xf32, #tpu.memory_space<vmem>>, vector<1x8x32xf32>
    %14 = vector.shape_cast %13 : vector<1x8x32xf32> to vector<8x32xf32>
    %c0_15 = arith.constant 0 : index
    %c0_16 = arith.constant 0 : index
    %c0_17 = arith.constant 0 : index
    %15 = vector.load %arg15[%c0_15, %c0_16, %c0_17] : memref<2x8x32xf32, #tpu.memory_space<vmem>>, vector<1x8x32xf32>
    %16 = vector.shape_cast %15 : vector<1x8x32xf32> to vector<8x32xf32>
    %c0_i32_18 = arith.constant 0 : i32
    %17 = arith.index_cast %c0_i32_18 : i32 to index
    %c0_19 = arith.constant 0 : index
    %c0_20 = arith.constant 0 : index
    %18 = vector.load %arg12[%17, %c0_19, %c0_20] : memref<8x8x128xf32, #tpu.memory_space<vmem>>, vector<1x8x128xf32>
    %19 = vector.shape_cast %18 : vector<1x8x128xf32> to vector<8x128xf32>
    %cst_21 = arith.constant dense<0.000000e+00> : vector<8x128xf32>
    %20 = tpu.matmul %14, %4, %cst_21 {dimension_numbers = #tpu.dot_dimension_numbers<[1], [0], [0], [1], [0, 0, 1, 1], [], []>} : vector<8x32xf32>, vector<32x128xf32>, vector<8x128xf32> -> vector<8x128xf32>
    %21 = arith.addf %19, %20 : vector<8x128xf32>
    %22 = vector.extract_strided_slice %21 {offsets = [0, 0], sizes = [8, 32], strides = [1, 1]} : vector<8x128xf32> to vector<8x32xf32>
    %23 = arith.negf %22 : vector<8x32xf32>
    %24 = math.exp %23 : vector<8x32xf32>
    %cst_22 = arith.constant 1.000000e+00 : f32
    %25 = vector.broadcast %cst_22 : f32 to vector<8x32xf32>
    %26 = arith.addf %25, %24 : vector<8x32xf32>
    %27 = arith.divf %25, %26 : vector<8x32xf32>
    %28 = vector.extract_strided_slice %21 {offsets = [0, 32], sizes = [8, 32], strides = [1, 1]} : vector<8x128xf32> to vector<8x32xf32>
    %29 = arith.negf %28 : vector<8x32xf32>
    %30 = math.exp %29 : vector<8x32xf32>
    %cst_23 = arith.constant 1.000000e+00 : f32
    %31 = vector.broadcast %cst_23 : f32 to vector<8x32xf32>
    %32 = arith.addf %31, %30 : vector<8x32xf32>
    %33 = arith.divf %31, %32 : vector<8x32xf32>
    %34 = vector.extract_strided_slice %21 {offsets = [0, 64], sizes = [8, 32], strides = [1, 1]} : vector<8x128xf32> to vector<8x32xf32>
    %35 = math.tanh %34 : vector<8x32xf32>
    %36 = vector.extract_strided_slice %21 {offsets = [0, 96], sizes = [8, 32], strides = [1, 1]} : vector<8x128xf32> to vector<8x32xf32>
    %37 = arith.negf %36 : vector<8x32xf32>
    %38 = math.exp %37 : vector<8x32xf32>
    %cst_24 = arith.constant 1.000000e+00 : f32
    %39 = vector.broadcast %cst_24 : f32 to vector<8x32xf32>
    %40 = arith.addf %39, %38 : vector<8x32xf32>
    %41 = arith.divf %39, %40 : vector<8x32xf32>
    %42 = arith.mulf %33, %16 : vector<8x32xf32>
    %43 = arith.mulf %27, %35 : vector<8x32xf32>
    %44 = arith.addf %42, %43 : vector<8x32xf32>
    %45 = math.tanh %44 : vector<8x32xf32>
    %46 = arith.mulf %41, %45 : vector<8x32xf32>
    %47 = arith.index_cast %c0_i32_18 : i32 to index
    %c0_25 = arith.constant 0 : index
    %c0_26 = arith.constant 0 : index
    %48 = vector.load %arg13[%47, %c0_25, %c0_26] : memref<8x8x32xf32, #tpu.memory_space<vmem>>, vector<1x8x32xf32>
    %49 = vector.shape_cast %48 : vector<1x8x32xf32> to vector<8x32xf32>
    %50 = vector.shape_cast %46 : vector<8x32xf32> to vector<1x8x32xf32>
    tpu.vector_store %arg13[%47, %c0_25, %c0_26], %50 {strides = array<i32>} : memref<8x8x32xf32, #tpu.memory_space<vmem>>, vector<1x8x32xf32>,
    %c1_i32 = arith.constant 1 : i32
    %51 = arith.index_cast %c1_i32 : i32 to index
    %c0_27 = arith.constant 0 : index
    %c0_28 = arith.constant 0 : index
    %52 = vector.load %arg12[%51, %c0_27, %c0_28] : memref<8x8x128xf32, #tpu.memory_space<vmem>>, vector<1x8x128xf32>
    %53 = vector.shape_cast %52 : vector<1x8x128xf32> to vector<8x128xf32>
    %cst_29 = arith.constant dense<0.000000e+00> : vector<8x128xf32>
    %54 = tpu.matmul %46, %4, %cst_29 {dimension_numbers = #tpu.dot_dimension_numbers<[1], [0], [0], [1], [0, 0, 1, 1], [], []>} : vector<8x32xf32>, vector<32x128xf32>, vector<8x128xf32> -> vector<8x128xf32>
    %55 = arith.addf %53, %54 : vector<8x128xf32>
    %56 = vector.extract_strided_slice %55 {offsets = [0, 0], sizes = [8, 32], strides = [1, 1]} : vector<8x128xf32> to vector<8x32xf32>
    %57 = arith.negf %56 : vector<8x32xf32>
    %58 = math.exp %57 : vector<8x32xf32>
    %cst_30 = arith.constant 1.000000e+00 : f32
    %59 = vector.broadcast %cst_30 : f32 to vector<8x32xf32>
    %60 = arith.addf %59, %58 : vector<8x32xf32>
    %61 = arith.divf %59, %60 : vector<8x32xf32>
    %62 = vector.extract_strided_slice %55 {offsets = [0, 32], sizes = [8, 32], strides = [1, 1]} : vector<8x128xf32> to vector<8x32xf32>
    %63 = arith.negf %62 : vector<8x32xf32>
    %64 = math.exp %63 : vector<8x32xf32>
    %cst_31 = arith.constant 1.000000e+00 : f32
    %65 = vector.broadcast %cst_31 : f32 to vector<8x32xf32>
    %66 = arith.addf %65, %64 : vector<8x32xf32>
    %67 = arith.divf %65, %66 : vector<8x32xf32>
    %68 = vector.extract_strided_slice %55 {offsets = [0, 64], sizes = [8, 32], strides = [1, 1]} : vector<8x128xf32> to vector<8x32xf32>
    %69 = math.tanh %68 : vector<8x32xf32>
    %70 = vector.extract_strided_slice %55 {offsets = [0, 96], sizes = [8, 32], strides = [1, 1]} : vector<8x128xf32> to vector<8x32xf32>
    %71 = arith.negf %70 : vector<8x32xf32>
    %72 = math.exp %71 : vector<8x32xf32>
    %cst_32 = arith.constant 1.000000e+00 : f32
    %73 = vector.broadcast %cst_32 : f32 to vector<8x32xf32>
    %74 = arith.addf %73, %72 : vector<8x32xf32>
    %75 = arith.divf %73, %74 : vector<8x32xf32>
    %76 = arith.mulf %67, %44 : vector<8x32xf32>
    %77 = arith.mulf %61, %69 : vector<8x32xf32>
    %78 = arith.addf %76, %77 : vector<8x32xf32>
    %79 = math.tanh %78 : vector<8x32xf32>
    %80 = arith.mulf %75, %79 : vector<8x32xf32>
    %81 = arith.index_cast %c1_i32 : i32 to index
    %c0_33 = arith.constant 0 : index
    %c0_34 = arith.constant 0 : index
    %82 = vector.load %arg13[%81, %c0_33, %c0_34] : memref<8x8x32xf32, #tpu.memory_space<vmem>>, vector<1x8x32xf32>
    %83 = vector.shape_cast %82 : vector<1x8x32xf32> to vector<8x32xf32>
    %84 = vector.shape_cast %80 : vector<8x32xf32> to vector<1x8x32xf32>
    tpu.vector_store %arg13[%81, %c0_33, %c0_34], %84 {strides = array<i32>} : memref<8x8x32xf32, #tpu.memory_space<vmem>>, vector<1x8x32xf32>,
    %c2_i32 = arith.constant 2 : i32
    %85 = arith.index_cast %c2_i32 : i32 to index
    %c0_35 = arith.constant 0 : index
    %c0_36 = arith.constant 0 : index
    %86 = vector.load %arg12[%85, %c0_35, %c0_36] : memref<8x8x128xf32, #tpu.memory_space<vmem>>, vector<1x8x128xf32>
    %87 = vector.shape_cast %86 : vector<1x8x128xf32> to vector<8x128xf32>
    %cst_37 = arith.constant dense<0.000000e+00> : vector<8x128xf32>
    %88 = tpu.matmul %80, %4, %cst_37 {dimension_numbers = #tpu.dot_dimension_numbers<[1], [0], [0], [1], [0, 0, 1, 1], [], []>} : vector<8x32xf32>, vector<32x128xf32>, vector<8x128xf32> -> vector<8x128xf32>
    %89 = arith.addf %87, %88 : vector<8x128xf32>
    %90 = vector.extract_strided_slice %89 {offsets = [0, 0], sizes = [8, 32], strides = [1, 1]} : vector<8x128xf32> to vector<8x32xf32>
    %91 = arith.negf %90 : vector<8x32xf32>
    %92 = math.exp %91 : vector<8x32xf32>
    %cst_38 = arith.constant 1.000000e+00 : f32
    %93 = vector.broadcast %cst_38 : f32 to vector<8x32xf32>
    %94 = arith.addf %93, %92 : vector<8x32xf32>
    %95 = arith.divf %93, %94 : vector<8x32xf32>
    %96 = vector.extract_strided_slice %89 {offsets = [0, 32], sizes = [8, 32], strides = [1, 1]} : vector<8x128xf32> to vector<8x32xf32>
    %97 = arith.negf %96 : vector<8x32xf32>
    %98 = math.exp %97 : vector<8x32xf32>
    %cst_39 = arith.constant 1.000000e+00 : f32
    %99 = vector.broadcast %cst_39 : f32 to vector<8x32xf32>
    %100 = arith.addf %99, %98 : vector<8x32xf32>
    %101 = arith.divf %99, %100 : vector<8x32xf32>
    %102 = vector.extract_strided_slice %89 {offsets = [0, 64], sizes = [8, 32], strides = [1, 1]} : vector<8x128xf32> to vector<8x32xf32>
    %103 = math.tanh %102 : vector<8x32xf32>
    %104 = vector.extract_strided_slice %89 {offsets = [0, 96], sizes = [8, 32], strides = [1, 1]} : vector<8x128xf32> to vector<8x32xf32>
    %105 = arith.negf %104 : vector<8x32xf32>
    %106 = math.exp %105 : vector<8x32xf32>
    %cst_40 = arith.constant 1.000000e+00 : f32
    %107 = vector.broadcast %cst_40 : f32 to vector<8x32xf32>
    %108 = arith.addf %107, %106 : vector<8x32xf32>
    %109 = arith.divf %107, %108 : vector<8x32xf32>
    %110 = arith.mulf %101, %78 : vector<8x32xf32>
    %111 = arith.mulf %95, %103 : vector<8x32xf32>
    %112 = arith.addf %110, %111 : vector<8x32xf32>
    %113 = math.tanh %112 : vector<8x32xf32>
    %114 = arith.mulf %109, %113 : vector<8x32xf32>
    %115 = arith.index_cast %c2_i32 : i32 to index
    %c0_41 = arith.constant 0 : index
    %c0_42 = arith.constant 0 : index
    %116 = vector.load %arg13[%115, %c0_41, %c0_42] : memref<8x8x32xf32, #tpu.memory_space<vmem>>, vector<1x8x32xf32>
    %117 = vector.shape_cast %116 : vector<1x8x32xf32> to vector<8x32xf32>
    %118 = vector.shape_cast %114 : vector<8x32xf32> to vector<1x8x32xf32>
    tpu.vector_store %arg13[%115, %c0_41, %c0_42], %118 {strides = array<i32>} : memref<8x8x32xf32, #tpu.memory_space<vmem>>, vector<1x8x32xf32>,
    %c3_i32 = arith.constant 3 : i32
    %119 = arith.index_cast %c3_i32 : i32 to index
    %c0_43 = arith.constant 0 : index
    %c0_44 = arith.constant 0 : index
    %120 = vector.load %arg12[%119, %c0_43, %c0_44] : memref<8x8x128xf32, #tpu.memory_space<vmem>>, vector<1x8x128xf32>
    %121 = vector.shape_cast %120 : vector<1x8x128xf32> to vector<8x128xf32>
    %cst_45 = arith.constant dense<0.000000e+00> : vector<8x128xf32>
    %122 = tpu.matmul %114, %4, %cst_45 {dimension_numbers = #tpu.dot_dimension_numbers<[1], [0], [0], [1], [0, 0, 1, 1], [], []>} : vector<8x32xf32>, vector<32x128xf32>, vector<8x128xf32> -> vector<8x128xf32>
    %123 = arith.addf %121, %122 : vector<8x128xf32>
    %124 = vector.extract_strided_slice %123 {offsets = [0, 0], sizes = [8, 32], strides = [1, 1]} : vector<8x128xf32> to vector<8x32xf32>
    %125 = arith.negf %124 : vector<8x32xf32>
    %126 = math.exp %125 : vector<8x32xf32>
    %cst_46 = arith.constant 1.000000e+00 : f32
    %127 = vector.broadcast %cst_46 : f32 to vector<8x32xf32>
    %128 = arith.addf %127, %126 : vector<8x32xf32>
    %129 = arith.divf %127, %128 : vector<8x32xf32>
    %130 = vector.extract_strided_slice %123 {offsets = [0, 32], sizes = [8, 32], strides = [1, 1]} : vector<8x128xf32> to vector<8x32xf32>
    %131 = arith.negf %130 : vector<8x32xf32>
    %132 = math.exp %131 : vector<8x32xf32>
    %cst_47 = arith.constant 1.000000e+00 : f32
    %133 = vector.broadcast %cst_47 : f32 to vector<8x32xf32>
    %134 = arith.addf %133, %132 : vector<8x32xf32>
    %135 = arith.divf %133, %134 : vector<8x32xf32>
    %136 = vector.extract_strided_slice %123 {offsets = [0, 64], sizes = [8, 32], strides = [1, 1]} : vector<8x128xf32> to vector<8x32xf32>
    %137 = math.tanh %136 : vector<8x32xf32>
    %138 = vector.extract_strided_slice %123 {offsets = [0, 96], sizes = [8, 32], strides = [1, 1]} : vector<8x128xf32> to vector<8x32xf32>
    %139 = arith.negf %138 : vector<8x32xf32>
    %140 = math.exp %139 : vector<8x32xf32>
    %cst_48 = arith.constant 1.000000e+00 : f32
    %141 = vector.broadcast %cst_48 : f32 to vector<8x32xf32>
    %142 = arith.addf %141, %140 : vector<8x32xf32>
    %143 = arith.divf %141, %142 : vector<8x32xf32>
    %144 = arith.mulf %135, %112 : vector<8x32xf32>
    %145 = arith.mulf %129, %137 : vector<8x32xf32>
    %146 = arith.addf %144, %145 : vector<8x32xf32>
    %147 = math.tanh %146 : vector<8x32xf32>
    %148 = arith.mulf %143, %147 : vector<8x32xf32>
    %149 = arith.index_cast %c3_i32 : i32 to index
    %c0_49 = arith.constant 0 : index
    %c0_50 = arith.constant 0 : index
    %150 = vector.load %arg13[%149, %c0_49, %c0_50] : memref<8x8x32xf32, #tpu.memory_space<vmem>>, vector<1x8x32xf32>
    %151 = vector.shape_cast %150 : vector<1x8x32xf32> to vector<8x32xf32>
    %152 = vector.shape_cast %148 : vector<8x32xf32> to vector<1x8x32xf32>
    tpu.vector_store %arg13[%149, %c0_49, %c0_50], %152 {strides = array<i32>} : memref<8x8x32xf32, #tpu.memory_space<vmem>>, vector<1x8x32xf32>,
    %c4_i32 = arith.constant 4 : i32
    %153 = arith.index_cast %c4_i32 : i32 to index
    %c0_51 = arith.constant 0 : index
    %c0_52 = arith.constant 0 : index
    %154 = vector.load %arg12[%153, %c0_51, %c0_52] : memref<8x8x128xf32, #tpu.memory_space<vmem>>, vector<1x8x128xf32>
    %155 = vector.shape_cast %154 : vector<1x8x128xf32> to vector<8x128xf32>
    %cst_53 = arith.constant dense<0.000000e+00> : vector<8x128xf32>
    %156 = tpu.matmul %148, %4, %cst_53 {dimension_numbers = #tpu.dot_dimension_numbers<[1], [0], [0], [1], [0, 0, 1, 1], [], []>} : vector<8x32xf32>, vector<32x128xf32>, vector<8x128xf32> -> vector<8x128xf32>
    %157 = arith.addf %155, %156 : vector<8x128xf32>
    %158 = vector.extract_strided_slice %157 {offsets = [0, 0], sizes = [8, 32], strides = [1, 1]} : vector<8x128xf32> to vector<8x32xf32>
    %159 = arith.negf %158 : vector<8x32xf32>
    %160 = math.exp %159 : vector<8x32xf32>
    %cst_54 = arith.constant 1.000000e+00 : f32
    %161 = vector.broadcast %cst_54 : f32 to vector<8x32xf32>
    %162 = arith.addf %161, %160 : vector<8x32xf32>
    %163 = arith.divf %161, %162 : vector<8x32xf32>
    %164 = vector.extract_strided_slice %157 {offsets = [0, 32], sizes = [8, 32], strides = [1, 1]} : vector<8x128xf32> to vector<8x32xf32>
    %165 = arith.negf %164 : vector<8x32xf32>
    %166 = math.exp %165 : vector<8x32xf32>
    %cst_55 = arith.constant 1.000000e+00 : f32
    %167 = vector.broadcast %cst_55 : f32 to vector<8x32xf32>
    %168 = arith.addf %167, %166 : vector<8x32xf32>
    %169 = arith.divf %167, %168 : vector<8x32xf32>
    %170 = vector.extract_strided_slice %157 {offsets = [0, 64], sizes = [8, 32], strides = [1, 1]} : vector<8x128xf32> to vector<8x32xf32>
    %171 = math.tanh %170 : vector<8x32xf32>
    %172 = vector.extract_strided_slice %157 {offsets = [0, 96], sizes = [8, 32], strides = [1, 1]} : vector<8x128xf32> to vector<8x32xf32>
    %173 = arith.negf %172 : vector<8x32xf32>
    %174 = math.exp %173 : vector<8x32xf32>
    %cst_56 = arith.constant 1.000000e+00 : f32
    %175 = vector.broadcast %cst_56 : f32 to vector<8x32xf32>
    %176 = arith.addf %175, %174 : vector<8x32xf32>
    %177 = arith.divf %175, %176 : vector<8x32xf32>
    %178 = arith.mulf %169, %146 : vector<8x32xf32>
    %179 = arith.mulf %163, %171 : vector<8x32xf32>
    %180 = arith.addf %178, %179 : vector<8x32xf32>
    %181 = math.tanh %180 : vector<8x32xf32>
    %182 = arith.mulf %177, %181 : vector<8x32xf32>
    %183 = arith.index_cast %c4_i32 : i32 to index
    %c0_57 = arith.constant 0 : index
    %c0_58 = arith.constant 0 : index
    %184 = vector.load %arg13[%183, %c0_57, %c0_58] : memref<8x8x32xf32, #tpu.memory_space<vmem>>, vector<1x8x32xf32>
    %185 = vector.shape_cast %184 : vector<1x8x32xf32> to vector<8x32xf32>
    %186 = vector.shape_cast %182 : vector<8x32xf32> to vector<1x8x32xf32>
    tpu.vector_store %arg13[%183, %c0_57, %c0_58], %186 {strides = array<i32>} : memref<8x8x32xf32, #tpu.memory_space<vmem>>, vector<1x8x32xf32>,
    %c5_i32 = arith.constant 5 : i32
    %187 = arith.index_cast %c5_i32 : i32 to index
    %c0_59 = arith.constant 0 : index
    %c0_60 = arith.constant 0 : index
    %188 = vector.load %arg12[%187, %c0_59, %c0_60] : memref<8x8x128xf32, #tpu.memory_space<vmem>>, vector<1x8x128xf32>
    %189 = vector.shape_cast %188 : vector<1x8x128xf32> to vector<8x128xf32>
    %cst_61 = arith.constant dense<0.000000e+00> : vector<8x128xf32>
    %190 = tpu.matmul %182, %4, %cst_61 {dimension_numbers = #tpu.dot_dimension_numbers<[1], [0], [0], [1], [0, 0, 1, 1], [], []>} : vector<8x32xf32>, vector<32x128xf32>, vector<8x128xf32> -> vector<8x128xf32>
    %191 = arith.addf %189, %190 : vector<8x128xf32>
    %192 = vector.extract_strided_slice %191 {offsets = [0, 0], sizes = [8, 32], strides = [1, 1]} : vector<8x128xf32> to vector<8x32xf32>
    %193 = arith.negf %192 : vector<8x32xf32>
    %194 = math.exp %193 : vector<8x32xf32>
    %cst_62 = arith.constant 1.000000e+00 : f32
    %195 = vector.broadcast %cst_62 : f32 to vector<8x32xf32>
    %196 = arith.addf %195, %194 : vector<8x32xf32>
    %197 = arith.divf %195, %196 : vector<8x32xf32>
    %198 = vector.extract_strided_slice %191 {offsets = [0, 32], sizes = [8, 32], strides = [1, 1]} : vector<8x128xf32> to vector<8x32xf32>
    %199 = arith.negf %198 : vector<8x32xf32>
    %200 = math.exp %199 : vector<8x32xf32>
    %cst_63 = arith.constant 1.000000e+00 : f32
    %201 = vector.broadcast %cst_63 : f32 to vector<8x32xf32>
    %202 = arith.addf %201, %200 : vector<8x32xf32>
    %203 = arith.divf %201, %202 : vector<8x32xf32>
    %204 = vector.extract_strided_slice %191 {offsets = [0, 64], sizes = [8, 32], strides = [1, 1]} : vector<8x128xf32> to vector<8x32xf32>
    %205 = math.tanh %204 : vector<8x32xf32>
    %206 = vector.extract_strided_slice %191 {offsets = [0, 96], sizes = [8, 32], strides = [1, 1]} : vector<8x128xf32> to vector<8x32xf32>
    %207 = arith.negf %206 : vector<8x32xf32>
    %208 = math.exp %207 : vector<8x32xf32>
    %cst_64 = arith.constant 1.000000e+00 : f32
    %209 = vector.broadcast %cst_64 : f32 to vector<8x32xf32>
    %210 = arith.addf %209, %208 : vector<8x32xf32>
    %211 = arith.divf %209, %210 : vector<8x32xf32>
    %212 = arith.mulf %203, %180 : vector<8x32xf32>
    %213 = arith.mulf %197, %205 : vector<8x32xf32>
    %214 = arith.addf %212, %213 : vector<8x32xf32>
    %215 = math.tanh %214 : vector<8x32xf32>
    %216 = arith.mulf %211, %215 : vector<8x32xf32>
    %217 = arith.index_cast %c5_i32 : i32 to index
    %c0_65 = arith.constant 0 : index
    %c0_66 = arith.constant 0 : index
    %218 = vector.load %arg13[%217, %c0_65, %c0_66] : memref<8x8x32xf32, #tpu.memory_space<vmem>>, vector<1x8x32xf32>
    %219 = vector.shape_cast %218 : vector<1x8x32xf32> to vector<8x32xf32>
    %220 = vector.shape_cast %216 : vector<8x32xf32> to vector<1x8x32xf32>
    tpu.vector_store %arg13[%217, %c0_65, %c0_66], %220 {strides = array<i32>} : memref<8x8x32xf32, #tpu.memory_space<vmem>>, vector<1x8x32xf32>,
    %c6_i32 = arith.constant 6 : i32
    %221 = arith.index_cast %c6_i32 : i32 to index
    %c0_67 = arith.constant 0 : index
    %c0_68 = arith.constant 0 : index
    %222 = vector.load %arg12[%221, %c0_67, %c0_68] : memref<8x8x128xf32, #tpu.memory_space<vmem>>, vector<1x8x128xf32>
    %223 = vector.shape_cast %222 : vector<1x8x128xf32> to vector<8x128xf32>
    %cst_69 = arith.constant dense<0.000000e+00> : vector<8x128xf32>
    %224 = tpu.matmul %216, %4, %cst_69 {dimension_numbers = #tpu.dot_dimension_numbers<[1], [0], [0], [1], [0, 0, 1, 1], [], []>} : vector<8x32xf32>, vector<32x128xf32>, vector<8x128xf32> -> vector<8x128xf32>
    %225 = arith.addf %223, %224 : vector<8x128xf32>
    %226 = vector.extract_strided_slice %225 {offsets = [0, 0], sizes = [8, 32], strides = [1, 1]} : vector<8x128xf32> to vector<8x32xf32>
    %227 = arith.negf %226 : vector<8x32xf32>
    %228 = math.exp %227 : vector<8x32xf32>
    %cst_70 = arith.constant 1.000000e+00 : f32
    %229 = vector.broadcast %cst_70 : f32 to vector<8x32xf32>
    %230 = arith.addf %229, %228 : vector<8x32xf32>
    %231 = arith.divf %229, %230 : vector<8x32xf32>
    %232 = vector.extract_strided_slice %225 {offsets = [0, 32], sizes = [8, 32], strides = [1, 1]} : vector<8x128xf32> to vector<8x32xf32>
    %233 = arith.negf %232 : vector<8x32xf32>
    %234 = math.exp %233 : vector<8x32xf32>
    %cst_71 = arith.constant 1.000000e+00 : f32
    %235 = vector.broadcast %cst_71 : f32 to vector<8x32xf32>
    %236 = arith.addf %235, %234 : vector<8x32xf32>
    %237 = arith.divf %235, %236 : vector<8x32xf32>
    %238 = vector.extract_strided_slice %225 {offsets = [0, 64], sizes = [8, 32], strides = [1, 1]} : vector<8x128xf32> to vector<8x32xf32>
    %239 = math.tanh %238 : vector<8x32xf32>
    %240 = vector.extract_strided_slice %225 {offsets = [0, 96], sizes = [8, 32], strides = [1, 1]} : vector<8x128xf32> to vector<8x32xf32>
    %241 = arith.negf %240 : vector<8x32xf32>
    %242 = math.exp %241 : vector<8x32xf32>
    %cst_72 = arith.constant 1.000000e+00 : f32
    %243 = vector.broadcast %cst_72 : f32 to vector<8x32xf32>
    %244 = arith.addf %243, %242 : vector<8x32xf32>
    %245 = arith.divf %243, %244 : vector<8x32xf32>
    %246 = arith.mulf %237, %214 : vector<8x32xf32>
    %247 = arith.mulf %231, %239 : vector<8x32xf32>
    %248 = arith.addf %246, %247 : vector<8x32xf32>
    %249 = math.tanh %248 : vector<8x32xf32>
    %250 = arith.mulf %245, %249 : vector<8x32xf32>
    %251 = arith.index_cast %c6_i32 : i32 to index
    %c0_73 = arith.constant 0 : index
    %c0_74 = arith.constant 0 : index
    %252 = vector.load %arg13[%251, %c0_73, %c0_74] : memref<8x8x32xf32, #tpu.memory_space<vmem>>, vector<1x8x32xf32>
    %253 = vector.shape_cast %252 : vector<1x8x32xf32> to vector<8x32xf32>
    %254 = vector.shape_cast %250 : vector<8x32xf32> to vector<1x8x32xf32>
    tpu.vector_store %arg13[%251, %c0_73, %c0_74], %254 {strides = array<i32>} : memref<8x8x32xf32, #tpu.memory_space<vmem>>, vector<1x8x32xf32>,
    %c7_i32 = arith.constant 7 : i32
    %255 = arith.index_cast %c7_i32 : i32 to index
    %c0_75 = arith.constant 0 : index
    %c0_76 = arith.constant 0 : index
    %256 = vector.load %arg12[%255, %c0_75, %c0_76] : memref<8x8x128xf32, #tpu.memory_space<vmem>>, vector<1x8x128xf32>
    %257 = vector.shape_cast %256 : vector<1x8x128xf32> to vector<8x128xf32>
    %cst_77 = arith.constant dense<0.000000e+00> : vector<8x128xf32>
    %258 = tpu.matmul %250, %4, %cst_77 {dimension_numbers = #tpu.dot_dimension_numbers<[1], [0], [0], [1], [0, 0, 1, 1], [], []>} : vector<8x32xf32>, vector<32x128xf32>, vector<8x128xf32> -> vector<8x128xf32>
    %259 = arith.addf %257, %258 : vector<8x128xf32>
    %260 = vector.extract_strided_slice %259 {offsets = [0, 0], sizes = [8, 32], strides = [1, 1]} : vector<8x128xf32> to vector<8x32xf32>
    %261 = arith.negf %260 : vector<8x32xf32>
    %262 = math.exp %261 : vector<8x32xf32>
    %cst_78 = arith.constant 1.000000e+00 : f32
    %263 = vector.broadcast %cst_78 : f32 to vector<8x32xf32>
    %264 = arith.addf %263, %262 : vector<8x32xf32>
    %265 = arith.divf %263, %264 : vector<8x32xf32>
    %266 = vector.extract_strided_slice %259 {offsets = [0, 32], sizes = [8, 32], strides = [1, 1]} : vector<8x128xf32> to vector<8x32xf32>
    %267 = arith.negf %266 : vector<8x32xf32>
    %268 = math.exp %267 : vector<8x32xf32>
    %cst_79 = arith.constant 1.000000e+00 : f32
    %269 = vector.broadcast %cst_79 : f32 to vector<8x32xf32>
    %270 = arith.addf %269, %268 : vector<8x32xf32>
    %271 = arith.divf %269, %270 : vector<8x32xf32>
    %272 = vector.extract_strided_slice %259 {offsets = [0, 64], sizes = [8, 32], strides = [1, 1]} : vector<8x128xf32> to vector<8x32xf32>
    %273 = math.tanh %272 : vector<8x32xf32>
    %274 = vector.extract_strided_slice %259 {offsets = [0, 96], sizes = [8, 32], strides = [1, 1]} : vector<8x128xf32> to vector<8x32xf32>
    %275 = arith.negf %274 : vector<8x32xf32>
    %276 = math.exp %275 : vector<8x32xf32>
    %cst_80 = arith.constant 1.000000e+00 : f32
    %277 = vector.broadcast %cst_80 : f32 to vector<8x32xf32>
    %278 = arith.addf %277, %276 : vector<8x32xf32>
    %279 = arith.divf %277, %278 : vector<8x32xf32>
    %280 = arith.mulf %271, %248 : vector<8x32xf32>
    %281 = arith.mulf %265, %273 : vector<8x32xf32>
    %282 = arith.addf %280, %281 : vector<8x32xf32>
    %283 = math.tanh %282 : vector<8x32xf32>
    %284 = arith.mulf %279, %283 : vector<8x32xf32>
    %285 = arith.index_cast %c7_i32 : i32 to index
    %c0_81 = arith.constant 0 : index
    %c0_82 = arith.constant 0 : index
    %286 = vector.load %arg13[%285, %c0_81, %c0_82] : memref<8x8x32xf32, #tpu.memory_space<vmem>>, vector<1x8x32xf32>
    %287 = vector.shape_cast %286 : vector<1x8x32xf32> to vector<8x32xf32>
    %288 = vector.shape_cast %284 : vector<8x32xf32> to vector<1x8x32xf32>
    tpu.vector_store %arg13[%285, %c0_81, %c0_82], %288 {strides = array<i32>} : memref<8x8x32xf32, #tpu.memory_space<vmem>>, vector<1x8x32xf32>,
    %c8_i32 = arith.constant 8 : i32
    %c0_83 = arith.constant 0 : index
    %c0_84 = arith.constant 0 : index
    %c0_85 = arith.constant 0 : index
    %289 = vector.load %arg14[%c0_83, %c0_84, %c0_85] : memref<2x8x32xf32, #tpu.memory_space<vmem>>, vector<1x8x32xf32>
    %290 = vector.shape_cast %289 : vector<1x8x32xf32> to vector<8x32xf32>
    %291 = vector.shape_cast %284 : vector<8x32xf32> to vector<1x8x32xf32>
    tpu.vector_store %arg14[%c0_83, %c0_84, %c0_85], %291 {strides = array<i32>} : memref<2x8x32xf32, #tpu.memory_space<vmem>>, vector<1x8x32xf32>,
    %c0_86 = arith.constant 0 : index
    %c0_87 = arith.constant 0 : index
    %c0_88 = arith.constant 0 : index
    %292 = vector.load %arg15[%c0_86, %c0_87, %c0_88] : memref<2x8x32xf32, #tpu.memory_space<vmem>>, vector<1x8x32xf32>
    %293 = vector.shape_cast %292 : vector<1x8x32xf32> to vector<8x32xf32>
    %294 = vector.shape_cast %282 : vector<8x32xf32> to vector<1x8x32xf32>
    tpu.vector_store %arg15[%c0_86, %c0_87, %c0_88], %294 {strides = array<i32>} : memref<2x8x32xf32, #tpu.memory_space<vmem>>, vector<1x8x32xf32>,
    %c0_89 = arith.constant 0 : index
    %c0_90 = arith.constant 0 : index
    %295 = vector.load %arg6[%c0_89, %c0_90] : memref<32x128xf32, #tpu.memory_space<vmem>>, vector<32x128xf32>
    %c0_91 = arith.constant 0 : index
    %c0_92 = arith.constant 0 : index
    %296 = vector.load %arg7[%c0_91, %c0_92] : memref<32x128xf32, #tpu.memory_space<vmem>>, vector<32x128xf32>
    %c0_93 = arith.constant 0 : index
    %c0_94 = arith.constant 0 : index
    %297 = vector.load %arg8[%c0_93, %c0_94] : memref<1x128xf32, #tpu.memory_space<vmem>>, vector<1x128xf32>
    %c0_95 = arith.constant 0 : index
    %c0_96 = arith.constant 0 : index
    %c0_97 = arith.constant 0 : index
    %298 = vector.load %arg13[%c0_95, %c0_96, %c0_97] : memref<8x8x32xf32, #tpu.memory_space<vmem>>, vector<8x8x32xf32>
    %299 = vector.shape_cast %298 : vector<8x8x32xf32> to vector<64x32xf32>
    %cst_98 = arith.constant dense<0.000000e+00> : vector<64x128xf32>
    %300 = tpu.matmul %299, %295, %cst_98 {dimension_numbers = #tpu.dot_dimension_numbers<[1], [0], [0], [1], [0, 0, 1, 1], [], []>} : vector<64x32xf32>, vector<32x128xf32>, vector<64x128xf32> -> vector<64x128xf32>
    %301 = vector.broadcast %297 : vector<1x128xf32> to vector<64x128xf32>
    %302 = arith.addf %300, %301 : vector<64x128xf32>
    %303 = vector.shape_cast %302 : vector<64x128xf32> to vector<8x8x128xf32>
    %c0_99 = arith.constant 0 : index
    %c0_100 = arith.constant 0 : index
    %c0_101 = arith.constant 0 : index
    %304 = vector.load %arg12[%c0_99, %c0_100, %c0_101] : memref<8x8x128xf32, #tpu.memory_space<vmem>>, vector<8x8x128xf32>
    tpu.vector_store %arg12[%c0_99, %c0_100, %c0_101], %303 {strides = array<i32>} : memref<8x8x128xf32, #tpu.memory_space<vmem>>, vector<8x8x128xf32>,
    %c1 = arith.constant 1 : index
    %c0_102 = arith.constant 0 : index
    %c0_103 = arith.constant 0 : index
    %305 = vector.load %arg14[%c1, %c0_102, %c0_103] : memref<2x8x32xf32, #tpu.memory_space<vmem>>, vector<1x8x32xf32>
    %306 = vector.shape_cast %305 : vector<1x8x32xf32> to vector<8x32xf32>
    %c1_104 = arith.constant 1 : index
    %c0_105 = arith.constant 0 : index
    %c0_106 = arith.constant 0 : index
    %307 = vector.load %arg15[%c1_104, %c0_105, %c0_106] : memref<2x8x32xf32, #tpu.memory_space<vmem>>, vector<1x8x32xf32>
    %308 = vector.shape_cast %307 : vector<1x8x32xf32> to vector<8x32xf32>
    %c0_i32_107 = arith.constant 0 : i32
    %309 = arith.index_cast %c0_i32_107 : i32 to index
    %c0_108 = arith.constant 0 : index
    %c0_109 = arith.constant 0 : index
    %310 = vector.load %arg12[%309, %c0_108, %c0_109] : memref<8x8x128xf32, #tpu.memory_space<vmem>>, vector<1x8x128xf32>
    %311 = vector.shape_cast %310 : vector<1x8x128xf32> to vector<8x128xf32>
    %cst_110 = arith.constant dense<0.000000e+00> : vector<8x128xf32>
    %312 = tpu.matmul %306, %296, %cst_110 {dimension_numbers = #tpu.dot_dimension_numbers<[1], [0], [0], [1], [0, 0, 1, 1], [], []>} : vector<8x32xf32>, vector<32x128xf32>, vector<8x128xf32> -> vector<8x128xf32>
    %313 = arith.addf %311, %312 : vector<8x128xf32>
    %314 = vector.extract_strided_slice %313 {offsets = [0, 0], sizes = [8, 32], strides = [1, 1]} : vector<8x128xf32> to vector<8x32xf32>
    %315 = arith.negf %314 : vector<8x32xf32>
    %316 = math.exp %315 : vector<8x32xf32>
    %cst_111 = arith.constant 1.000000e+00 : f32
    %317 = vector.broadcast %cst_111 : f32 to vector<8x32xf32>
    %318 = arith.addf %317, %316 : vector<8x32xf32>
    %319 = arith.divf %317, %318 : vector<8x32xf32>
    %320 = vector.extract_strided_slice %313 {offsets = [0, 32], sizes = [8, 32], strides = [1, 1]} : vector<8x128xf32> to vector<8x32xf32>
    %321 = arith.negf %320 : vector<8x32xf32>
    %322 = math.exp %321 : vector<8x32xf32>
    %cst_112 = arith.constant 1.000000e+00 : f32
    %323 = vector.broadcast %cst_112 : f32 to vector<8x32xf32>
    %324 = arith.addf %323, %322 : vector<8x32xf32>
    %325 = arith.divf %323, %324 : vector<8x32xf32>
    %326 = vector.extract_strided_slice %313 {offsets = [0, 64], sizes = [8, 32], strides = [1, 1]} : vector<8x128xf32> to vector<8x32xf32>
    %327 = math.tanh %326 : vector<8x32xf32>
    %328 = vector.extract_strided_slice %313 {offsets = [0, 96], sizes = [8, 32], strides = [1, 1]} : vector<8x128xf32> to vector<8x32xf32>
    %329 = arith.negf %328 : vector<8x32xf32>
    %330 = math.exp %329 : vector<8x32xf32>
    %cst_113 = arith.constant 1.000000e+00 : f32
    %331 = vector.broadcast %cst_113 : f32 to vector<8x32xf32>
    %332 = arith.addf %331, %330 : vector<8x32xf32>
    %333 = arith.divf %331, %332 : vector<8x32xf32>
    %334 = arith.mulf %325, %308 : vector<8x32xf32>
    %335 = arith.mulf %319, %327 : vector<8x32xf32>
    %336 = arith.addf %334, %335 : vector<8x32xf32>
    %337 = math.tanh %336 : vector<8x32xf32>
    %338 = arith.mulf %333, %337 : vector<8x32xf32>
    %c1_i32_114 = arith.constant 1 : i32
    %339 = arith.index_cast %c1_i32_114 : i32 to index
    %c0_115 = arith.constant 0 : index
    %c0_116 = arith.constant 0 : index
    %340 = vector.load %arg12[%339, %c0_115, %c0_116] : memref<8x8x128xf32, #tpu.memory_space<vmem>>, vector<1x8x128xf32>
    %341 = vector.shape_cast %340 : vector<1x8x128xf32> to vector<8x128xf32>
    %cst_117 = arith.constant dense<0.000000e+00> : vector<8x128xf32>
    %342 = tpu.matmul %338, %296, %cst_117 {dimension_numbers = #tpu.dot_dimension_numbers<[1], [0], [0], [1], [0, 0, 1, 1], [], []>} : vector<8x32xf32>, vector<32x128xf32>, vector<8x128xf32> -> vector<8x128xf32>
    %343 = arith.addf %341, %342 : vector<8x128xf32>
    %344 = vector.extract_strided_slice %343 {offsets = [0, 0], sizes = [8, 32], strides = [1, 1]} : vector<8x128xf32> to vector<8x32xf32>
    %345 = arith.negf %344 : vector<8x32xf32>
    %346 = math.exp %345 : vector<8x32xf32>
    %cst_118 = arith.constant 1.000000e+00 : f32
    %347 = vector.broadcast %cst_118 : f32 to vector<8x32xf32>
    %348 = arith.addf %347, %346 : vector<8x32xf32>
    %349 = arith.divf %347, %348 : vector<8x32xf32>
    %350 = vector.extract_strided_slice %343 {offsets = [0, 32], sizes = [8, 32], strides = [1, 1]} : vector<8x128xf32> to vector<8x32xf32>
    %351 = arith.negf %350 : vector<8x32xf32>
    %352 = math.exp %351 : vector<8x32xf32>
    %cst_119 = arith.constant 1.000000e+00 : f32
    %353 = vector.broadcast %cst_119 : f32 to vector<8x32xf32>
    %354 = arith.addf %353, %352 : vector<8x32xf32>
    %355 = arith.divf %353, %354 : vector<8x32xf32>
    %356 = vector.extract_strided_slice %343 {offsets = [0, 64], sizes = [8, 32], strides = [1, 1]} : vector<8x128xf32> to vector<8x32xf32>
    %357 = math.tanh %356 : vector<8x32xf32>
    %358 = vector.extract_strided_slice %343 {offsets = [0, 96], sizes = [8, 32], strides = [1, 1]} : vector<8x128xf32> to vector<8x32xf32>
    %359 = arith.negf %358 : vector<8x32xf32>
    %360 = math.exp %359 : vector<8x32xf32>
    %cst_120 = arith.constant 1.000000e+00 : f32
    %361 = vector.broadcast %cst_120 : f32 to vector<8x32xf32>
    %362 = arith.addf %361, %360 : vector<8x32xf32>
    %363 = arith.divf %361, %362 : vector<8x32xf32>
    %364 = arith.mulf %355, %336 : vector<8x32xf32>
    %365 = arith.mulf %349, %357 : vector<8x32xf32>
    %366 = arith.addf %364, %365 : vector<8x32xf32>
    %367 = math.tanh %366 : vector<8x32xf32>
    %368 = arith.mulf %363, %367 : vector<8x32xf32>
    %c2_i32_121 = arith.constant 2 : i32
    %369 = arith.index_cast %c2_i32_121 : i32 to index
    %c0_122 = arith.constant 0 : index
    %c0_123 = arith.constant 0 : index
    %370 = vector.load %arg12[%369, %c0_122, %c0_123] : memref<8x8x128xf32, #tpu.memory_space<vmem>>, vector<1x8x128xf32>
    %371 = vector.shape_cast %370 : vector<1x8x128xf32> to vector<8x128xf32>
    %cst_124 = arith.constant dense<0.000000e+00> : vector<8x128xf32>
    %372 = tpu.matmul %368, %296, %cst_124 {dimension_numbers = #tpu.dot_dimension_numbers<[1], [0], [0], [1], [0, 0, 1, 1], [], []>} : vector<8x32xf32>, vector<32x128xf32>, vector<8x128xf32> -> vector<8x128xf32>
    %373 = arith.addf %371, %372 : vector<8x128xf32>
    %374 = vector.extract_strided_slice %373 {offsets = [0, 0], sizes = [8, 32], strides = [1, 1]} : vector<8x128xf32> to vector<8x32xf32>
    %375 = arith.negf %374 : vector<8x32xf32>
    %376 = math.exp %375 : vector<8x32xf32>
    %cst_125 = arith.constant 1.000000e+00 : f32
    %377 = vector.broadcast %cst_125 : f32 to vector<8x32xf32>
    %378 = arith.addf %377, %376 : vector<8x32xf32>
    %379 = arith.divf %377, %378 : vector<8x32xf32>
    %380 = vector.extract_strided_slice %373 {offsets = [0, 32], sizes = [8, 32], strides = [1, 1]} : vector<8x128xf32> to vector<8x32xf32>
    %381 = arith.negf %380 : vector<8x32xf32>
    %382 = math.exp %381 : vector<8x32xf32>
    %cst_126 = arith.constant 1.000000e+00 : f32
    %383 = vector.broadcast %cst_126 : f32 to vector<8x32xf32>
    %384 = arith.addf %383, %382 : vector<8x32xf32>
    %385 = arith.divf %383, %384 : vector<8x32xf32>
    %386 = vector.extract_strided_slice %373 {offsets = [0, 64], sizes = [8, 32], strides = [1, 1]} : vector<8x128xf32> to vector<8x32xf32>
    %387 = math.tanh %386 : vector<8x32xf32>
    %388 = vector.extract_strided_slice %373 {offsets = [0, 96], sizes = [8, 32], strides = [1, 1]} : vector<8x128xf32> to vector<8x32xf32>
    %389 = arith.negf %388 : vector<8x32xf32>
    %390 = math.exp %389 : vector<8x32xf32>
    %cst_127 = arith.constant 1.000000e+00 : f32
    %391 = vector.broadcast %cst_127 : f32 to vector<8x32xf32>
    %392 = arith.addf %391, %390 : vector<8x32xf32>
    %393 = arith.divf %391, %392 : vector<8x32xf32>
    %394 = arith.mulf %385, %366 : vector<8x32xf32>
    %395 = arith.mulf %379, %387 : vector<8x32xf32>
    %396 = arith.addf %394, %395 : vector<8x32xf32>
    %397 = math.tanh %396 : vector<8x32xf32>
    %398 = arith.mulf %393, %397 : vector<8x32xf32>
    %c3_i32_128 = arith.constant 3 : i32
    %399 = arith.index_cast %c3_i32_128 : i32 to index
    %c0_129 = arith.constant 0 : index
    %c0_130 = arith.constant 0 : index
    %400 = vector.load %arg12[%399, %c0_129, %c0_130] : memref<8x8x128xf32, #tpu.memory_space<vmem>>, vector<1x8x128xf32>
    %401 = vector.shape_cast %400 : vector<1x8x128xf32> to vector<8x128xf32>
    %cst_131 = arith.constant dense<0.000000e+00> : vector<8x128xf32>
    %402 = tpu.matmul %398, %296, %cst_131 {dimension_numbers = #tpu.dot_dimension_numbers<[1], [0], [0], [1], [0, 0, 1, 1], [], []>} : vector<8x32xf32>, vector<32x128xf32>, vector<8x128xf32> -> vector<8x128xf32>
    %403 = arith.addf %401, %402 : vector<8x128xf32>
    %404 = vector.extract_strided_slice %403 {offsets = [0, 0], sizes = [8, 32], strides = [1, 1]} : vector<8x128xf32> to vector<8x32xf32>
    %405 = arith.negf %404 : vector<8x32xf32>
    %406 = math.exp %405 : vector<8x32xf32>
    %cst_132 = arith.constant 1.000000e+00 : f32
    %407 = vector.broadcast %cst_132 : f32 to vector<8x32xf32>
    %408 = arith.addf %407, %406 : vector<8x32xf32>
    %409 = arith.divf %407, %408 : vector<8x32xf32>
    %410 = vector.extract_strided_slice %403 {offsets = [0, 32], sizes = [8, 32], strides = [1, 1]} : vector<8x128xf32> to vector<8x32xf32>
    %411 = arith.negf %410 : vector<8x32xf32>
    %412 = math.exp %411 : vector<8x32xf32>
    %cst_133 = arith.constant 1.000000e+00 : f32
    %413 = vector.broadcast %cst_133 : f32 to vector<8x32xf32>
    %414 = arith.addf %413, %412 : vector<8x32xf32>
    %415 = arith.divf %413, %414 : vector<8x32xf32>
    %416 = vector.extract_strided_slice %403 {offsets = [0, 64], sizes = [8, 32], strides = [1, 1]} : vector<8x128xf32> to vector<8x32xf32>
    %417 = math.tanh %416 : vector<8x32xf32>
    %418 = vector.extract_strided_slice %403 {offsets = [0, 96], sizes = [8, 32], strides = [1, 1]} : vector<8x128xf32> to vector<8x32xf32>
    %419 = arith.negf %418 : vector<8x32xf32>
    %420 = math.exp %419 : vector<8x32xf32>
    %cst_134 = arith.constant 1.000000e+00 : f32
    %421 = vector.broadcast %cst_134 : f32 to vector<8x32xf32>
    %422 = arith.addf %421, %420 : vector<8x32xf32>
    %423 = arith.divf %421, %422 : vector<8x32xf32>
    %424 = arith.mulf %415, %396 : vector<8x32xf32>
    %425 = arith.mulf %409, %417 : vector<8x32xf32>
    %426 = arith.addf %424, %425 : vector<8x32xf32>
    %427 = math.tanh %426 : vector<8x32xf32>
    %428 = arith.mulf %423, %427 : vector<8x32xf32>
    %c4_i32_135 = arith.constant 4 : i32
    %429 = arith.index_cast %c4_i32_135 : i32 to index
    %c0_136 = arith.constant 0 : index
    %c0_137 = arith.constant 0 : index
    %430 = vector.load %arg12[%429, %c0_136, %c0_137] : memref<8x8x128xf32, #tpu.memory_space<vmem>>, vector<1x8x128xf32>
    %431 = vector.shape_cast %430 : vector<1x8x128xf32> to vector<8x128xf32>
    %cst_138 = arith.constant dense<0.000000e+00> : vector<8x128xf32>
    %432 = tpu.matmul %428, %296, %cst_138 {dimension_numbers = #tpu.dot_dimension_numbers<[1], [0], [0], [1], [0, 0, 1, 1], [], []>} : vector<8x32xf32>, vector<32x128xf32>, vector<8x128xf32> -> vector<8x128xf32>
    %433 = arith.addf %431, %432 : vector<8x128xf32>
    %434 = vector.extract_strided_slice %433 {offsets = [0, 0], sizes = [8, 32], strides = [1, 1]} : vector<8x128xf32> to vector<8x32xf32>
    %435 = arith.negf %434 : vector<8x32xf32>
    %436 = math.exp %435 : vector<8x32xf32>
    %cst_139 = arith.constant 1.000000e+00 : f32
    %437 = vector.broadcast %cst_139 : f32 to vector<8x32xf32>
    %438 = arith.addf %437, %436 : vector<8x32xf32>
    %439 = arith.divf %437, %438 : vector<8x32xf32>
    %440 = vector.extract_strided_slice %433 {offsets = [0, 32], sizes = [8, 32], strides = [1, 1]} : vector<8x128xf32> to vector<8x32xf32>
    %441 = arith.negf %440 : vector<8x32xf32>
    %442 = math.exp %441 : vector<8x32xf32>
    %cst_140 = arith.constant 1.000000e+00 : f32
    %443 = vector.broadcast %cst_140 : f32 to vector<8x32xf32>
    %444 = arith.addf %443, %442 : vector<8x32xf32>
    %445 = arith.divf %443, %444 : vector<8x32xf32>
    %446 = vector.extract_strided_slice %433 {offsets = [0, 64], sizes = [8, 32], strides = [1, 1]} : vector<8x128xf32> to vector<8x32xf32>
    %447 = math.tanh %446 : vector<8x32xf32>
    %448 = vector.extract_strided_slice %433 {offsets = [0, 96], sizes = [8, 32], strides = [1, 1]} : vector<8x128xf32> to vector<8x32xf32>
    %449 = arith.negf %448 : vector<8x32xf32>
    %450 = math.exp %449 : vector<8x32xf32>
    %cst_141 = arith.constant 1.000000e+00 : f32
    %451 = vector.broadcast %cst_141 : f32 to vector<8x32xf32>
    %452 = arith.addf %451, %450 : vector<8x32xf32>
    %453 = arith.divf %451, %452 : vector<8x32xf32>
    %454 = arith.mulf %445, %426 : vector<8x32xf32>
    %455 = arith.mulf %439, %447 : vector<8x32xf32>
    %456 = arith.addf %454, %455 : vector<8x32xf32>
    %457 = math.tanh %456 : vector<8x32xf32>
    %458 = arith.mulf %453, %457 : vector<8x32xf32>
    %c5_i32_142 = arith.constant 5 : i32
    %459 = arith.index_cast %c5_i32_142 : i32 to index
    %c0_143 = arith.constant 0 : index
    %c0_144 = arith.constant 0 : index
    %460 = vector.load %arg12[%459, %c0_143, %c0_144] : memref<8x8x128xf32, #tpu.memory_space<vmem>>, vector<1x8x128xf32>
    %461 = vector.shape_cast %460 : vector<1x8x128xf32> to vector<8x128xf32>
    %cst_145 = arith.constant dense<0.000000e+00> : vector<8x128xf32>
    %462 = tpu.matmul %458, %296, %cst_145 {dimension_numbers = #tpu.dot_dimension_numbers<[1], [0], [0], [1], [0, 0, 1, 1], [], []>} : vector<8x32xf32>, vector<32x128xf32>, vector<8x128xf32> -> vector<8x128xf32>
    %463 = arith.addf %461, %462 : vector<8x128xf32>
    %464 = vector.extract_strided_slice %463 {offsets = [0, 0], sizes = [8, 32], strides = [1, 1]} : vector<8x128xf32> to vector<8x32xf32>
    %465 = arith.negf %464 : vector<8x32xf32>
    %466 = math.exp %465 : vector<8x32xf32>
    %cst_146 = arith.constant 1.000000e+00 : f32
    %467 = vector.broadcast %cst_146 : f32 to vector<8x32xf32>
    %468 = arith.addf %467, %466 : vector<8x32xf32>
    %469 = arith.divf %467, %468 : vector<8x32xf32>
    %470 = vector.extract_strided_slice %463 {offsets = [0, 32], sizes = [8, 32], strides = [1, 1]} : vector<8x128xf32> to vector<8x32xf32>
    %471 = arith.negf %470 : vector<8x32xf32>
    %472 = math.exp %471 : vector<8x32xf32>
    %cst_147 = arith.constant 1.000000e+00 : f32
    %473 = vector.broadcast %cst_147 : f32 to vector<8x32xf32>
    %474 = arith.addf %473, %472 : vector<8x32xf32>
    %475 = arith.divf %473, %474 : vector<8x32xf32>
    %476 = vector.extract_strided_slice %463 {offsets = [0, 64], sizes = [8, 32], strides = [1, 1]} : vector<8x128xf32> to vector<8x32xf32>
    %477 = math.tanh %476 : vector<8x32xf32>
    %478 = vector.extract_strided_slice %463 {offsets = [0, 96], sizes = [8, 32], strides = [1, 1]} : vector<8x128xf32> to vector<8x32xf32>
    %479 = arith.negf %478 : vector<8x32xf32>
    %480 = math.exp %479 : vector<8x32xf32>
    %cst_148 = arith.constant 1.000000e+00 : f32
    %481 = vector.broadcast %cst_148 : f32 to vector<8x32xf32>
    %482 = arith.addf %481, %480 : vector<8x32xf32>
    %483 = arith.divf %481, %482 : vector<8x32xf32>
    %484 = arith.mulf %475, %456 : vector<8x32xf32>
    %485 = arith.mulf %469, %477 : vector<8x32xf32>
    %486 = arith.addf %484, %485 : vector<8x32xf32>
    %487 = math.tanh %486 : vector<8x32xf32>
    %488 = arith.mulf %483, %487 : vector<8x32xf32>
    %c6_i32_149 = arith.constant 6 : i32
    %489 = arith.index_cast %c6_i32_149 : i32 to index
    %c0_150 = arith.constant 0 : index
    %c0_151 = arith.constant 0 : index
    %490 = vector.load %arg12[%489, %c0_150, %c0_151] : memref<8x8x128xf32, #tpu.memory_space<vmem>>, vector<1x8x128xf32>
    %491 = vector.shape_cast %490 : vector<1x8x128xf32> to vector<8x128xf32>
    %cst_152 = arith.constant dense<0.000000e+00> : vector<8x128xf32>
    %492 = tpu.matmul %488, %296, %cst_152 {dimension_numbers = #tpu.dot_dimension_numbers<[1], [0], [0], [1], [0, 0, 1, 1], [], []>} : vector<8x32xf32>, vector<32x128xf32>, vector<8x128xf32> -> vector<8x128xf32>
    %493 = arith.addf %491, %492 : vector<8x128xf32>
    %494 = vector.extract_strided_slice %493 {offsets = [0, 0], sizes = [8, 32], strides = [1, 1]} : vector<8x128xf32> to vector<8x32xf32>
    %495 = arith.negf %494 : vector<8x32xf32>
    %496 = math.exp %495 : vector<8x32xf32>
    %cst_153 = arith.constant 1.000000e+00 : f32
    %497 = vector.broadcast %cst_153 : f32 to vector<8x32xf32>
    %498 = arith.addf %497, %496 : vector<8x32xf32>
    %499 = arith.divf %497, %498 : vector<8x32xf32>
    %500 = vector.extract_strided_slice %493 {offsets = [0, 32], sizes = [8, 32], strides = [1, 1]} : vector<8x128xf32> to vector<8x32xf32>
    %501 = arith.negf %500 : vector<8x32xf32>
    %502 = math.exp %501 : vector<8x32xf32>
    %cst_154 = arith.constant 1.000000e+00 : f32
    %503 = vector.broadcast %cst_154 : f32 to vector<8x32xf32>
    %504 = arith.addf %503, %502 : vector<8x32xf32>
    %505 = arith.divf %503, %504 : vector<8x32xf32>
    %506 = vector.extract_strided_slice %493 {offsets = [0, 64], sizes = [8, 32], strides = [1, 1]} : vector<8x128xf32> to vector<8x32xf32>
    %507 = math.tanh %506 : vector<8x32xf32>
    %508 = vector.extract_strided_slice %493 {offsets = [0, 96], sizes = [8, 32], strides = [1, 1]} : vector<8x128xf32> to vector<8x32xf32>
    %509 = arith.negf %508 : vector<8x32xf32>
    %510 = math.exp %509 : vector<8x32xf32>
    %cst_155 = arith.constant 1.000000e+00 : f32
    %511 = vector.broadcast %cst_155 : f32 to vector<8x32xf32>
    %512 = arith.addf %511, %510 : vector<8x32xf32>
    %513 = arith.divf %511, %512 : vector<8x32xf32>
    %514 = arith.mulf %505, %486 : vector<8x32xf32>
    %515 = arith.mulf %499, %507 : vector<8x32xf32>
    %516 = arith.addf %514, %515 : vector<8x32xf32>
    %517 = math.tanh %516 : vector<8x32xf32>
    %518 = arith.mulf %513, %517 : vector<8x32xf32>
    %c7_i32_156 = arith.constant 7 : i32
    %519 = arith.index_cast %c7_i32_156 : i32 to index
    %c0_157 = arith.constant 0 : index
    %c0_158 = arith.constant 0 : index
    %520 = vector.load %arg12[%519, %c0_157, %c0_158] : memref<8x8x128xf32, #tpu.memory_space<vmem>>, vector<1x8x128xf32>
    %521 = vector.shape_cast %520 : vector<1x8x128xf32> to vector<8x128xf32>
    %cst_159 = arith.constant dense<0.000000e+00> : vector<8x128xf32>
    %522 = tpu.matmul %518, %296, %cst_159 {dimension_numbers = #tpu.dot_dimension_numbers<[1], [0], [0], [1], [0, 0, 1, 1], [], []>} : vector<8x32xf32>, vector<32x128xf32>, vector<8x128xf32> -> vector<8x128xf32>
    %523 = arith.addf %521, %522 : vector<8x128xf32>
    %524 = vector.extract_strided_slice %523 {offsets = [0, 0], sizes = [8, 32], strides = [1, 1]} : vector<8x128xf32> to vector<8x32xf32>
    %525 = arith.negf %524 : vector<8x32xf32>
    %526 = math.exp %525 : vector<8x32xf32>
    %cst_160 = arith.constant 1.000000e+00 : f32
    %527 = vector.broadcast %cst_160 : f32 to vector<8x32xf32>
    %528 = arith.addf %527, %526 : vector<8x32xf32>
    %529 = arith.divf %527, %528 : vector<8x32xf32>
    %530 = vector.extract_strided_slice %523 {offsets = [0, 32], sizes = [8, 32], strides = [1, 1]} : vector<8x128xf32> to vector<8x32xf32>
    %531 = arith.negf %530 : vector<8x32xf32>
    %532 = math.exp %531 : vector<8x32xf32>
    %cst_161 = arith.constant 1.000000e+00 : f32
    %533 = vector.broadcast %cst_161 : f32 to vector<8x32xf32>
    %534 = arith.addf %533, %532 : vector<8x32xf32>
    %535 = arith.divf %533, %534 : vector<8x32xf32>
    %536 = vector.extract_strided_slice %523 {offsets = [0, 64], sizes = [8, 32], strides = [1, 1]} : vector<8x128xf32> to vector<8x32xf32>
    %537 = math.tanh %536 : vector<8x32xf32>
    %538 = vector.extract_strided_slice %523 {offsets = [0, 96], sizes = [8, 32], strides = [1, 1]} : vector<8x128xf32> to vector<8x32xf32>
    %539 = arith.negf %538 : vector<8x32xf32>
    %540 = math.exp %539 : vector<8x32xf32>
    %cst_162 = arith.constant 1.000000e+00 : f32
    %541 = vector.broadcast %cst_162 : f32 to vector<8x32xf32>
    %542 = arith.addf %541, %540 : vector<8x32xf32>
    %543 = arith.divf %541, %542 : vector<8x32xf32>
    %544 = arith.mulf %535, %516 : vector<8x32xf32>
    %545 = arith.mulf %529, %537 : vector<8x32xf32>
    %546 = arith.addf %544, %545 : vector<8x32xf32>
    %547 = math.tanh %546 : vector<8x32xf32>
    %548 = arith.mulf %543, %547 : vector<8x32xf32>
    %c8_i32_163 = arith.constant 8 : i32
    %c1_164 = arith.constant 1 : index
    %c0_165 = arith.constant 0 : index
    %c0_166 = arith.constant 0 : index
    %549 = vector.load %arg14[%c1_164, %c0_165, %c0_166] : memref<2x8x32xf32, #tpu.memory_space<vmem>>, vector<1x8x32xf32>
    %550 = vector.shape_cast %549 : vector<1x8x32xf32> to vector<8x32xf32>
    %551 = vector.shape_cast %548 : vector<8x32xf32> to vector<1x8x32xf32>
    tpu.vector_store %arg14[%c1_164, %c0_165, %c0_166], %551 {strides = array<i32>} : memref<2x8x32xf32, #tpu.memory_space<vmem>>, vector<1x8x32xf32>,
    %c1_167 = arith.constant 1 : index
    %c0_168 = arith.constant 0 : index
    %c0_169 = arith.constant 0 : index
    %552 = vector.load %arg15[%c1_167, %c0_168, %c0_169] : memref<2x8x32xf32, #tpu.memory_space<vmem>>, vector<1x8x32xf32>
    %553 = vector.shape_cast %552 : vector<1x8x32xf32> to vector<8x32xf32>
    %554 = vector.shape_cast %546 : vector<8x32xf32> to vector<1x8x32xf32>
    tpu.vector_store %arg15[%c1_167, %c0_168, %c0_169], %554 {strides = array<i32>} : memref<2x8x32xf32, #tpu.memory_space<vmem>>, vector<1x8x32xf32>,
    %c0_i32_170 = arith.constant 0 : i32
    %555 = arith.cmpi eq, %arg1, %c0_i32_170 : i32
    %556 = arith.extui %555 : i1 to i32
    %c0_i32_171 = arith.constant 0 : i32
    %557 = arith.cmpi ne, %556, %c0_i32_171 : i32
    scf.if %557 {
      %c1_172 = arith.constant 1 : index
      %c0_173 = arith.constant 0 : index
      %c0_174 = arith.constant 0 : index
      %558 = vector.load %arg14[%c1_172, %c0_173, %c0_174] : memref<2x8x32xf32, #tpu.memory_space<vmem>>, vector<1x8x32xf32>
      %559 = vector.shape_cast %558 : vector<1x8x32xf32> to vector<8x32xf32>
      %c0_175 = arith.constant 0 : index
      %c0_176 = arith.constant 0 : index
      %560 = vector.load %arg9[%c0_175, %c0_176] : memref<32x128xf32, #tpu.memory_space<vmem>>, vector<32x128xf32>
      %cst_177 = arith.constant dense<0.000000e+00> : vector<8x128xf32>
      %561 = tpu.matmul %559, %560, %cst_177 {dimension_numbers = #tpu.dot_dimension_numbers<[1], [0], [0], [1], [0, 0, 1, 1], [], []>} : vector<8x32xf32>, vector<32x128xf32>, vector<8x128xf32> -> vector<8x128xf32>
      %c0_178 = arith.constant 0 : index
      %c0_179 = arith.constant 0 : index
      %562 = vector.load %arg10[%c0_178, %c0_179] : memref<1x128xf32, #tpu.memory_space<vmem>>, vector<1x128xf32>
      %563 = vector.broadcast %562 : vector<1x128xf32> to vector<8x128xf32>
      %564 = arith.addf %561, %563 : vector<8x128xf32>
      %c0_180 = arith.constant 0 : index
      %c0_181 = arith.constant 0 : index
      %565 = vector.load %arg11[%c0_180, %c0_181] : memref<8x128xf32, #tpu.memory_space<vmem>>, vector<8x128xf32>
      tpu.vector_store %arg11[%c0_180, %c0_181], %564 {strides = array<i32>} : memref<8x128xf32, #tpu.memory_space<vmem>>, vector<8x128xf32>,
    } else {
    }
    return
  }
  func.func @transform_0(%arg0: i32, %arg1: i32) -> (i32, i32, i32) {
    %c0_i32 = arith.constant 0 : i32
    %c0_i32_0 = arith.constant 0 : i32
    return %arg1, %arg0, %c0_i32 : i32, i32, i32
  }
  func.func @transform_1(%arg0: i32, %arg1: i32) -> (i32, i32) {
    %c0_i32 = arith.constant 0 : i32
    %c0_i32_0 = arith.constant 0 : i32
    %c0_i32_1 = arith.constant 0 : i32
    return %c0_i32, %c0_i32_0 : i32, i32
  }
  func.func @transform_2(%arg0: i32, %arg1: i32) -> (i32, i32) {
    %c0_i32 = arith.constant 0 : i32
    %c0_i32_0 = arith.constant 0 : i32
    %c0_i32_1 = arith.constant 0 : i32
    return %c0_i32, %c0_i32_0 : i32, i32
  }
  func.func @transform_3(%arg0: i32, %arg1: i32) -> (i32, i32) {
    %c0_i32 = arith.constant 0 : i32
    %c0_i32_0 = arith.constant 0 : i32
    %c0_i32_1 = arith.constant 0 : i32
    return %c0_i32, %c0_i32_0 : i32, i32
  }
  func.func @transform_4(%arg0: i32, %arg1: i32) -> (i32, i32) {
    %c0_i32 = arith.constant 0 : i32
    %c0_i32_0 = arith.constant 0 : i32
    %c0_i32_1 = arith.constant 0 : i32
    return %c0_i32, %c0_i32_0 : i32, i32
  }
  func.func @transform_5(%arg0: i32, %arg1: i32) -> (i32, i32) {
    %c0_i32 = arith.constant 0 : i32
    %c0_i32_0 = arith.constant 0 : i32
    %c0_i32_1 = arith.constant 0 : i32
    return %c0_i32, %c0_i32_0 : i32, i32
  }
  func.func @transform_6(%arg0: i32, %arg1: i32) -> (i32, i32) {
    %c0_i32 = arith.constant 0 : i32
    %c0_i32_0 = arith.constant 0 : i32
    %c0_i32_1 = arith.constant 0 : i32
    return %c0_i32, %c0_i32_0 : i32, i32
  }
  func.func @transform_7(%arg0: i32, %arg1: i32) -> (i32, i32) {
    %c0_i32 = arith.constant 0 : i32
    %c0_i32_0 = arith.constant 0 : i32
    %c0_i32_1 = arith.constant 0 : i32
    return %c0_i32, %c0_i32_0 : i32, i32
  }
  func.func @transform_8(%arg0: i32, %arg1: i32) -> (i32, i32) {
    %c0_i32 = arith.constant 0 : i32
    %c0_i32_0 = arith.constant 0 : i32
    %c0_i32_1 = arith.constant 0 : i32
    return %c0_i32, %c0_i32_0 : i32, i32
  }
  func.func @transform_9(%arg0: i32, %arg1: i32) -> (i32, i32) {
    %c0_i32 = arith.constant 0 : i32
    %c0_i32_0 = arith.constant 0 : i32
    return %arg0, %c0_i32 : i32, i32
  }
}

module attributes {stable_mosaic.version = 11 : i64} {
  func.func @kernel(%arg0: i32, %arg1: i32, %arg2: memref<8x8x16xf32, #tpu.memory_space<vmem>>, %arg3: memref<16x128xf32, #tpu.memory_space<vmem>>, %arg4: memref<32x128xf32, #tpu.memory_space<vmem>>, %arg5: memref<1x128xf32, #tpu.memory_space<vmem>>, %arg6: memref<32x128xf32, #tpu.memory_space<vmem>>, %arg7: memref<32x128xf32, #tpu.memory_space<vmem>>, %arg8: memref<1x128xf32, #tpu.memory_space<vmem>>, %arg9: memref<32x128xf32, #tpu.memory_space<vmem>>, %arg10: memref<1x128xf32, #tpu.memory_space<vmem>>, %arg11: memref<8x128xf32, #tpu.memory_space<vmem>>, %arg12: memref<8x8x128xf32, #tpu.memory_space<vmem>>, %arg13: memref<8x8x32xf32, #tpu.memory_space<vmem>>, %arg14: memref<2x8x32xf32, #tpu.memory_space<vmem>>, %arg15: memref<2x8x32xf32, #tpu.memory_space<vmem>>) attributes {dimension_semantics = [#tpu.dimension_semantics<parallel>, #tpu.dimension_semantics<arbitrary>], iteration_bounds = array<i64: 1, 1>, scalar_prefetch = 0 : i64, scratch_operands = 4 : i64, tpu.core_type = #tpu.core_type<tc>, window_params = [{transform_indices = @transform_0, window_bounds = array<i64: 8, 8, 16>}, {pipeline_mode = #tpu.pipeline_mode<synchronous>, transform_indices = @transform_1, window_bounds = array<i64: 16, 128>}, {pipeline_mode = #tpu.pipeline_mode<synchronous>, transform_indices = @transform_2, window_bounds = array<i64: 32, 128>}, {pipeline_mode = #tpu.pipeline_mode<synchronous>, transform_indices = @transform_3, window_bounds = array<i64: 1, 128>}, {pipeline_mode = #tpu.pipeline_mode<synchronous>, transform_indices = @transform_4, window_bounds = array<i64: 32, 128>}, {pipeline_mode = #tpu.pipeline_mode<synchronous>, transform_indices = @transform_5, window_bounds = array<i64: 32, 128>}, {pipeline_mode = #tpu.pipeline_mode<synchronous>, transform_indices = @transform_6, window_bounds = array<i64: 1, 128>}, {pipeline_mode = #tpu.pipeline_mode<synchronous>, transform_indices = @transform_7, window_bounds = array<i64: 32, 128>}, {pipeline_mode = #tpu.pipeline_mode<synchronous>, transform_indices = @transform_8, window_bounds = array<i64: 1, 128>}, {transform_indices = @transform_9, window_bounds = array<i64: 8, 128>}]} {
    %c0_i32 = arith.constant 0 : i32
    %0 = arith.cmpi eq, %arg1, %c0_i32 : i32
    %1 = arith.extui %0 : i1 to i32
    %c0_i32_0 = arith.constant 0 : i32
    %2 = arith.cmpi ne, %1, %c0_i32_0 : i32
    scf.if %2 {
      %cst_172 = arith.constant 0.000000e+00 : f32
      %558 = vector.broadcast %cst_172 : f32 to vector<2x8x32xf32>
      %c0_173 = arith.constant 0 : index
      %c0_174 = arith.constant 0 : index
      %c0_175 = arith.constant 0 : index
      %559 = vector.load %arg14[%c0_173, %c0_174, %c0_175] : memref<2x8x32xf32, #tpu.memory_space<vmem>>, vector<2x8x32xf32>
      tpu.vector_store %arg14[%c0_173, %c0_174, %c0_175], %558 {strides = array<i32>} : memref<2x8x32xf32, #tpu.memory_space<vmem>>, vector<2x8x32xf32>,
      %cst_176 = arith.constant 0.000000e+00 : f32
      %560 = vector.broadcast %cst_176 : f32 to vector<2x8x32xf32>
      %c0_177 = arith.constant 0 : index
      %c0_178 = arith.constant 0 : index
      %c0_179 = arith.constant 0 : index
      %561 = vector.load %arg15[%c0_177, %c0_178, %c0_179] : memref<2x8x32xf32, #tpu.memory_space<vmem>>, vector<2x8x32xf32>
      tpu.vector_store %arg15[%c0_177, %c0_178, %c0_179], %560 {strides = array<i32>} : memref<2x8x32xf32, #tpu.memory_space<vmem>>, vector<2x8x32xf32>,
    } else {
    }
    %c0 = arith.constant 0 : index
    %c0_1 = arith.constant 0 : index
    %3 = vector.load %arg3[%c0, %c0_1] : memref<16x128xf32, #tpu.memory_space<vmem>>, vector<16x128xf32>
    %c0_2 = arith.constant 0 : index
    %c0_3 = arith.constant 0 : index
    %4 = vector.load %arg4[%c0_2, %c0_3] : memref<32x128xf32, #tpu.memory_space<vmem>>, vector<32x128xf32>
    %c0_4 = arith.constant 0 : index
    %c0_5 = arith.constant 0 : index
    %5 = vector.load %arg5[%c0_4, %c0_5] : memref<1x128xf32, #tpu.memory_space<vmem>>, vector<1x128xf32>
    %c0_6 = arith.constant 0 : index
    %c0_7 = arith.constant 0 : index
    %c0_8 = arith.constant 0 : index
    %6 = vector.load %arg2[%c0_6, %c0_7, %c0_8] : memref<8x8x16xf32, #tpu.memory_space<vmem>>, vector<8x8x16xf32>
    %7 = vector.shape_cast %6 : vector<8x8x16xf32> to vector<64x16xf32>
    %cst = arith.constant dense<0.000000e+00> : vector<64x128xf32>
    %8 = tpu.matmul %7, %3, %cst {dimension_numbers = #tpu.dot_dimension_numbers<[1], [0], [0], [1], [0, 0, 1, 1], [], []>} : vector<64x16xf32>, vector<16x128xf32>, vector<64x128xf32> -> vector<64x128xf32>
    %9 = vector.broadcast %5 : vector<1x128xf32> to vector<64x128xf32>
    %10 = arith.addf %8, %9 : vector<64x128xf32>
    %11 = vector.shape_cast %10 : vector<64x128xf32> to vector<8x8x128xf32>
    %c0_9 = arith.constant 0 : index
    %c0_10 = arith.constant 0 : index
    %c0_11 = arith.constant 0 : index
    %12 = vector.load %arg12[%c0_9, %c0_10, %c0_11] : memref<8x8x128xf32, #tpu.memory_space<vmem>>, vector<8x8x128xf32>
    tpu.vector_store %arg12[%c0_9, %c0_10, %c0_11], %11 {strides = array<i32>} : memref<8x8x128xf32, #tpu.memory_space<vmem>>, vector<8x8x128xf32>,
    %c0_12 = arith.constant 0 : index
    %c0_13 = arith.constant 0 : index
    %c0_14 = arith.constant 0 : index
    %13 = vector.load %arg14[%c0_12, %c0_13, %c0_14] : memref<2x8x32xf32, #tpu.memory_space<vmem>>, vector<1x8x32xf32>
    %14 = vector.shape_cast %13 : vector<1x8x32xf32> to vector<8x32xf32>
    %c0_15 = arith.constant 0 : index
    %c0_16 = arith.constant 0 : index
    %c0_17 = arith.constant 0 : index
    %15 = vector.load %arg15[%c0_15, %c0_16, %c0_17] : memref<2x8x32xf32, #tpu.memory_space<vmem>>, vector<1x8x32xf32>
    %16 = vector.shape_cast %15 : vector<1x8x32xf32> to vector<8x32xf32>
    %c0_i32_18 = arith.constant 0 : i32
    %17 = arith.index_cast %c0_i32_18 : i32 to index
    %c0_19 = arith.constant 0 : index
    %c0_20 = arith.constant 0 : index
    %18 = vector.load %arg12[%17, %c0_19, %c0_20] : memref<8x8x128xf32, #tpu.memory_space<vmem>>, vector<1x8x128xf32>
    %19 = vector.shape_cast %18 : vector<1x8x128xf32> to vector<8x128xf32>
    %cst_21 = arith.constant dense<0.000000e+00> : vector<8x128xf32>
    %20 = tpu.matmul %14, %4, %cst_21 {dimension_numbers = #tpu.dot_dimension_numbers<[1], [0], [0], [1], [0, 0, 1, 1], [], []>} : vector<8x32xf32>, vector<32x128xf32>, vector<8x128xf32> -> vector<8x128xf32>
    %21 = arith.addf %19, %20 : vector<8x128xf32>
    %22 = vector.extract_strided_slice %21 {offsets = [0, 0], sizes = [8, 32], strides = [1, 1]} : vector<8x128xf32> to vector<8x32xf32>
    %23 = arith.negf %22 : vector<8x32xf32>
    %24 = math.exp %23 : vector<8x32xf32>
    %cst_22 = arith.constant 1.000000e+00 : f32
    %25 = vector.broadcast %cst_22 : f32 to vector<8x32xf32>
    %26 = arith.addf %25, %24 : vector<8x32xf32>
    %27 = arith.divf %25, %26 : vector<8x32xf32>
    %28 = vector.extract_strided_slice %21 {offsets = [0, 32], sizes = [8, 32], strides = [1, 1]} : vector<8x128xf32> to vector<8x32xf32>
    %29 = arith.negf %28 : vector<8x32xf32>
    %30 = math.exp %29 : vector<8x32xf32>
    %cst_23 = arith.constant 1.000000e+00 : f32
    %31 = vector.broadcast %cst_23 : f32 to vector<8x32xf32>
    %32 = arith.addf %31, %30 : vector<8x32xf32>
    %33 = arith.divf %31, %32 : vector<8x32xf32>
    %34 = vector.extract_strided_slice %21 {offsets = [0, 64], sizes = [8, 32], strides = [1, 1]} : vector<8x128xf32> to vector<8x32xf32>
    %35 = math.tanh %34 : vector<8x32xf32>
    %36 = vector.extract_strided_slice %21 {offsets = [0, 96], sizes = [8, 32], strides = [1, 1]} : vector<8x128xf32> to vector<8x32xf32>
    %37 = arith.negf %36 : vector<8x32xf32>
    %38 = math.exp %37 : vector<8x32xf32>
    %cst_24 = arith.constant 1.000000e+00 : f32
    %39 = vector.broadcast %cst_24 : f32 to vector<8x32xf32>
    %40 = arith.addf %39, %38 : vector<8x32xf32>
    %41 = arith.divf %39, %40 : vector<8x32xf32>
    %42 = arith.mulf %33, %16 : vector<8x32xf32>
    %43 = arith.mulf %27, %35 : vector<8x32xf32>
    %44 = arith.addf %42, %43 : vector<8x32xf32>
    %45 = math.tanh %44 : vector<8x32xf32>
    %46 = arith.mulf %41, %45 : vector<8x32xf32>
    %47 = arith.index_cast %c0_i32_18 : i32 to index
    %c0_25 = arith.constant 0 : index
    %c0_26 = arith.constant 0 : index
    %48 = vector.load %arg13[%47, %c0_25, %c0_26] : memref<8x8x32xf32, #tpu.memory_space<vmem>>, vector<1x8x32xf32>
    %49 = vector.shape_cast %48 : vector<1x8x32xf32> to vector<8x32xf32>
    %50 = vector.shape_cast %46 : vector<8x32xf32> to vector<1x8x32xf32>
    tpu.vector_store %arg13[%47, %c0_25, %c0_26], %50 {strides = array<i32>} : memref<8x8x32xf32, #tpu.memory_space<vmem>>, vector<1x8x32xf32>,
    %c1_i32 = arith.constant 1 : i32
    %51 = arith.index_cast %c1_i32 : i32 to index
    %c0_27 = arith.constant 0 : index
    %c0_28 = arith.constant 0 : index
    %52 = vector.load %arg12[%51, %c0_27, %c0_28] : memref<8x8x128xf32, #tpu.memory_space<vmem>>, vector<1x8x128xf32>
    %53 = vector.shape_cast %52 : vector<1x8x128xf32> to vector<8x128xf32>
    %cst_29 = arith.constant dense<0.000000e+00> : vector<8x128xf32>
    %54 = tpu.matmul %46, %4, %cst_29 {dimension_numbers = #tpu.dot_dimension_numbers<[1], [0], [0], [1], [0, 0, 1, 1], [], []>} : vector<8x32xf32>, vector<32x128xf32>, vector<8x128xf32> -> vector<8x128xf32>
    %55 = arith.addf %53, %54 : vector<8x128xf32>
    %56 = vector.extract_strided_slice %55 {offsets = [0, 0], sizes = [8, 32], strides = [1, 1]} : vector<8x128xf32> to vector<8x32xf32>
    %57 = arith.negf %56 : vector<8x32xf32>
    %58 = math.exp %57 : vector<8x32xf32>
    %cst_30 = arith.constant 1.000000e+00 : f32
    %59 = vector.broadcast %cst_30 : f32 to vector<8x32xf32>
    %60 = arith.addf %59, %58 : vector<8x32xf32>
    %61 = arith.divf %59, %60 : vector<8x32xf32>
    %62 = vector.extract_strided_slice %55 {offsets = [0, 32], sizes = [8, 32], strides = [1, 1]} : vector<8x128xf32> to vector<8x32xf32>
    %63 = arith.negf %62 : vector<8x32xf32>
    %64 = math.exp %63 : vector<8x32xf32>
    %cst_31 = arith.constant 1.000000e+00 : f32
    %65 = vector.broadcast %cst_31 : f32 to vector<8x32xf32>
    %66 = arith.addf %65, %64 : vector<8x32xf32>
    %67 = arith.divf %65, %66 : vector<8x32xf32>
    %68 = vector.extract_strided_slice %55 {offsets = [0, 64], sizes = [8, 32], strides = [1, 1]} : vector<8x128xf32> to vector<8x32xf32>
    %69 = math.tanh %68 : vector<8x32xf32>
    %70 = vector.extract_strided_slice %55 {offsets = [0, 96], sizes = [8, 32], strides = [1, 1]} : vector<8x128xf32> to vector<8x32xf32>
    %71 = arith.negf %70 : vector<8x32xf32>
    %72 = math.exp %71 : vector<8x32xf32>
    %cst_32 = arith.constant 1.000000e+00 : f32
    %73 = vector.broadcast %cst_32 : f32 to vector<8x32xf32>
    %74 = arith.addf %73, %72 : vector<8x32xf32>
    %75 = arith.divf %73, %74 : vector<8x32xf32>
    %76 = arith.mulf %67, %44 : vector<8x32xf32>
    %77 = arith.mulf %61, %69 : vector<8x32xf32>
    %78 = arith.addf %76, %77 : vector<8x32xf32>
    %79 = math.tanh %78 : vector<8x32xf32>
    %80 = arith.mulf %75, %79 : vector<8x32xf32>
    %81 = arith.index_cast %c1_i32 : i32 to index
    %c0_33 = arith.constant 0 : index
    %c0_34 = arith.constant 0 : index
    %82 = vector.load %arg13[%81, %c0_33, %c0_34] : memref<8x8x32xf32, #tpu.memory_space<vmem>>, vector<1x8x32xf32>
    %83 = vector.shape_cast %82 : vector<1x8x32xf32> to vector<8x32xf32>
    %84 = vector.shape_cast %80 : vector<8x32xf32> to vector<1x8x32xf32>
    tpu.vector_store %arg13[%81, %c0_33, %c0_34], %84 {strides = array<i32>} : memref<8x8x32xf32, #tpu.memory_space<vmem>>, vector<1x8x32xf32>,
    %c2_i32 = arith.constant 2 : i32
    %85 = arith.index_cast %c2_i32 : i32 to index
    %c0_35 = arith.constant 0 : index
    %c0_36 = arith.constant 0 : index
    %86 = vector.load %arg12[%85, %c0_35, %c0_36] : memref<8x8x128xf32, #tpu.memory_space<vmem>>, vector<1x8x128xf32>
    %87 = vector.shape_cast %86 : vector<1x8x128xf32> to vector<8x128xf32>
    %cst_37 = arith.constant dense<0.000000e+00> : vector<8x128xf32>
    %88 = tpu.matmul %80, %4, %cst_37 {dimension_numbers = #tpu.dot_dimension_numbers<[1], [0], [0], [1], [0, 0, 1, 1], [], []>} : vector<8x32xf32>, vector<32x128xf32>, vector<8x128xf32> -> vector<8x128xf32>
    %89 = arith.addf %87, %88 : vector<8x128xf32>
    %90 = vector.extract_strided_slice %89 {offsets = [0, 0], sizes = [8, 32], strides = [1, 1]} : vector<8x128xf32> to vector<8x32xf32>
    %91 = arith.negf %90 : vector<8x32xf32>
    %92 = math.exp %91 : vector<8x32xf32>
    %cst_38 = arith.constant 1.000000e+00 : f32
    %93 = vector.broadcast %cst_38 : f32 to vector<8x32xf32>
    %94 = arith.addf %93, %92 : vector<8x32xf32>
    %95 = arith.divf %93, %94 : vector<8x32xf32>
    %96 = vector.extract_strided_slice %89 {offsets = [0, 32], sizes = [8, 32], strides = [1, 1]} : vector<8x128xf32> to vector<8x32xf32>
    %97 = arith.negf %96 : vector<8x32xf32>
    %98 = math.exp %97 : vector<8x32xf32>
    %cst_39 = arith.constant 1.000000e+00 : f32
    %99 = vector.broadcast %cst_39 : f32 to vector<8x32xf32>
    %100 = arith.addf %99, %98 : vector<8x32xf32>
    %101 = arith.divf %99, %100 : vector<8x32xf32>
    %102 = vector.extract_strided_slice %89 {offsets = [0, 64], sizes = [8, 32], strides = [1, 1]} : vector<8x128xf32> to vector<8x32xf32>
    %103 = math.tanh %102 : vector<8x32xf32>
    %104 = vector.extract_strided_slice %89 {offsets = [0, 96], sizes = [8, 32], strides = [1, 1]} : vector<8x128xf32> to vector<8x32xf32>
    %105 = arith.negf %104 : vector<8x32xf32>
    %106 = math.exp %105 : vector<8x32xf32>
    %cst_40 = arith.constant 1.000000e+00 : f32
    %107 = vector.broadcast %cst_40 : f32 to vector<8x32xf32>
    %108 = arith.addf %107, %106 : vector<8x32xf32>
    %109 = arith.divf %107, %108 : vector<8x32xf32>
    %110 = arith.mulf %101, %78 : vector<8x32xf32>
    %111 = arith.mulf %95, %103 : vector<8x32xf32>
    %112 = arith.addf %110, %111 : vector<8x32xf32>
    %113 = math.tanh %112 : vector<8x32xf32>
    %114 = arith.mulf %109, %113 : vector<8x32xf32>
    %115 = arith.index_cast %c2_i32 : i32 to index
    %c0_41 = arith.constant 0 : index
    %c0_42 = arith.constant 0 : index
    %116 = vector.load %arg13[%115, %c0_41, %c0_42] : memref<8x8x32xf32, #tpu.memory_space<vmem>>, vector<1x8x32xf32>
    %117 = vector.shape_cast %116 : vector<1x8x32xf32> to vector<8x32xf32>
    %118 = vector.shape_cast %114 : vector<8x32xf32> to vector<1x8x32xf32>
    tpu.vector_store %arg13[%115, %c0_41, %c0_42], %118 {strides = array<i32>} : memref<8x8x32xf32, #tpu.memory_space<vmem>>, vector<1x8x32xf32>,
    %c3_i32 = arith.constant 3 : i32
    %119 = arith.index_cast %c3_i32 : i32 to index
    %c0_43 = arith.constant 0 : index
    %c0_44 = arith.constant 0 : index
    %120 = vector.load %arg12[%119, %c0_43, %c0_44] : memref<8x8x128xf32, #tpu.memory_space<vmem>>, vector<1x8x128xf32>
    %121 = vector.shape_cast %120 : vector<1x8x128xf32> to vector<8x128xf32>
    %cst_45 = arith.constant dense<0.000000e+00> : vector<8x128xf32>
    %122 = tpu.matmul %114, %4, %cst_45 {dimension_numbers = #tpu.dot_dimension_numbers<[1], [0], [0], [1], [0, 0, 1, 1], [], []>} : vector<8x32xf32>, vector<32x128xf32>, vector<8x128xf32> -> vector<8x128xf32>
    %123 = arith.addf %121, %122 : vector<8x128xf32>
    %124 = vector.extract_strided_slice %123 {offsets = [0, 0], sizes = [8, 32], strides = [1, 1]} : vector<8x128xf32> to vector<8x32xf32>
    %125 = arith.negf %124 : vector<8x32xf32>
    %126 = math.exp %125 : vector<8x32xf32>
    %cst_46 = arith.constant 1.000000e+00 : f32
    %127 = vector.broadcast %cst_46 : f32 to vector<8x32xf32>
    %128 = arith.addf %127, %126 : vector<8x32xf32>
    %129 = arith.divf %127, %128 : vector<8x32xf32>
    %130 = vector.extract_strided_slice %123 {offsets = [0, 32], sizes = [8, 32], strides = [1, 1]} : vector<8x128xf32> to vector<8x32xf32>
    %131 = arith.negf %130 : vector<8x32xf32>
    %132 = math.exp %131 : vector<8x32xf32>
    %cst_47 = arith.constant 1.000000e+00 : f32
    %133 = vector.broadcast %cst_47 : f32 to vector<8x32xf32>
    %134 = arith.addf %133, %132 : vector<8x32xf32>
    %135 = arith.divf %133, %134 : vector<8x32xf32>
    %136 = vector.extract_strided_slice %123 {offsets = [0, 64], sizes = [8, 32], strides = [1, 1]} : vector<8x128xf32> to vector<8x32xf32>
    %137 = math.tanh %136 : vector<8x32xf32>
    %138 = vector.extract_strided_slice %123 {offsets = [0, 96], sizes = [8, 32], strides = [1, 1]} : vector<8x128xf32> to vector<8x32xf32>
    %139 = arith.negf %138 : vector<8x32xf32>
    %140 = math.exp %139 : vector<8x32xf32>
    %cst_48 = arith.constant 1.000000e+00 : f32
    %141 = vector.broadcast %cst_48 : f32 to vector<8x32xf32>
    %142 = arith.addf %141, %140 : vector<8x32xf32>
    %143 = arith.divf %141, %142 : vector<8x32xf32>
    %144 = arith.mulf %135, %112 : vector<8x32xf32>
    %145 = arith.mulf %129, %137 : vector<8x32xf32>
    %146 = arith.addf %144, %145 : vector<8x32xf32>
    %147 = math.tanh %146 : vector<8x32xf32>
    %148 = arith.mulf %143, %147 : vector<8x32xf32>
    %149 = arith.index_cast %c3_i32 : i32 to index
    %c0_49 = arith.constant 0 : index
    %c0_50 = arith.constant 0 : index
    %150 = vector.load %arg13[%149, %c0_49, %c0_50] : memref<8x8x32xf32, #tpu.memory_space<vmem>>, vector<1x8x32xf32>
    %151 = vector.shape_cast %150 : vector<1x8x32xf32> to vector<8x32xf32>
    %152 = vector.shape_cast %148 : vector<8x32xf32> to vector<1x8x32xf32>
    tpu.vector_store %arg13[%149, %c0_49, %c0_50], %152 {strides = array<i32>} : memref<8x8x32xf32, #tpu.memory_space<vmem>>, vector<1x8x32xf32>,
    %c4_i32 = arith.constant 4 : i32
    %153 = arith.index_cast %c4_i32 : i32 to index
    %c0_51 = arith.constant 0 : index
    %c0_52 = arith.constant 0 : index
    %154 = vector.load %arg12[%153, %c0_51, %c0_52] : memref<8x8x128xf32, #tpu.memory_space<vmem>>, vector<1x8x128xf32>
    %155 = vector.shape_cast %154 : vector<1x8x128xf32> to vector<8x128xf32>
    %cst_53 = arith.constant dense<0.000000e+00> : vector<8x128xf32>
    %156 = tpu.matmul %148, %4, %cst_53 {dimension_numbers = #tpu.dot_dimension_numbers<[1], [0], [0], [1], [0, 0, 1, 1], [], []>} : vector<8x32xf32>, vector<32x128xf32>, vector<8x128xf32> -> vector<8x128xf32>
    %157 = arith.addf %155, %156 : vector<8x128xf32>
    %158 = vector.extract_strided_slice %157 {offsets = [0, 0], sizes = [8, 32], strides = [1, 1]} : vector<8x128xf32> to vector<8x32xf32>
    %159 = arith.negf %158 : vector<8x32xf32>
    %160 = math.exp %159 : vector<8x32xf32>
    %cst_54 = arith.constant 1.000000e+00 : f32
    %161 = vector.broadcast %cst_54 : f32 to vector<8x32xf32>
    %162 = arith.addf %161, %160 : vector<8x32xf32>
    %163 = arith.divf %161, %162 : vector<8x32xf32>
    %164 = vector.extract_strided_slice %157 {offsets = [0, 32], sizes = [8, 32], strides = [1, 1]} : vector<8x128xf32> to vector<8x32xf32>
    %165 = arith.negf %164 : vector<8x32xf32>
    %166 = math.exp %165 : vector<8x32xf32>
    %cst_55 = arith.constant 1.000000e+00 : f32
    %167 = vector.broadcast %cst_55 : f32 to vector<8x32xf32>
    %168 = arith.addf %167, %166 : vector<8x32xf32>
    %169 = arith.divf %167, %168 : vector<8x32xf32>
    %170 = vector.extract_strided_slice %157 {offsets = [0, 64], sizes = [8, 32], strides = [1, 1]} : vector<8x128xf32> to vector<8x32xf32>
    %171 = math.tanh %170 : vector<8x32xf32>
    %172 = vector.extract_strided_slice %157 {offsets = [0, 96], sizes = [8, 32], strides = [1, 1]} : vector<8x128xf32> to vector<8x32xf32>
    %173 = arith.negf %172 : vector<8x32xf32>
    %174 = math.exp %173 : vector<8x32xf32>
    %cst_56 = arith.constant 1.000000e+00 : f32
    %175 = vector.broadcast %cst_56 : f32 to vector<8x32xf32>
    %176 = arith.addf %175, %174 : vector<8x32xf32>
    %177 = arith.divf %175, %176 : vector<8x32xf32>
    %178 = arith.mulf %169, %146 : vector<8x32xf32>
    %179 = arith.mulf %163, %171 : vector<8x32xf32>
    %180 = arith.addf %178, %179 : vector<8x32xf32>
    %181 = math.tanh %180 : vector<8x32xf32>
    %182 = arith.mulf %177, %181 : vector<8x32xf32>
    %183 = arith.index_cast %c4_i32 : i32 to index
    %c0_57 = arith.constant 0 : index
    %c0_58 = arith.constant 0 : index
    %184 = vector.load %arg13[%183, %c0_57, %c0_58] : memref<8x8x32xf32, #tpu.memory_space<vmem>>, vector<1x8x32xf32>
    %185 = vector.shape_cast %184 : vector<1x8x32xf32> to vector<8x32xf32>
    %186 = vector.shape_cast %182 : vector<8x32xf32> to vector<1x8x32xf32>
    tpu.vector_store %arg13[%183, %c0_57, %c0_58], %186 {strides = array<i32>} : memref<8x8x32xf32, #tpu.memory_space<vmem>>, vector<1x8x32xf32>,
    %c5_i32 = arith.constant 5 : i32
    %187 = arith.index_cast %c5_i32 : i32 to index
    %c0_59 = arith.constant 0 : index
    %c0_60 = arith.constant 0 : index
    %188 = vector.load %arg12[%187, %c0_59, %c0_60] : memref<8x8x128xf32, #tpu.memory_space<vmem>>, vector<1x8x128xf32>
    %189 = vector.shape_cast %188 : vector<1x8x128xf32> to vector<8x128xf32>
    %cst_61 = arith.constant dense<0.000000e+00> : vector<8x128xf32>
    %190 = tpu.matmul %182, %4, %cst_61 {dimension_numbers = #tpu.dot_dimension_numbers<[1], [0], [0], [1], [0, 0, 1, 1], [], []>} : vector<8x32xf32>, vector<32x128xf32>, vector<8x128xf32> -> vector<8x128xf32>
    %191 = arith.addf %189, %190 : vector<8x128xf32>
    %192 = vector.extract_strided_slice %191 {offsets = [0, 0], sizes = [8, 32], strides = [1, 1]} : vector<8x128xf32> to vector<8x32xf32>
    %193 = arith.negf %192 : vector<8x32xf32>
    %194 = math.exp %193 : vector<8x32xf32>
    %cst_62 = arith.constant 1.000000e+00 : f32
    %195 = vector.broadcast %cst_62 : f32 to vector<8x32xf32>
    %196 = arith.addf %195, %194 : vector<8x32xf32>
    %197 = arith.divf %195, %196 : vector<8x32xf32>
    %198 = vector.extract_strided_slice %191 {offsets = [0, 32], sizes = [8, 32], strides = [1, 1]} : vector<8x128xf32> to vector<8x32xf32>
    %199 = arith.negf %198 : vector<8x32xf32>
    %200 = math.exp %199 : vector<8x32xf32>
    %cst_63 = arith.constant 1.000000e+00 : f32
    %201 = vector.broadcast %cst_63 : f32 to vector<8x32xf32>
    %202 = arith.addf %201, %200 : vector<8x32xf32>
    %203 = arith.divf %201, %202 : vector<8x32xf32>
    %204 = vector.extract_strided_slice %191 {offsets = [0, 64], sizes = [8, 32], strides = [1, 1]} : vector<8x128xf32> to vector<8x32xf32>
    %205 = math.tanh %204 : vector<8x32xf32>
    %206 = vector.extract_strided_slice %191 {offsets = [0, 96], sizes = [8, 32], strides = [1, 1]} : vector<8x128xf32> to vector<8x32xf32>
    %207 = arith.negf %206 : vector<8x32xf32>
    %208 = math.exp %207 : vector<8x32xf32>
    %cst_64 = arith.constant 1.000000e+00 : f32
    %209 = vector.broadcast %cst_64 : f32 to vector<8x32xf32>
    %210 = arith.addf %209, %208 : vector<8x32xf32>
    %211 = arith.divf %209, %210 : vector<8x32xf32>
    %212 = arith.mulf %203, %180 : vector<8x32xf32>
    %213 = arith.mulf %197, %205 : vector<8x32xf32>
    %214 = arith.addf %212, %213 : vector<8x32xf32>
    %215 = math.tanh %214 : vector<8x32xf32>
    %216 = arith.mulf %211, %215 : vector<8x32xf32>
    %217 = arith.index_cast %c5_i32 : i32 to index
    %c0_65 = arith.constant 0 : index
    %c0_66 = arith.constant 0 : index
    %218 = vector.load %arg13[%217, %c0_65, %c0_66] : memref<8x8x32xf32, #tpu.memory_space<vmem>>, vector<1x8x32xf32>
    %219 = vector.shape_cast %218 : vector<1x8x32xf32> to vector<8x32xf32>
    %220 = vector.shape_cast %216 : vector<8x32xf32> to vector<1x8x32xf32>
    tpu.vector_store %arg13[%217, %c0_65, %c0_66], %220 {strides = array<i32>} : memref<8x8x32xf32, #tpu.memory_space<vmem>>, vector<1x8x32xf32>,
    %c6_i32 = arith.constant 6 : i32
    %221 = arith.index_cast %c6_i32 : i32 to index
    %c0_67 = arith.constant 0 : index
    %c0_68 = arith.constant 0 : index
    %222 = vector.load %arg12[%221, %c0_67, %c0_68] : memref<8x8x128xf32, #tpu.memory_space<vmem>>, vector<1x8x128xf32>
    %223 = vector.shape_cast %222 : vector<1x8x128xf32> to vector<8x128xf32>
    %cst_69 = arith.constant dense<0.000000e+00> : vector<8x128xf32>
    %224 = tpu.matmul %216, %4, %cst_69 {dimension_numbers = #tpu.dot_dimension_numbers<[1], [0], [0], [1], [0, 0, 1, 1], [], []>} : vector<8x32xf32>, vector<32x128xf32>, vector<8x128xf32> -> vector<8x128xf32>
    %225 = arith.addf %223, %224 : vector<8x128xf32>
    %226 = vector.extract_strided_slice %225 {offsets = [0, 0], sizes = [8, 32], strides = [1, 1]} : vector<8x128xf32> to vector<8x32xf32>
    %227 = arith.negf %226 : vector<8x32xf32>
    %228 = math.exp %227 : vector<8x32xf32>
    %cst_70 = arith.constant 1.000000e+00 : f32
    %229 = vector.broadcast %cst_70 : f32 to vector<8x32xf32>
    %230 = arith.addf %229, %228 : vector<8x32xf32>
    %231 = arith.divf %229, %230 : vector<8x32xf32>
    %232 = vector.extract_strided_slice %225 {offsets = [0, 32], sizes = [8, 32], strides = [1, 1]} : vector<8x128xf32> to vector<8x32xf32>
    %233 = arith.negf %232 : vector<8x32xf32>
    %234 = math.exp %233 : vector<8x32xf32>
    %cst_71 = arith.constant 1.000000e+00 : f32
    %235 = vector.broadcast %cst_71 : f32 to vector<8x32xf32>
    %236 = arith.addf %235, %234 : vector<8x32xf32>
    %237 = arith.divf %235, %236 : vector<8x32xf32>
    %238 = vector.extract_strided_slice %225 {offsets = [0, 64], sizes = [8, 32], strides = [1, 1]} : vector<8x128xf32> to vector<8x32xf32>
    %239 = math.tanh %238 : vector<8x32xf32>
    %240 = vector.extract_strided_slice %225 {offsets = [0, 96], sizes = [8, 32], strides = [1, 1]} : vector<8x128xf32> to vector<8x32xf32>
    %241 = arith.negf %240 : vector<8x32xf32>
    %242 = math.exp %241 : vector<8x32xf32>
    %cst_72 = arith.constant 1.000000e+00 : f32
    %243 = vector.broadcast %cst_72 : f32 to vector<8x32xf32>
    %244 = arith.addf %243, %242 : vector<8x32xf32>
    %245 = arith.divf %243, %244 : vector<8x32xf32>
    %246 = arith.mulf %237, %214 : vector<8x32xf32>
    %247 = arith.mulf %231, %239 : vector<8x32xf32>
    %248 = arith.addf %246, %247 : vector<8x32xf32>
    %249 = math.tanh %248 : vector<8x32xf32>
    %250 = arith.mulf %245, %249 : vector<8x32xf32>
    %251 = arith.index_cast %c6_i32 : i32 to index
    %c0_73 = arith.constant 0 : index
    %c0_74 = arith.constant 0 : index
    %252 = vector.load %arg13[%251, %c0_73, %c0_74] : memref<8x8x32xf32, #tpu.memory_space<vmem>>, vector<1x8x32xf32>
    %253 = vector.shape_cast %252 : vector<1x8x32xf32> to vector<8x32xf32>
    %254 = vector.shape_cast %250 : vector<8x32xf32> to vector<1x8x32xf32>
    tpu.vector_store %arg13[%251, %c0_73, %c0_74], %254 {strides = array<i32>} : memref<8x8x32xf32, #tpu.memory_space<vmem>>, vector<1x8x32xf32>,
    %c7_i32 = arith.constant 7 : i32
    %255 = arith.index_cast %c7_i32 : i32 to index
    %c0_75 = arith.constant 0 : index
    %c0_76 = arith.constant 0 : index
    %256 = vector.load %arg12[%255, %c0_75, %c0_76] : memref<8x8x128xf32, #tpu.memory_space<vmem>>, vector<1x8x128xf32>
    %257 = vector.shape_cast %256 : vector<1x8x128xf32> to vector<8x128xf32>
    %cst_77 = arith.constant dense<0.000000e+00> : vector<8x128xf32>
    %258 = tpu.matmul %250, %4, %cst_77 {dimension_numbers = #tpu.dot_dimension_numbers<[1], [0], [0], [1], [0, 0, 1, 1], [], []>} : vector<8x32xf32>, vector<32x128xf32>, vector<8x128xf32> -> vector<8x128xf32>
    %259 = arith.addf %257, %258 : vector<8x128xf32>
    %260 = vector.extract_strided_slice %259 {offsets = [0, 0], sizes = [8, 32], strides = [1, 1]} : vector<8x128xf32> to vector<8x32xf32>
    %261 = arith.negf %260 : vector<8x32xf32>
    %262 = math.exp %261 : vector<8x32xf32>
    %cst_78 = arith.constant 1.000000e+00 : f32
    %263 = vector.broadcast %cst_78 : f32 to vector<8x32xf32>
    %264 = arith.addf %263, %262 : vector<8x32xf32>
    %265 = arith.divf %263, %264 : vector<8x32xf32>
    %266 = vector.extract_strided_slice %259 {offsets = [0, 32], sizes = [8, 32], strides = [1, 1]} : vector<8x128xf32> to vector<8x32xf32>
    %267 = arith.negf %266 : vector<8x32xf32>
    %268 = math.exp %267 : vector<8x32xf32>
    %cst_79 = arith.constant 1.000000e+00 : f32
    %269 = vector.broadcast %cst_79 : f32 to vector<8x32xf32>
    %270 = arith.addf %269, %268 : vector<8x32xf32>
    %271 = arith.divf %269, %270 : vector<8x32xf32>
    %272 = vector.extract_strided_slice %259 {offsets = [0, 64], sizes = [8, 32], strides = [1, 1]} : vector<8x128xf32> to vector<8x32xf32>
    %273 = math.tanh %272 : vector<8x32xf32>
    %274 = vector.extract_strided_slice %259 {offsets = [0, 96], sizes = [8, 32], strides = [1, 1]} : vector<8x128xf32> to vector<8x32xf32>
    %275 = arith.negf %274 : vector<8x32xf32>
    %276 = math.exp %275 : vector<8x32xf32>
    %cst_80 = arith.constant 1.000000e+00 : f32
    %277 = vector.broadcast %cst_80 : f32 to vector<8x32xf32>
    %278 = arith.addf %277, %276 : vector<8x32xf32>
    %279 = arith.divf %277, %278 : vector<8x32xf32>
    %280 = arith.mulf %271, %248 : vector<8x32xf32>
    %281 = arith.mulf %265, %273 : vector<8x32xf32>
    %282 = arith.addf %280, %281 : vector<8x32xf32>
    %283 = math.tanh %282 : vector<8x32xf32>
    %284 = arith.mulf %279, %283 : vector<8x32xf32>
    %285 = arith.index_cast %c7_i32 : i32 to index
    %c0_81 = arith.constant 0 : index
    %c0_82 = arith.constant 0 : index
    %286 = vector.load %arg13[%285, %c0_81, %c0_82] : memref<8x8x32xf32, #tpu.memory_space<vmem>>, vector<1x8x32xf32>
    %287 = vector.shape_cast %286 : vector<1x8x32xf32> to vector<8x32xf32>
    %288 = vector.shape_cast %284 : vector<8x32xf32> to vector<1x8x32xf32>
    tpu.vector_store %arg13[%285, %c0_81, %c0_82], %288 {strides = array<i32>} : memref<8x8x32xf32, #tpu.memory_space<vmem>>, vector<1x8x32xf32>,
    %c8_i32 = arith.constant 8 : i32
    %c0_83 = arith.constant 0 : index
    %c0_84 = arith.constant 0 : index
    %c0_85 = arith.constant 0 : index
    %289 = vector.load %arg14[%c0_83, %c0_84, %c0_85] : memref<2x8x32xf32, #tpu.memory_space<vmem>>, vector<1x8x32xf32>
    %290 = vector.shape_cast %289 : vector<1x8x32xf32> to vector<8x32xf32>
    %291 = vector.shape_cast %284 : vector<8x32xf32> to vector<1x8x32xf32>
    tpu.vector_store %arg14[%c0_83, %c0_84, %c0_85], %291 {strides = array<i32>} : memref<2x8x32xf32, #tpu.memory_space<vmem>>, vector<1x8x32xf32>,
    %c0_86 = arith.constant 0 : index
    %c0_87 = arith.constant 0 : index
    %c0_88 = arith.constant 0 : index
    %292 = vector.load %arg15[%c0_86, %c0_87, %c0_88] : memref<2x8x32xf32, #tpu.memory_space<vmem>>, vector<1x8x32xf32>
    %293 = vector.shape_cast %292 : vector<1x8x32xf32> to vector<8x32xf32>
    %294 = vector.shape_cast %282 : vector<8x32xf32> to vector<1x8x32xf32>
    tpu.vector_store %arg15[%c0_86, %c0_87, %c0_88], %294 {strides = array<i32>} : memref<2x8x32xf32, #tpu.memory_space<vmem>>, vector<1x8x32xf32>,
    %c0_89 = arith.constant 0 : index
    %c0_90 = arith.constant 0 : index
    %295 = vector.load %arg6[%c0_89, %c0_90] : memref<32x128xf32, #tpu.memory_space<vmem>>, vector<32x128xf32>
    %c0_91 = arith.constant 0 : index
    %c0_92 = arith.constant 0 : index
    %296 = vector.load %arg7[%c0_91, %c0_92] : memref<32x128xf32, #tpu.memory_space<vmem>>, vector<32x128xf32>
    %c0_93 = arith.constant 0 : index
    %c0_94 = arith.constant 0 : index
    %297 = vector.load %arg8[%c0_93, %c0_94] : memref<1x128xf32, #tpu.memory_space<vmem>>, vector<1x128xf32>
    %c0_95 = arith.constant 0 : index
    %c0_96 = arith.constant 0 : index
    %c0_97 = arith.constant 0 : index
    %298 = vector.load %arg13[%c0_95, %c0_96, %c0_97] : memref<8x8x32xf32, #tpu.memory_space<vmem>>, vector<8x8x32xf32>
    %299 = vector.shape_cast %298 : vector<8x8x32xf32> to vector<64x32xf32>
    %cst_98 = arith.constant dense<0.000000e+00> : vector<64x128xf32>
    %300 = tpu.matmul %299, %295, %cst_98 {dimension_numbers = #tpu.dot_dimension_numbers<[1], [0], [0], [1], [0, 0, 1, 1], [], []>} : vector<64x32xf32>, vector<32x128xf32>, vector<64x128xf32> -> vector<64x128xf32>
    %301 = vector.broadcast %297 : vector<1x128xf32> to vector<64x128xf32>
    %302 = arith.addf %300, %301 : vector<64x128xf32>
    %303 = vector.shape_cast %302 : vector<64x128xf32> to vector<8x8x128xf32>
    %c0_99 = arith.constant 0 : index
    %c0_100 = arith.constant 0 : index
    %c0_101 = arith.constant 0 : index
    %304 = vector.load %arg12[%c0_99, %c0_100, %c0_101] : memref<8x8x128xf32, #tpu.memory_space<vmem>>, vector<8x8x128xf32>
    tpu.vector_store %arg12[%c0_99, %c0_100, %c0_101], %303 {strides = array<i32>} : memref<8x8x128xf32, #tpu.memory_space<vmem>>, vector<8x8x128xf32>,
    %c1 = arith.constant 1 : index
    %c0_102 = arith.constant 0 : index
    %c0_103 = arith.constant 0 : index
    %305 = vector.load %arg14[%c1, %c0_102, %c0_103] : memref<2x8x32xf32, #tpu.memory_space<vmem>>, vector<1x8x32xf32>
    %306 = vector.shape_cast %305 : vector<1x8x32xf32> to vector<8x32xf32>
    %c1_104 = arith.constant 1 : index
    %c0_105 = arith.constant 0 : index
    %c0_106 = arith.constant 0 : index
    %307 = vector.load %arg15[%c1_104, %c0_105, %c0_106] : memref<2x8x32xf32, #tpu.memory_space<vmem>>, vector<1x8x32xf32>
    %308 = vector.shape_cast %307 : vector<1x8x32xf32> to vector<8x32xf32>
    %c0_i32_107 = arith.constant 0 : i32
    %309 = arith.index_cast %c0_i32_107 : i32 to index
    %c0_108 = arith.constant 0 : index
    %c0_109 = arith.constant 0 : index
    %310 = vector.load %arg12[%309, %c0_108, %c0_109] : memref<8x8x128xf32, #tpu.memory_space<vmem>>, vector<1x8x128xf32>
    %311 = vector.shape_cast %310 : vector<1x8x128xf32> to vector<8x128xf32>
    %cst_110 = arith.constant dense<0.000000e+00> : vector<8x128xf32>
    %312 = tpu.matmul %306, %296, %cst_110 {dimension_numbers = #tpu.dot_dimension_numbers<[1], [0], [0], [1], [0, 0, 1, 1], [], []>} : vector<8x32xf32>, vector<32x128xf32>, vector<8x128xf32> -> vector<8x128xf32>
    %313 = arith.addf %311, %312 : vector<8x128xf32>
    %314 = vector.extract_strided_slice %313 {offsets = [0, 0], sizes = [8, 32], strides = [1, 1]} : vector<8x128xf32> to vector<8x32xf32>
    %315 = arith.negf %314 : vector<8x32xf32>
    %316 = math.exp %315 : vector<8x32xf32>
    %cst_111 = arith.constant 1.000000e+00 : f32
    %317 = vector.broadcast %cst_111 : f32 to vector<8x32xf32>
    %318 = arith.addf %317, %316 : vector<8x32xf32>
    %319 = arith.divf %317, %318 : vector<8x32xf32>
    %320 = vector.extract_strided_slice %313 {offsets = [0, 32], sizes = [8, 32], strides = [1, 1]} : vector<8x128xf32> to vector<8x32xf32>
    %321 = arith.negf %320 : vector<8x32xf32>
    %322 = math.exp %321 : vector<8x32xf32>
    %cst_112 = arith.constant 1.000000e+00 : f32
    %323 = vector.broadcast %cst_112 : f32 to vector<8x32xf32>
    %324 = arith.addf %323, %322 : vector<8x32xf32>
    %325 = arith.divf %323, %324 : vector<8x32xf32>
    %326 = vector.extract_strided_slice %313 {offsets = [0, 64], sizes = [8, 32], strides = [1, 1]} : vector<8x128xf32> to vector<8x32xf32>
    %327 = math.tanh %326 : vector<8x32xf32>
    %328 = vector.extract_strided_slice %313 {offsets = [0, 96], sizes = [8, 32], strides = [1, 1]} : vector<8x128xf32> to vector<8x32xf32>
    %329 = arith.negf %328 : vector<8x32xf32>
    %330 = math.exp %329 : vector<8x32xf32>
    %cst_113 = arith.constant 1.000000e+00 : f32
    %331 = vector.broadcast %cst_113 : f32 to vector<8x32xf32>
    %332 = arith.addf %331, %330 : vector<8x32xf32>
    %333 = arith.divf %331, %332 : vector<8x32xf32>
    %334 = arith.mulf %325, %308 : vector<8x32xf32>
    %335 = arith.mulf %319, %327 : vector<8x32xf32>
    %336 = arith.addf %334, %335 : vector<8x32xf32>
    %337 = math.tanh %336 : vector<8x32xf32>
    %338 = arith.mulf %333, %337 : vector<8x32xf32>
    %c1_i32_114 = arith.constant 1 : i32
    %339 = arith.index_cast %c1_i32_114 : i32 to index
    %c0_115 = arith.constant 0 : index
    %c0_116 = arith.constant 0 : index
    %340 = vector.load %arg12[%339, %c0_115, %c0_116] : memref<8x8x128xf32, #tpu.memory_space<vmem>>, vector<1x8x128xf32>
    %341 = vector.shape_cast %340 : vector<1x8x128xf32> to vector<8x128xf32>
    %cst_117 = arith.constant dense<0.000000e+00> : vector<8x128xf32>
    %342 = tpu.matmul %338, %296, %cst_117 {dimension_numbers = #tpu.dot_dimension_numbers<[1], [0], [0], [1], [0, 0, 1, 1], [], []>} : vector<8x32xf32>, vector<32x128xf32>, vector<8x128xf32> -> vector<8x128xf32>
    %343 = arith.addf %341, %342 : vector<8x128xf32>
    %344 = vector.extract_strided_slice %343 {offsets = [0, 0], sizes = [8, 32], strides = [1, 1]} : vector<8x128xf32> to vector<8x32xf32>
    %345 = arith.negf %344 : vector<8x32xf32>
    %346 = math.exp %345 : vector<8x32xf32>
    %cst_118 = arith.constant 1.000000e+00 : f32
    %347 = vector.broadcast %cst_118 : f32 to vector<8x32xf32>
    %348 = arith.addf %347, %346 : vector<8x32xf32>
    %349 = arith.divf %347, %348 : vector<8x32xf32>
    %350 = vector.extract_strided_slice %343 {offsets = [0, 32], sizes = [8, 32], strides = [1, 1]} : vector<8x128xf32> to vector<8x32xf32>
    %351 = arith.negf %350 : vector<8x32xf32>
    %352 = math.exp %351 : vector<8x32xf32>
    %cst_119 = arith.constant 1.000000e+00 : f32
    %353 = vector.broadcast %cst_119 : f32 to vector<8x32xf32>
    %354 = arith.addf %353, %352 : vector<8x32xf32>
    %355 = arith.divf %353, %354 : vector<8x32xf32>
    %356 = vector.extract_strided_slice %343 {offsets = [0, 64], sizes = [8, 32], strides = [1, 1]} : vector<8x128xf32> to vector<8x32xf32>
    %357 = math.tanh %356 : vector<8x32xf32>
    %358 = vector.extract_strided_slice %343 {offsets = [0, 96], sizes = [8, 32], strides = [1, 1]} : vector<8x128xf32> to vector<8x32xf32>
    %359 = arith.negf %358 : vector<8x32xf32>
    %360 = math.exp %359 : vector<8x32xf32>
    %cst_120 = arith.constant 1.000000e+00 : f32
    %361 = vector.broadcast %cst_120 : f32 to vector<8x32xf32>
    %362 = arith.addf %361, %360 : vector<8x32xf32>
    %363 = arith.divf %361, %362 : vector<8x32xf32>
    %364 = arith.mulf %355, %336 : vector<8x32xf32>
    %365 = arith.mulf %349, %357 : vector<8x32xf32>
    %366 = arith.addf %364, %365 : vector<8x32xf32>
    %367 = math.tanh %366 : vector<8x32xf32>
    %368 = arith.mulf %363, %367 : vector<8x32xf32>
    %c2_i32_121 = arith.constant 2 : i32
    %369 = arith.index_cast %c2_i32_121 : i32 to index
    %c0_122 = arith.constant 0 : index
    %c0_123 = arith.constant 0 : index
    %370 = vector.load %arg12[%369, %c0_122, %c0_123] : memref<8x8x128xf32, #tpu.memory_space<vmem>>, vector<1x8x128xf32>
    %371 = vector.shape_cast %370 : vector<1x8x128xf32> to vector<8x128xf32>
    %cst_124 = arith.constant dense<0.000000e+00> : vector<8x128xf32>
    %372 = tpu.matmul %368, %296, %cst_124 {dimension_numbers = #tpu.dot_dimension_numbers<[1], [0], [0], [1], [0, 0, 1, 1], [], []>} : vector<8x32xf32>, vector<32x128xf32>, vector<8x128xf32> -> vector<8x128xf32>
    %373 = arith.addf %371, %372 : vector<8x128xf32>
    %374 = vector.extract_strided_slice %373 {offsets = [0, 0], sizes = [8, 32], strides = [1, 1]} : vector<8x128xf32> to vector<8x32xf32>
    %375 = arith.negf %374 : vector<8x32xf32>
    %376 = math.exp %375 : vector<8x32xf32>
    %cst_125 = arith.constant 1.000000e+00 : f32
    %377 = vector.broadcast %cst_125 : f32 to vector<8x32xf32>
    %378 = arith.addf %377, %376 : vector<8x32xf32>
    %379 = arith.divf %377, %378 : vector<8x32xf32>
    %380 = vector.extract_strided_slice %373 {offsets = [0, 32], sizes = [8, 32], strides = [1, 1]} : vector<8x128xf32> to vector<8x32xf32>
    %381 = arith.negf %380 : vector<8x32xf32>
    %382 = math.exp %381 : vector<8x32xf32>
    %cst_126 = arith.constant 1.000000e+00 : f32
    %383 = vector.broadcast %cst_126 : f32 to vector<8x32xf32>
    %384 = arith.addf %383, %382 : vector<8x32xf32>
    %385 = arith.divf %383, %384 : vector<8x32xf32>
    %386 = vector.extract_strided_slice %373 {offsets = [0, 64], sizes = [8, 32], strides = [1, 1]} : vector<8x128xf32> to vector<8x32xf32>
    %387 = math.tanh %386 : vector<8x32xf32>
    %388 = vector.extract_strided_slice %373 {offsets = [0, 96], sizes = [8, 32], strides = [1, 1]} : vector<8x128xf32> to vector<8x32xf32>
    %389 = arith.negf %388 : vector<8x32xf32>
    %390 = math.exp %389 : vector<8x32xf32>
    %cst_127 = arith.constant 1.000000e+00 : f32
    %391 = vector.broadcast %cst_127 : f32 to vector<8x32xf32>
    %392 = arith.addf %391, %390 : vector<8x32xf32>
    %393 = arith.divf %391, %392 : vector<8x32xf32>
    %394 = arith.mulf %385, %366 : vector<8x32xf32>
    %395 = arith.mulf %379, %387 : vector<8x32xf32>
    %396 = arith.addf %394, %395 : vector<8x32xf32>
    %397 = math.tanh %396 : vector<8x32xf32>
    %398 = arith.mulf %393, %397 : vector<8x32xf32>
    %c3_i32_128 = arith.constant 3 : i32
    %399 = arith.index_cast %c3_i32_128 : i32 to index
    %c0_129 = arith.constant 0 : index
    %c0_130 = arith.constant 0 : index
    %400 = vector.load %arg12[%399, %c0_129, %c0_130] : memref<8x8x128xf32, #tpu.memory_space<vmem>>, vector<1x8x128xf32>
    %401 = vector.shape_cast %400 : vector<1x8x128xf32> to vector<8x128xf32>
    %cst_131 = arith.constant dense<0.000000e+00> : vector<8x128xf32>
    %402 = tpu.matmul %398, %296, %cst_131 {dimension_numbers = #tpu.dot_dimension_numbers<[1], [0], [0], [1], [0, 0, 1, 1], [], []>} : vector<8x32xf32>, vector<32x128xf32>, vector<8x128xf32> -> vector<8x128xf32>
    %403 = arith.addf %401, %402 : vector<8x128xf32>
    %404 = vector.extract_strided_slice %403 {offsets = [0, 0], sizes = [8, 32], strides = [1, 1]} : vector<8x128xf32> to vector<8x32xf32>
    %405 = arith.negf %404 : vector<8x32xf32>
    %406 = math.exp %405 : vector<8x32xf32>
    %cst_132 = arith.constant 1.000000e+00 : f32
    %407 = vector.broadcast %cst_132 : f32 to vector<8x32xf32>
    %408 = arith.addf %407, %406 : vector<8x32xf32>
    %409 = arith.divf %407, %408 : vector<8x32xf32>
    %410 = vector.extract_strided_slice %403 {offsets = [0, 32], sizes = [8, 32], strides = [1, 1]} : vector<8x128xf32> to vector<8x32xf32>
    %411 = arith.negf %410 : vector<8x32xf32>
    %412 = math.exp %411 : vector<8x32xf32>
    %cst_133 = arith.constant 1.000000e+00 : f32
    %413 = vector.broadcast %cst_133 : f32 to vector<8x32xf32>
    %414 = arith.addf %413, %412 : vector<8x32xf32>
    %415 = arith.divf %413, %414 : vector<8x32xf32>
    %416 = vector.extract_strided_slice %403 {offsets = [0, 64], sizes = [8, 32], strides = [1, 1]} : vector<8x128xf32> to vector<8x32xf32>
    %417 = math.tanh %416 : vector<8x32xf32>
    %418 = vector.extract_strided_slice %403 {offsets = [0, 96], sizes = [8, 32], strides = [1, 1]} : vector<8x128xf32> to vector<8x32xf32>
    %419 = arith.negf %418 : vector<8x32xf32>
    %420 = math.exp %419 : vector<8x32xf32>
    %cst_134 = arith.constant 1.000000e+00 : f32
    %421 = vector.broadcast %cst_134 : f32 to vector<8x32xf32>
    %422 = arith.addf %421, %420 : vector<8x32xf32>
    %423 = arith.divf %421, %422 : vector<8x32xf32>
    %424 = arith.mulf %415, %396 : vector<8x32xf32>
    %425 = arith.mulf %409, %417 : vector<8x32xf32>
    %426 = arith.addf %424, %425 : vector<8x32xf32>
    %427 = math.tanh %426 : vector<8x32xf32>
    %428 = arith.mulf %423, %427 : vector<8x32xf32>
    %c4_i32_135 = arith.constant 4 : i32
    %429 = arith.index_cast %c4_i32_135 : i32 to index
    %c0_136 = arith.constant 0 : index
    %c0_137 = arith.constant 0 : index
    %430 = vector.load %arg12[%429, %c0_136, %c0_137] : memref<8x8x128xf32, #tpu.memory_space<vmem>>, vector<1x8x128xf32>
    %431 = vector.shape_cast %430 : vector<1x8x128xf32> to vector<8x128xf32>
    %cst_138 = arith.constant dense<0.000000e+00> : vector<8x128xf32>
    %432 = tpu.matmul %428, %296, %cst_138 {dimension_numbers = #tpu.dot_dimension_numbers<[1], [0], [0], [1], [0, 0, 1, 1], [], []>} : vector<8x32xf32>, vector<32x128xf32>, vector<8x128xf32> -> vector<8x128xf32>
    %433 = arith.addf %431, %432 : vector<8x128xf32>
    %434 = vector.extract_strided_slice %433 {offsets = [0, 0], sizes = [8, 32], strides = [1, 1]} : vector<8x128xf32> to vector<8x32xf32>
    %435 = arith.negf %434 : vector<8x32xf32>
    %436 = math.exp %435 : vector<8x32xf32>
    %cst_139 = arith.constant 1.000000e+00 : f32
    %437 = vector.broadcast %cst_139 : f32 to vector<8x32xf32>
    %438 = arith.addf %437, %436 : vector<8x32xf32>
    %439 = arith.divf %437, %438 : vector<8x32xf32>
    %440 = vector.extract_strided_slice %433 {offsets = [0, 32], sizes = [8, 32], strides = [1, 1]} : vector<8x128xf32> to vector<8x32xf32>
    %441 = arith.negf %440 : vector<8x32xf32>
    %442 = math.exp %441 : vector<8x32xf32>
    %cst_140 = arith.constant 1.000000e+00 : f32
    %443 = vector.broadcast %cst_140 : f32 to vector<8x32xf32>
    %444 = arith.addf %443, %442 : vector<8x32xf32>
    %445 = arith.divf %443, %444 : vector<8x32xf32>
    %446 = vector.extract_strided_slice %433 {offsets = [0, 64], sizes = [8, 32], strides = [1, 1]} : vector<8x128xf32> to vector<8x32xf32>
    %447 = math.tanh %446 : vector<8x32xf32>
    %448 = vector.extract_strided_slice %433 {offsets = [0, 96], sizes = [8, 32], strides = [1, 1]} : vector<8x128xf32> to vector<8x32xf32>
    %449 = arith.negf %448 : vector<8x32xf32>
    %450 = math.exp %449 : vector<8x32xf32>
    %cst_141 = arith.constant 1.000000e+00 : f32
    %451 = vector.broadcast %cst_141 : f32 to vector<8x32xf32>
    %452 = arith.addf %451, %450 : vector<8x32xf32>
    %453 = arith.divf %451, %452 : vector<8x32xf32>
    %454 = arith.mulf %445, %426 : vector<8x32xf32>
    %455 = arith.mulf %439, %447 : vector<8x32xf32>
    %456 = arith.addf %454, %455 : vector<8x32xf32>
    %457 = math.tanh %456 : vector<8x32xf32>
    %458 = arith.mulf %453, %457 : vector<8x32xf32>
    %c5_i32_142 = arith.constant 5 : i32
    %459 = arith.index_cast %c5_i32_142 : i32 to index
    %c0_143 = arith.constant 0 : index
    %c0_144 = arith.constant 0 : index
    %460 = vector.load %arg12[%459, %c0_143, %c0_144] : memref<8x8x128xf32, #tpu.memory_space<vmem>>, vector<1x8x128xf32>
    %461 = vector.shape_cast %460 : vector<1x8x128xf32> to vector<8x128xf32>
    %cst_145 = arith.constant dense<0.000000e+00> : vector<8x128xf32>
    %462 = tpu.matmul %458, %296, %cst_145 {dimension_numbers = #tpu.dot_dimension_numbers<[1], [0], [0], [1], [0, 0, 1, 1], [], []>} : vector<8x32xf32>, vector<32x128xf32>, vector<8x128xf32> -> vector<8x128xf32>
    %463 = arith.addf %461, %462 : vector<8x128xf32>
    %464 = vector.extract_strided_slice %463 {offsets = [0, 0], sizes = [8, 32], strides = [1, 1]} : vector<8x128xf32> to vector<8x32xf32>
    %465 = arith.negf %464 : vector<8x32xf32>
    %466 = math.exp %465 : vector<8x32xf32>
    %cst_146 = arith.constant 1.000000e+00 : f32
    %467 = vector.broadcast %cst_146 : f32 to vector<8x32xf32>
    %468 = arith.addf %467, %466 : vector<8x32xf32>
    %469 = arith.divf %467, %468 : vector<8x32xf32>
    %470 = vector.extract_strided_slice %463 {offsets = [0, 32], sizes = [8, 32], strides = [1, 1]} : vector<8x128xf32> to vector<8x32xf32>
    %471 = arith.negf %470 : vector<8x32xf32>
    %472 = math.exp %471 : vector<8x32xf32>
    %cst_147 = arith.constant 1.000000e+00 : f32
    %473 = vector.broadcast %cst_147 : f32 to vector<8x32xf32>
    %474 = arith.addf %473, %472 : vector<8x32xf32>
    %475 = arith.divf %473, %474 : vector<8x32xf32>
    %476 = vector.extract_strided_slice %463 {offsets = [0, 64], sizes = [8, 32], strides = [1, 1]} : vector<8x128xf32> to vector<8x32xf32>
    %477 = math.tanh %476 : vector<8x32xf32>
    %478 = vector.extract_strided_slice %463 {offsets = [0, 96], sizes = [8, 32], strides = [1, 1]} : vector<8x128xf32> to vector<8x32xf32>
    %479 = arith.negf %478 : vector<8x32xf32>
    %480 = math.exp %479 : vector<8x32xf32>
    %cst_148 = arith.constant 1.000000e+00 : f32
    %481 = vector.broadcast %cst_148 : f32 to vector<8x32xf32>
    %482 = arith.addf %481, %480 : vector<8x32xf32>
    %483 = arith.divf %481, %482 : vector<8x32xf32>
    %484 = arith.mulf %475, %456 : vector<8x32xf32>
    %485 = arith.mulf %469, %477 : vector<8x32xf32>
    %486 = arith.addf %484, %485 : vector<8x32xf32>
    %487 = math.tanh %486 : vector<8x32xf32>
    %488 = arith.mulf %483, %487 : vector<8x32xf32>
    %c6_i32_149 = arith.constant 6 : i32
    %489 = arith.index_cast %c6_i32_149 : i32 to index
    %c0_150 = arith.constant 0 : index
    %c0_151 = arith.constant 0 : index
    %490 = vector.load %arg12[%489, %c0_150, %c0_151] : memref<8x8x128xf32, #tpu.memory_space<vmem>>, vector<1x8x128xf32>
    %491 = vector.shape_cast %490 : vector<1x8x128xf32> to vector<8x128xf32>
    %cst_152 = arith.constant dense<0.000000e+00> : vector<8x128xf32>
    %492 = tpu.matmul %488, %296, %cst_152 {dimension_numbers = #tpu.dot_dimension_numbers<[1], [0], [0], [1], [0, 0, 1, 1], [], []>} : vector<8x32xf32>, vector<32x128xf32>, vector<8x128xf32> -> vector<8x128xf32>
    %493 = arith.addf %491, %492 : vector<8x128xf32>
    %494 = vector.extract_strided_slice %493 {offsets = [0, 0], sizes = [8, 32], strides = [1, 1]} : vector<8x128xf32> to vector<8x32xf32>
    %495 = arith.negf %494 : vector<8x32xf32>
    %496 = math.exp %495 : vector<8x32xf32>
    %cst_153 = arith.constant 1.000000e+00 : f32
    %497 = vector.broadcast %cst_153 : f32 to vector<8x32xf32>
    %498 = arith.addf %497, %496 : vector<8x32xf32>
    %499 = arith.divf %497, %498 : vector<8x32xf32>
    %500 = vector.extract_strided_slice %493 {offsets = [0, 32], sizes = [8, 32], strides = [1, 1]} : vector<8x128xf32> to vector<8x32xf32>
    %501 = arith.negf %500 : vector<8x32xf32>
    %502 = math.exp %501 : vector<8x32xf32>
    %cst_154 = arith.constant 1.000000e+00 : f32
    %503 = vector.broadcast %cst_154 : f32 to vector<8x32xf32>
    %504 = arith.addf %503, %502 : vector<8x32xf32>
    %505 = arith.divf %503, %504 : vector<8x32xf32>
    %506 = vector.extract_strided_slice %493 {offsets = [0, 64], sizes = [8, 32], strides = [1, 1]} : vector<8x128xf32> to vector<8x32xf32>
    %507 = math.tanh %506 : vector<8x32xf32>
    %508 = vector.extract_strided_slice %493 {offsets = [0, 96], sizes = [8, 32], strides = [1, 1]} : vector<8x128xf32> to vector<8x32xf32>
    %509 = arith.negf %508 : vector<8x32xf32>
    %510 = math.exp %509 : vector<8x32xf32>
    %cst_155 = arith.constant 1.000000e+00 : f32
    %511 = vector.broadcast %cst_155 : f32 to vector<8x32xf32>
    %512 = arith.addf %511, %510 : vector<8x32xf32>
    %513 = arith.divf %511, %512 : vector<8x32xf32>
    %514 = arith.mulf %505, %486 : vector<8x32xf32>
    %515 = arith.mulf %499, %507 : vector<8x32xf32>
    %516 = arith.addf %514, %515 : vector<8x32xf32>
    %517 = math.tanh %516 : vector<8x32xf32>
    %518 = arith.mulf %513, %517 : vector<8x32xf32>
    %c7_i32_156 = arith.constant 7 : i32
    %519 = arith.index_cast %c7_i32_156 : i32 to index
    %c0_157 = arith.constant 0 : index
    %c0_158 = arith.constant 0 : index
    %520 = vector.load %arg12[%519, %c0_157, %c0_158] : memref<8x8x128xf32, #tpu.memory_space<vmem>>, vector<1x8x128xf32>
    %521 = vector.shape_cast %520 : vector<1x8x128xf32> to vector<8x128xf32>
    %cst_159 = arith.constant dense<0.000000e+00> : vector<8x128xf32>
    %522 = tpu.matmul %518, %296, %cst_159 {dimension_numbers = #tpu.dot_dimension_numbers<[1], [0], [0], [1], [0, 0, 1, 1], [], []>} : vector<8x32xf32>, vector<32x128xf32>, vector<8x128xf32> -> vector<8x128xf32>
    %523 = arith.addf %521, %522 : vector<8x128xf32>
    %524 = vector.extract_strided_slice %523 {offsets = [0, 0], sizes = [8, 32], strides = [1, 1]} : vector<8x128xf32> to vector<8x32xf32>
    %525 = arith.negf %524 : vector<8x32xf32>
    %526 = math.exp %525 : vector<8x32xf32>
    %cst_160 = arith.constant 1.000000e+00 : f32
    %527 = vector.broadcast %cst_160 : f32 to vector<8x32xf32>
    %528 = arith.addf %527, %526 : vector<8x32xf32>
    %529 = arith.divf %527, %528 : vector<8x32xf32>
    %530 = vector.extract_strided_slice %523 {offsets = [0, 32], sizes = [8, 32], strides = [1, 1]} : vector<8x128xf32> to vector<8x32xf32>
    %531 = arith.negf %530 : vector<8x32xf32>
    %532 = math.exp %531 : vector<8x32xf32>
    %cst_161 = arith.constant 1.000000e+00 : f32
    %533 = vector.broadcast %cst_161 : f32 to vector<8x32xf32>
    %534 = arith.addf %533, %532 : vector<8x32xf32>
    %535 = arith.divf %533, %534 : vector<8x32xf32>
    %536 = vector.extract_strided_slice %523 {offsets = [0, 64], sizes = [8, 32], strides = [1, 1]} : vector<8x128xf32> to vector<8x32xf32>
    %537 = math.tanh %536 : vector<8x32xf32>
    %538 = vector.extract_strided_slice %523 {offsets = [0, 96], sizes = [8, 32], strides = [1, 1]} : vector<8x128xf32> to vector<8x32xf32>
    %539 = arith.negf %538 : vector<8x32xf32>
    %540 = math.exp %539 : vector<8x32xf32>
    %cst_162 = arith.constant 1.000000e+00 : f32
    %541 = vector.broadcast %cst_162 : f32 to vector<8x32xf32>
    %542 = arith.addf %541, %540 : vector<8x32xf32>
    %543 = arith.divf %541, %542 : vector<8x32xf32>
    %544 = arith.mulf %535, %516 : vector<8x32xf32>
    %545 = arith.mulf %529, %537 : vector<8x32xf32>
    %546 = arith.addf %544, %545 : vector<8x32xf32>
    %547 = math.tanh %546 : vector<8x32xf32>
    %548 = arith.mulf %543, %547 : vector<8x32xf32>
    %c8_i32_163 = arith.constant 8 : i32
    %c1_164 = arith.constant 1 : index
    %c0_165 = arith.constant 0 : index
    %c0_166 = arith.constant 0 : index
    %549 = vector.load %arg14[%c1_164, %c0_165, %c0_166] : memref<2x8x32xf32, #tpu.memory_space<vmem>>, vector<1x8x32xf32>
    %550 = vector.shape_cast %549 : vector<1x8x32xf32> to vector<8x32xf32>
    %551 = vector.shape_cast %548 : vector<8x32xf32> to vector<1x8x32xf32>
    tpu.vector_store %arg14[%c1_164, %c0_165, %c0_166], %551 {strides = array<i32>} : memref<2x8x32xf32, #tpu.memory_space<vmem>>, vector<1x8x32xf32>,
    %c1_167 = arith.constant 1 : index
    %c0_168 = arith.constant 0 : index
    %c0_169 = arith.constant 0 : index
    %552 = vector.load %arg15[%c1_167, %c0_168, %c0_169] : memref<2x8x32xf32, #tpu.memory_space<vmem>>, vector<1x8x32xf32>
    %553 = vector.shape_cast %552 : vector<1x8x32xf32> to vector<8x32xf32>
    %554 = vector.shape_cast %546 : vector<8x32xf32> to vector<1x8x32xf32>
    tpu.vector_store %arg15[%c1_167, %c0_168, %c0_169], %554 {strides = array<i32>} : memref<2x8x32xf32, #tpu.memory_space<vmem>>, vector<1x8x32xf32>,
    %c0_i32_170 = arith.constant 0 : i32
    %555 = arith.cmpi eq, %arg1, %c0_i32_170 : i32
    %556 = arith.extui %555 : i1 to i32
    %c0_i32_171 = arith.constant 0 : i32
    %557 = arith.cmpi ne, %556, %c0_i32_171 : i32
    scf.if %557 {
      %c1_172 = arith.constant 1 : index
      %c0_173 = arith.constant 0 : index
      %c0_174 = arith.constant 0 : index
      %558 = vector.load %arg14[%c1_172, %c0_173, %c0_174] : memref<2x8x32xf32, #tpu.memory_space<vmem>>, vector<1x8x32xf32>
      %559 = vector.shape_cast %558 : vector<1x8x32xf32> to vector<8x32xf32>
      %c0_175 = arith.constant 0 : index
      %c0_176 = arith.constant 0 : index
      %560 = vector.load %arg9[%c0_175, %c0_176] : memref<32x128xf32, #tpu.memory_space<vmem>>, vector<32x128xf32>
      %cst_177 = arith.constant dense<0.000000e+00> : vector<8x128xf32>
      %561 = tpu.matmul %559, %560, %cst_177 {dimension_numbers = #tpu.dot_dimension_numbers<[1], [0], [0], [1], [0, 0, 1, 1], [], []>} : vector<8x32xf32>, vector<32x128xf32>, vector<8x128xf32> -> vector<8x128xf32>
      %c0_178 = arith.constant 0 : index
      %c0_179 = arith.constant 0 : index
      %562 = vector.load %arg10[%c0_178, %c0_179] : memref<1x128xf32, #tpu.memory_space<vmem>>, vector<1x128xf32>
      %563 = vector.broadcast %562 : vector<1x128xf32> to vector<8x128xf32>
      %564 = arith.addf %561, %563 : vector<8x128xf32>
      %c0_180 = arith.constant 0 : index
      %c0_181 = arith.constant 0 : index
      %565 = vector.load %arg11[%c0_180, %c0_181] : memref<8x128xf32, #tpu.memory_space<vmem>>, vector<8x128xf32>
      tpu.vector_store %arg11[%c0_180, %c0_181], %564 {strides = array<i32>} : memref<8x128xf32, #tpu.memory_space<vmem>>, vector<8x128xf32>,
    } else {
    }
    return
  }
  func.func @transform_0(%arg0: i32, %arg1: i32) -> (i32, i32, i32) {
    %c0_i32 = arith.constant 0 : i32
    %c0_i32_0 = arith.constant 0 : i32
    return %arg1, %arg0, %c0_i32 : i32, i32, i32
  }
  func.func @transform_1(%arg0: i32, %arg1: i32) -> (i32, i32) {
    %c0_i32 = arith.constant 0 : i32
    %c0_i32_0 = arith.constant 0 : i32
    %c0_i32_1 = arith.constant 0 : i32
    return %c0_i32, %c0_i32_0 : i32, i32
  }
  func.func @transform_2(%arg0: i32, %arg1: i32) -> (i32, i32) {
    %c0_i32 = arith.constant 0 : i32
    %c0_i32_0 = arith.constant 0 : i32
    %c0_i32_1 = arith.constant 0 : i32
    return %c0_i32, %c0_i32_0 : i32, i32
  }
  func.func @transform_3(%arg0: i32, %arg1: i32) -> (i32, i32) {
    %c0_i32 = arith.constant 0 : i32
    %c0_i32_0 = arith.constant 0 : i32
    %c0_i32_1 = arith.constant 0 : i32
    return %c0_i32, %c0_i32_0 : i32, i32
  }
  func.func @transform_4(%arg0: i32, %arg1: i32) -> (i32, i32) {
    %c0_i32 = arith.constant 0 : i32
    %c0_i32_0 = arith.constant 0 : i32
    %c0_i32_1 = arith.constant 0 : i32
    return %c0_i32, %c0_i32_0 : i32, i32
  }
  func.func @transform_5(%arg0: i32, %arg1: i32) -> (i32, i32) {
    %c0_i32 = arith.constant 0 : i32
    %c0_i32_0 = arith.constant 0 : i32
    %c0_i32_1 = arith.constant 0 : i32
    return %c0_i32, %c0_i32_0 : i32, i32
  }
  func.func @transform_6(%arg0: i32, %arg1: i32) -> (i32, i32) {
    %c0_i32 = arith.constant 0 : i32
    %c0_i32_0 = arith.constant 0 : i32
    %c0_i32_1 = arith.constant 0 : i32
    return %c0_i32, %c0_i32_0 : i32, i32
  }
  func.func @transform_7(%arg0: i32, %arg1: i32) -> (i32, i32) {
    %c0_i32 = arith.constant 0 : i32
    %c0_i32_0 = arith.constant 0 : i32
    %c0_i32_1 = arith.constant 0 : i32
    return %c0_i32, %c0_i32_0 : i32, i32
  }
  func.func @transform_8(%arg0: i32, %arg1: i32) -> (i32, i32) {
    %c0_i32 = arith.constant 0 : i32
    %c0_i32_0 = arith.constant 0 : i32
    %c0_i32_1 = arith.constant 0 : i32
    return %c0_i32, %c0_i32_0 : i32, i32
  }
  func.func @transform_9(%arg0: i32, %arg1: i32) -> (i32, i32) {
    %c0_i32 = arith.constant 0 : i32
    %c0_i32_0 = arith.constant 0 : i32
    return %arg0, %c0_i32 : i32, i32
  }
}

</mosaic_0001>

<llo_original>
// kernel: multi_step_lstm_forward.1
$region0: #{multi_step_lstm_forward.1}
  #allocation0 [shape = 'u32[]', space=smem, size = 0x4, offset = 0x4, fixed_abs, tag = 'smem constant byte address 0x4 - core index']
  #allocation1 [shape = 'u32[72,128]{1,0:T(1,128)}', space=vmem, size = 0x9000, scoped, tag = 'internal scratch']
  #allocation2 [shape = 'f32[8,8,128]{2,1,0:T(8,128)}', space=vmem, size = 0x8000, scoped, tag = 'scratch operand']
  #allocation3 [shape = 'f32[8,8,32]{2,1,0:T(8,128)}', space=vmem, size = 0x8000, scoped, tag = 'scratch operand']
  #allocation4 [shape = 'f32[2,8,32]{2,1,0:T(8,128)}', space=vmem, size = 0x2000, scoped, tag = 'scratch operand']
  #allocation5 [shape = 'f32[2,8,32]{2,1,0:T(8,128)}', space=vmem, size = 0x2000, scoped, tag = 'scratch operand']
  %s0 = inlined_call_operand.vmem [shape: f32[8,8,16], index: 0, kind: input, shape index: {}]
  %s1 = inlined_call_operand.vmem [shape: f32[16,128], index: 1, kind: input, shape index: {}]
  %s2 = inlined_call_operand.vmem [shape: f32[32,128], index: 2, kind: input, shape index: {}]
  %s3 = inlined_call_operand.vmem [shape: f32[1,128], index: 3, kind: input, shape index: {}]
  %s4 = inlined_call_operand.vmem [shape: f32[32,128], index: 4, kind: input, shape index: {}]
  %s5 = inlined_call_operand.vmem [shape: f32[32,128], index: 5, kind: input, shape index: {}]
  %s6 = inlined_call_operand.vmem [shape: f32[1,128], index: 6, kind: input, shape index: {}]
  %s7 = inlined_call_operand.vmem [shape: f32[32,128], index: 7, kind: input, shape index: {}]
  %s8 = inlined_call_operand.vmem [shape: f32[1,128], index: 8, kind: input, shape index: {}]
  %s9 = inlined_call_operand.vmem [shape: f32[8,128], index: 9, kind: output, shape index: {}]
  %s10 = sld [smem:[#allocation0]]
  $region54: #{multi_step_lstm_forward.1} parent=0
    _
  %s12 = ssub.s32 1, %s10
  %s13 = scalar_select 0, %s12, %s10
  // Predicated region
  $region2: #{multi_step_lstm_forward.1} parent=0 // pred_check
    _
  $region3: #{multi_step_lstm_forward.1} parent=0 // pred_check_branch
    %15 = sbr.rel (0) target = $region5
  $region4: #{multi_step_lstm_forward.1} parent=0 // pred_region
    _
  $region5: #{multi_step_lstm_forward.1} parent=0 // pred_fallthru
    _
  // Predicated region
  $region6: #{multi_step_lstm_forward.1} parent=0 // pred_check
    _
  $region7: #{multi_step_lstm_forward.1} parent=0 // pred_check_branch
    %17 = sbr.rel (0) target = $region9
  $region8: #{multi_step_lstm_forward.1} parent=0 // pred_region
    _
  $region9: #{multi_step_lstm_forward.1} parent=0 // pred_fallthru
    _
  // Predicated region
  $region10: #{multi_step_lstm_forward.1} parent=0 // pred_check
    _
  $region11: #{multi_step_lstm_forward.1} parent=0 // pred_check_branch
    %19 = sbr.rel (0) target = $region13
  $region12: #{multi_step_lstm_forward.1} parent=0 // pred_region
    _
  $region13: #{multi_step_lstm_forward.1} parent=0 // pred_fallthru
    _
  // Predicated region
  $region14: #{multi_step_lstm_forward.1} parent=0 // pred_check
    _
  $region15: #{multi_step_lstm_forward.1} parent=0 // pred_check_branch
    %21 = sbr.rel (0) target = $region17
  $region16: #{multi_step_lstm_forward.1} parent=0 // pred_region
    _
  $region17: #{multi_step_lstm_forward.1} parent=0 // pred_fallthru
    _
  // Predicated region
  $region18: #{multi_step_lstm_forward.1} parent=0 // pred_check
    _
  $region19: #{multi_step_lstm_forward.1} parent=0 // pred_check_branch
    %23 = sbr.rel (0) target = $region21
  $region20: #{multi_step_lstm_forward.1} parent=0 // pred_region
    _
  $region21: #{multi_step_lstm_forward.1} parent=0 // pred_fallthru
    _
  // Predicated region
  $region22: #{multi_step_lstm_forward.1} parent=0 // pred_check
    _
  $region23: #{multi_step_lstm_forward.1} parent=0 // pred_check_branch
    %25 = sbr.rel (0) target = $region25
  $region24: #{multi_step_lstm_forward.1} parent=0 // pred_region
    _
  $region25: #{multi_step_lstm_forward.1} parent=0 // pred_fallthru
    _
  // Predicated region
  $region26: #{multi_step_lstm_forward.1} parent=0 // pred_check
    _
  $region27: #{multi_step_lstm_forward.1} parent=0 // pred_check_branch
    %27 = sbr.rel (0) target = $region29
  $region28: #{multi_step_lstm_forward.1} parent=0 // pred_region
    _
  $region29: #{multi_step_lstm_forward.1} parent=0 // pred_fallthru
    _
  // Predicated region
  $region30: #{multi_step_lstm_forward.1} parent=0 // pred_check
    _
  $region31: #{multi_step_lstm_forward.1} parent=0 // pred_check_branch
    %29 = sbr.rel (0) target = $region33
  $region32: #{multi_step_lstm_forward.1} parent=0 // pred_region
    _
  $region33: #{multi_step_lstm_forward.1} parent=0 // pred_fallthru
    _
  // Predicated region
  $region34: #{multi_step_lstm_forward.1} parent=0 // pred_check
    _
  $region35: #{multi_step_lstm_forward.1} parent=0 // pred_check_branch
    %31 = sbr.rel (0) target = $region37
  $region36: #{multi_step_lstm_forward.1} parent=0 // pred_region
    _
  $region37: #{multi_step_lstm_forward.1} parent=0 // pred_fallthru
    _
  %p32 = scmp.eq.s32.totalorder 0, 0
  // Predicated region
  $region38: #{multi_step_lstm_forward.1} parent=0 // pred_check
    %p33 = pneg %p32
  $region39: #{multi_step_lstm_forward.1} parent=0 // pred_check_branch
    %35 = sbr.rel (%p33) target = $region41
  $region40: #{multi_step_lstm_forward.1} parent=0 // pred_region
    %vm36 = vcmask 261120
    %37 = vst.msk [vmem:[#allocation4] sm:$0xff] %vm36, 0.0
    %38 = vst.msk [vmem:[#allocation4 + $0x8] sm:$0xff] %vm36, 0.0
    %39 = vst.msk [vmem:[#allocation5] sm:$0xff] %vm36, 0.0
    %40 = vst.msk [vmem:[#allocation5 + $0x8] sm:$0xff] %vm36, 0.0
  $region41: #{multi_step_lstm_forward.1} parent=0 // pred_fallthru
    _
  %v41 = vld [vmem:[%s1] sm:$0xff]
  %v42 = vld [vmem:[%s1 + $0x8] sm:$0xff]
  %v43 = vld [vmem:[%s2] sm:$0xff]
  %v44 = vld [vmem:[%s2 + $0x8] sm:$0xff]
  %v45 = vld [vmem:[%s2 + $0x10] sm:$0xff]
  %v46 = vld [vmem:[%s2 + $0x18] sm:$0xff]
  %v47 = vld [vmem:[%s3] sm:$0x1]
  %v48 = vld [vmem:[%s0] sm:$0xff]
  %v49 = vld [vmem:[%s0 + $0x8] sm:$0xff]
  %v50 = vld [vmem:[%s0 + $0x10] sm:$0xff]
  %v51 = vld [vmem:[%s0 + $0x18] sm:$0xff]
  %v52 = vld [vmem:[%s0 + $0x20] sm:$0xff]
  %v53 = vld [vmem:[%s0 + $0x28] sm:$0xff]
  %v54 = vld [vmem:[%s0 + $0x30] sm:$0xff]
  %v55 = vld [vmem:[%s0 + $0x38] sm:$0xff]
  %v57 = vperm.slane %v47, 0
  %vm59 = vcmask 130048
  %v61 = vsel %vm59, %v48, 0
  %v64 = vsel %vm59, %v49, 0
  %v67 = vsel %vm59, %v50, 0
  %v70 = vsel %vm59, %v51, 0
  %v73 = vsel %vm59, %v52, 0
  %v76 = vsel %vm59, %v53, 0
  %v79 = vsel %vm59, %v54, 0
  %v82 = vsel %vm59, %v55, 0
  %84 = vmatpush.msra.mxu0 0.0
  %85 = vmatpush.msra.mxu0 0.0
  %86 = vmatpush.msra.mxu0 0.0
  %87 = vmatpush.msra.mxu0 0.0
  %88 = vmatpush.msra.mxu0 0.0
  %89 = vmatpush.msra.mxu0 0.0
  %90 = vmatpush.msra.mxu0 0.0
  %91 = vmatpush.msra.mxu0 0.0
  %92 = vmatpush.msra.mxu0 0.0
  %93 = vmatpush.msra.mxu0 0.0
  %94 = vmatpush.msra.mxu0 0.0
  %95 = vmatpush.msra.mxu0 0.0
  %96 = vmatpush.msra.mxu0 0.0
  %97 = vmatpush.msra.mxu0 0.0
  %98 = vmatpush.msra.mxu0 %v42
  %99 = vmatpush.msra.mxu0 %v41
  %100 = vmatmul.f32.gmra.mxu0 %v61
  %v101 = vpop.f32.mrf.mxu0
  %v102 = vadd.f32 %v57, %v101
  %103 = vmatmul.f32.gmra.mxu0 %v64
  %v104 = vpop.f32.mrf.mxu0
  %v105 = vadd.f32 %v57, %v104
  %106 = vmatmul.f32.gmra.mxu0 %v67
  %v107 = vpop.f32.mrf.mxu0
  %v108 = vadd.f32 %v57, %v107
  %109 = vmatmul.f32.gmra.mxu0 %v70
  %v110 = vpop.f32.mrf.mxu0
  %v111 = vadd.f32 %v57, %v110
  %112 = vmatmul.f32.gmra.mxu0 %v73
  %v113 = vpop.f32.mrf.mxu0
  %v114 = vadd.f32 %v57, %v113
  %115 = vmatmul.f32.gmra.mxu0 %v76
  %v116 = vpop.f32.mrf.mxu0
  %v117 = vadd.f32 %v57, %v116
  %118 = vmatmul.f32.gmra.mxu0 %v79
  %v119 = vpop.f32.mrf.mxu0
  %v120 = vadd.f32 %v57, %v119
  %121 = vmatmul.f32.gmra.mxu0 %v82
  %v122 = vpop.f32.mrf.mxu0
  %v123 = vadd.f32 %v57, %v122
  %124 = vdwg.mxu0
  %125 = vst [vmem:[#allocation2] sm:$0xff] %v102
  %126 = vst [vmem:[#allocation2 + $0x8] sm:$0xff] %v105
  %127 = vst [vmem:[#allocation2 + $0x10] sm:$0xff] %v108
  %128 = vst [vmem:[#allocation2 + $0x18] sm:$0xff] %v111
  %129 = vst [vmem:[#allocation2 + $0x20] sm:$0xff] %v114
  %130 = vst [vmem:[#allocation2 + $0x28] sm:$0xff] %v117
  %131 = vst [vmem:[#allocation2 + $0x30] sm:$0xff] %v120
  %132 = vst [vmem:[#allocation2 + $0x38] sm:$0xff] %v123
  %v133 = vld [vmem:[#allocation4] sm:$0xff]
  %v134 = vld [vmem:[#allocation5] sm:$0xff]
  %v135 = vld [vmem:[#allocation2] sm:$0xff]
  %vm136 = vcmask 261120
  %v138 = vsel %vm136, %v133, 0
  %140 = vmatpush.msra.mxu0 0.0
  %141 = vmatpush.msra.mxu0 0.0
  %142 = vmatpush.msra.mxu0 0.0
  %143 = vmatpush.msra.mxu0 0.0
  %144 = vmatpush.msra.mxu0 0.0
  %145 = vmatpush.msra.mxu0 0.0
  %146 = vmatpush.msra.mxu0 0.0
  %147 = vmatpush.msra.mxu0 0.0
  %148 = vmatpush.msra.mxu0 0.0
  %149 = vmatpush.msra.mxu0 0.0
  %150 = vmatpush.msra.mxu0 0.0
  %151 = vmatpush.msra.mxu0 0.0
  %152 = vmatpush.msra.mxu0 %v46
  %153 = vmatpush.msra.mxu0 %v45
  %154 = vmatpush.msra.mxu0 %v44
  %155 = vmatpush.msra.mxu0 %v43
  %156 = vmatmul.f32.gmra.mxu0 %v138
  %v157 = vpop.f32.mrf.mxu0
  %v158 = vadd.f32 0.0, %v157
  %159 = vdwg.mxu0
  %v160 = vadd.f32 %v135, %v158
  %v161 = vxor.u32 %v160, 2147483648
  %v162 = vmul.f32 %v161, 1.442695
  %v163 = vpow.pop %v162
  %v164 = vadd.f32 %v163, 1.0
  %v165 = vrcp.pop %v164
  %v166 = vmul.f32 %v164, %v165
  %v167 = vsub.f32 1.0, %v166
  %v168 = vmul.f32 %v165, %v167
  %v169 = vadd.f32 %v165, %v168
  %vm170 = vweird.f32 %v164
  %vm171 = vweird.f32 %v165
  %vm172 = vmor %vm170, %vm171
  %v173 = vsel %vm172, %v165, %v169
  %v174 = vand.u32 2147483647, %v164
  %vm175 = vcmp.eq.f32.partialorder %v174, 8.507059e+37
  %v176 = vand.u32 %v164, 2147483648
  %v177 = vor.u32 1.1754944e-38, %v176
  %v178 = vsel %vm175, %v177, %v173
  %v179 = vmul.f32 1.0, %v178
  %v180 = vtanh.pop %v160
  %182 = vrot.lane.b32.xlu0 %v134, 32
  %v183 = vpop.permute.xlu0 %182
  %v185 = vmul.f32 %v179, %v183
  %187 = vrot.lane.b32.xlu0 %v180, 64
  %v188 = vpop.permute.xlu0 %187
  %v190 = vmul.f32 %v179, %v188
  %192 = vrot.lane.b32.xlu0 %v190, 32
  %v193 = vpop.permute.xlu0 %192
  %v195 = vadd.f32 %v185, %v193
  %v196 = vtanh.pop %v195
  %198 = vrot.lane.b32.xlu0 %v196, 64
  %v199 = vpop.permute.xlu0 %198
  %v201 = vmul.f32 %v179, %v199
  %203 = vrot.lane.b32.xlu0 %v201, 32
  %v204 = vpop.permute.xlu0 %203
  %206 = vst.msk [vmem:[#allocation3] sm:$0xff] %vm136, %v204
  %s207 = scalar_lea.vmem [#allocation2], 8
  %v208 = vld [vmem:[%s207] sm:$0xff]
  %v209 = vsel %vm136, %v204, 0
  %211 = vmatpush.msra.mxu0 0.0
  %212 = vmatpush.msra.mxu0 0.0
  %213 = vmatpush.msra.mxu0 0.0
  %214 = vmatpush.msra.mxu0 0.0
  %215 = vmatpush.msra.mxu0 0.0
  %216 = vmatpush.msra.mxu0 0.0
  %217 = vmatpush.msra.mxu0 0.0
  %218 = vmatpush.msra.mxu0 0.0
  %219 = vmatpush.msra.mxu0 0.0
  %220 = vmatpush.msra.mxu0 0.0
  %221 = vmatpush.msra.mxu0 0.0
  %222 = vmatpush.msra.mxu0 0.0
  %223 = vmatpush.msra.mxu0 %v46
  %224 = vmatpush.msra.mxu0 %v45
  %225 = vmatpush.msra.mxu0 %v44
  %226 = vmatpush.msra.mxu0 %v43
  %227 = vmatmul.f32.gmra.mxu0 %v209
  %v228 = vpop.f32.mrf.mxu0
  %v229 = vadd.f32 0.0, %v228
  %230 = vdwg.mxu0
  %v231 = vadd.f32 %v208, %v229
  %v232 = vxor.u32 %v231, 2147483648
  %v233 = vmul.f32 %v232, 1.442695
  %v234 = vpow.pop %v233
  %v235 = vadd.f32 %v234, 1.0
  %v236 = vrcp.pop %v235
  %v237 = vmul.f32 %v235, %v236
  %v238 = vsub.f32 1.0, %v237
  %v239 = vmul.f32 %v236, %v238
  %v240 = vadd.f32 %v236, %v239
  %vm241 = vweird.f32 %v235
  %vm242 = vweird.f32 %v236
  %vm243 = vmor %vm241, %vm242
  %v244 = vsel %vm243, %v236, %v240
  %v245 = vand.u32 2147483647, %v235
  %vm246 = vcmp.eq.f32.partialorder %v245, 8.507059e+37
  %v247 = vand.u32 %v235, 2147483648
  %v248 = vor.u32 1.1754944e-38, %v247
  %v249 = vsel %vm246, %v248, %v244
  %v250 = vmul.f32 1.0, %v249
  %v251 = vtanh.pop %v231
  %v252 = vmul.f32 %v250, %v195
  %254 = vrot.lane.b32.xlu0 %v251, 64
  %v255 = vpop.permute.xlu0 %254
  %v257 = vmul.f32 %v250, %v255
  %259 = vrot.lane.b32.xlu0 %v257, 32
  %v260 = vpop.permute.xlu0 %259
  %v262 = vadd.f32 %v252, %v260
  %v263 = vtanh.pop %v262
  %265 = vrot.lane.b32.xlu0 %v263, 64
  %v266 = vpop.permute.xlu0 %265
  %v268 = vmul.f32 %v250, %v266
  %270 = vrot.lane.b32.xlu0 %v268, 32
  %v271 = vpop.permute.xlu0 %270
  %s273 = scalar_lea.vmem [#allocation3], 8
  %274 = vst.msk [vmem:[%s273] sm:$0xff] %vm136, %v271
  %s275 = scalar_lea.vmem [#allocation2], 16
  %v276 = vld [vmem:[%s275] sm:$0xff]
  %v277 = vsel %vm136, %v271, 0
  %279 = vmatpush.msra.mxu0 0.0
  %280 = vmatpush.msra.mxu0 0.0
  %281 = vmatpush.msra.mxu0 0.0
  %282 = vmatpush.msra.mxu0 0.0
  %283 = vmatpush.msra.mxu0 0.0
  %284 = vmatpush.msra.mxu0 0.0
  %285 = vmatpush.msra.mxu0 0.0
  %286 = vmatpush.msra.mxu0 0.0
  %287 = vmatpush.msra.mxu0 0.0
  %288 = vmatpush.msra.mxu0 0.0
  %289 = vmatpush.msra.mxu0 0.0
  %290 = vmatpush.msra.mxu0 0.0
  %291 = vmatpush.msra.mxu0 %v46
  %292 = vmatpush.msra.mxu0 %v45
  %293 = vmatpush.msra.mxu0 %v44
  %294 = vmatpush.msra.mxu0 %v43
  %295 = vmatmul.f32.gmra.mxu0 %v277
  %v296 = vpop.f32.mrf.mxu0
  %v297 = vadd.f32 0.0, %v296
  %298 = vdwg.mxu0
  %v299 = vadd.f32 %v276, %v297
  %v300 = vxor.u32 %v299, 2147483648
  %v301 = vmul.f32 %v300, 1.442695
  %v302 = vpow.pop %v301
  %v303 = vadd.f32 %v302, 1.0
  %v304 = vrcp.pop %v303
  %v305 = vmul.f32 %v303, %v304
  %v306 = vsub.f32 1.0, %v305
  %v307 = vmul.f32 %v304, %v306
  %v308 = vadd.f32 %v304, %v307
  %vm309 = vweird.f32 %v303
  %vm310 = vweird.f32 %v304
  %vm311 = vmor %vm309, %vm310
  %v312 = vsel %vm311, %v304, %v308
  %v313 = vand.u32 2147483647, %v303
  %vm314 = vcmp.eq.f32.partialorder %v313, 8.507059e+37
  %v315 = vand.u32 %v303, 2147483648
  %v316 = vor.u32 1.1754944e-38, %v315
  %v317 = vsel %vm314, %v316, %v312
  %v318 = vmul.f32 1.0, %v317
  %v319 = vtanh.pop %v299
  %v320 = vmul.f32 %v318, %v262
  %322 = vrot.lane.b32.xlu0 %v319, 64
  %v323 = vpop.permute.xlu0 %322
  %v325 = vmul.f32 %v318, %v323
  %327 = vrot.lane.b32.xlu0 %v325, 32
  %v328 = vpop.permute.xlu0 %327
  %v330 = vadd.f32 %v320, %v328
  %v331 = vtanh.pop %v330
  %333 = vrot.lane.b32.xlu0 %v331, 64
  %v334 = vpop.permute.xlu0 %333
  %v336 = vmul.f32 %v318, %v334
  %338 = vrot.lane.b32.xlu0 %v336, 32
  %v339 = vpop.permute.xlu0 %338
  %s341 = scalar_lea.vmem [#allocation3], 16
  %342 = vst.msk [vmem:[%s341] sm:$0xff] %vm136, %v339
  %s343 = scalar_lea.vmem [#allocation2], 24
  %v344 = vld [vmem:[%s343] sm:$0xff]
  %v345 = vsel %vm136, %v339, 0
  %347 = vmatpush.msra.mxu0 0.0
  %348 = vmatpush.msra.mxu0 0.0
  %349 = vmatpush.msra.mxu0 0.0
  %350 = vmatpush.msra.mxu0 0.0
  %351 = vmatpush.msra.mxu0 0.0
  %352 = vmatpush.msra.mxu0 0.0
  %353 = vmatpush.msra.mxu0 0.0
  %354 = vmatpush.msra.mxu0 0.0
  %355 = vmatpush.msra.mxu0 0.0
  %356 = vmatpush.msra.mxu0 0.0
  %357 = vmatpush.msra.mxu0 0.0
  %358 = vmatpush.msra.mxu0 0.0
  %359 = vmatpush.msra.mxu0 %v46
  %360 = vmatpush.msra.mxu0 %v45
  %361 = vmatpush.msra.mxu0 %v44
  %362 = vmatpush.msra.mxu0 %v43
  %363 = vmatmul.f32.gmra.mxu0 %v345
  %v364 = vpop.f32.mrf.mxu0
  %v365 = vadd.f32 0.0, %v364
  %366 = vdwg.mxu0
  %v367 = vadd.f32 %v344, %v365
  %v368 = vxor.u32 %v367, 2147483648
  %v369 = vmul.f32 %v368, 1.442695
  %v370 = vpow.pop %v369
  %v371 = vadd.f32 %v370, 1.0
  %v372 = vrcp.pop %v371
  %v373 = vmul.f32 %v371, %v372
  %v374 = vsub.f32 1.0, %v373
  %v375 = vmul.f32 %v372, %v374
  %v376 = vadd.f32 %v372, %v375
  %vm377 = vweird.f32 %v371
  %vm378 = vweird.f32 %v372
  %vm379 = vmor %vm377, %vm378
  %v380 = vsel %vm379, %v372, %v376
  %v381 = vand.u32 2147483647, %v371
  %vm382 = vcmp.eq.f32.partialorder %v381, 8.507059e+37
  %v383 = vand.u32 %v371, 2147483648
  %v384 = vor.u32 1.1754944e-38, %v383
  %v385 = vsel %vm382, %v384, %v380
  %v386 = vmul.f32 1.0, %v385
  %v387 = vtanh.pop %v367
  %v388 = vmul.f32 %v386, %v330
  %390 = vrot.lane.b32.xlu0 %v387, 64
  %v391 = vpop.permute.xlu0 %390
  %v393 = vmul.f32 %v386, %v391
  %395 = vrot.lane.b32.xlu0 %v393, 32
  %v396 = vpop.permute.xlu0 %395
  %v398 = vadd.f32 %v388, %v396
  %v399 = vtanh.pop %v398
  %401 = vrot.lane.b32.xlu0 %v399, 64
  %v402 = vpop.permute.xlu0 %401
  %v404 = vmul.f32 %v386, %v402
  %406 = vrot.lane.b32.xlu0 %v404, 32
  %v407 = vpop.permute.xlu0 %406
  %s409 = scalar_lea.vmem [#allocation3], 24
  %410 = vst.msk [vmem:[%s409] sm:$0xff] %vm136, %v407
  %s411 = scalar_lea.vmem [#allocation2], 32
  %v412 = vld [vmem:[%s411] sm:$0xff]
  %v413 = vsel %vm136, %v407, 0
  %415 = vmatpush.msra.mxu0 0.0
  %416 = vmatpush.msra.mxu0 0.0
  %417 = vmatpush.msra.mxu0 0.0
  %418 = vmatpush.msra.mxu0 0.0
  %419 = vmatpush.msra.mxu0 0.0
  %420 = vmatpush.msra.mxu0 0.0
  %421 = vmatpush.msra.mxu0 0.0
  %422 = vmatpush.msra.mxu0 0.0
  %423 = vmatpush.msra.mxu0 0.0
  %424 = vmatpush.msra.mxu0 0.0
  %425 = vmatpush.msra.mxu0 0.0
  %426 = vmatpush.msra.mxu0 0.0
  %427 = vmatpush.msra.mxu0 %v46
  %428 = vmatpush.msra.mxu0 %v45
  %429 = vmatpush.msra.mxu0 %v44
  %430 = vmatpush.msra.mxu0 %v43
  %431 = vmatmul.f32.gmra.mxu0 %v413
  %v432 = vpop.f32.mrf.mxu0
  %v433 = vadd.f32 0.0, %v432
  %434 = vdwg.mxu0
  %v435 = vadd.f32 %v412, %v433
  %v436 = vxor.u32 %v435, 2147483648
  %v437 = vmul.f32 %v436, 1.442695
  %v438 = vpow.pop %v437
  %v439 = vadd.f32 %v438, 1.0
  %v440 = vrcp.pop %v439
  %v441 = vmul.f32 %v439, %v440
  %v442 = vsub.f32 1.0, %v441
  %v443 = vmul.f32 %v440, %v442
  %v444 = vadd.f32 %v440, %v443
  %vm445 = vweird.f32 %v439
  %vm446 = vweird.f32 %v440
  %vm447 = vmor %vm445, %vm446
  %v448 = vsel %vm447, %v440, %v444
  %v449 = vand.u32 2147483647, %v439
  %vm450 = vcmp.eq.f32.partialorder %v449, 8.507059e+37
  %v451 = vand.u32 %v439, 2147483648
  %v452 = vor.u32 1.1754944e-38, %v451
  %v453 = vsel %vm450, %v452, %v448
  %v454 = vmul.f32 1.0, %v453
  %v455 = vtanh.pop %v435
  %v456 = vmul.f32 %v454, %v398
  %458 = vrot.lane.b32.xlu0 %v455, 64
  %v459 = vpop.permute.xlu0 %458
  %v461 = vmul.f32 %v454, %v459
  %463 = vrot.lane.b32.xlu0 %v461, 32
  %v464 = vpop.permute.xlu0 %463
  %v466 = vadd.f32 %v456, %v464
  %v467 = vtanh.pop %v466
  %469 = vrot.lane.b32.xlu0 %v467, 64
  %v470 = vpop.permute.xlu0 %469
  %v472 = vmul.f32 %v454, %v470
  %474 = vrot.lane.b32.xlu0 %v472, 32
  %v475 = vpop.permute.xlu0 %474
  %s477 = scalar_lea.vmem [#allocation3], 32
  %478 = vst.msk [vmem:[%s477] sm:$0xff] %vm136, %v475
  %s479 = scalar_lea.vmem [#allocation2], 40
  %v480 = vld [vmem:[%s479] sm:$0xff]
  %v481 = vsel %vm136, %v475, 0
  %483 = vmatpush.msra.mxu0 0.0
  %484 = vmatpush.msra.mxu0 0.0
  %485 = vmatpush.msra.mxu0 0.0
  %486 = vmatpush.msra.mxu0 0.0
  %487 = vmatpush.msra.mxu0 0.0
  %488 = vmatpush.msra.mxu0 0.0
  %489 = vmatpush.msra.mxu0 0.0
  %490 = vmatpush.msra.mxu0 0.0
  %491 = vmatpush.msra.mxu0 0.0
  %492 = vmatpush.msra.mxu0 0.0
  %493 = vmatpush.msra.mxu0 0.0
  %494 = vmatpush.msra.mxu0 0.0
  %495 = vmatpush.msra.mxu0 %v46
  %496 = vmatpush.msra.mxu0 %v45
  %497 = vmatpush.msra.mxu0 %v44
  %498 = vmatpush.msra.mxu0 %v43
  %499 = vmatmul.f32.gmra.mxu0 %v481
  %v500 = vpop.f32.mrf.mxu0
  %v501 = vadd.f32 0.0, %v500
  %502 = vdwg.mxu0
  %v503 = vadd.f32 %v480, %v501
  %v504 = vxor.u32 %v503, 2147483648
  %v505 = vmul.f32 %v504, 1.442695
  %v506 = vpow.pop %v505
  %v507 = vadd.f32 %v506, 1.0
  %v508 = vrcp.pop %v507
  %v509 = vmul.f32 %v507, %v508
  %v510 = vsub.f32 1.0, %v509
  %v511 = vmul.f32 %v508, %v510
  %v512 = vadd.f32 %v508, %v511
  %vm513 = vweird.f32 %v507
  %vm514 = vweird.f32 %v508
  %vm515 = vmor %vm513, %vm514
  %v516 = vsel %vm515, %v508, %v512
  %v517 = vand.u32 2147483647, %v507
  %vm518 = vcmp.eq.f32.partialorder %v517, 8.507059e+37
  %v519 = vand.u32 %v507, 2147483648
  %v520 = vor.u32 1.1754944e-38, %v519
  %v521 = vsel %vm518, %v520, %v516
  %v522 = vmul.f32 1.0, %v521
  %v523 = vtanh.pop %v503
  %v524 = vmul.f32 %v522, %v466
  %526 = vrot.lane.b32.xlu0 %v523, 64
  %v527 = vpop.permute.xlu0 %526
  %v529 = vmul.f32 %v522, %v527
  %531 = vrot.lane.b32.xlu0 %v529, 32
  %v532 = vpop.permute.xlu0 %531
  %v534 = vadd.f32 %v524, %v532
  %v535 = vtanh.pop %v534
  %537 = vrot.lane.b32.xlu0 %v535, 64
  %v538 = vpop.permute.xlu0 %537
  %v540 = vmul.f32 %v522, %v538
  %542 = vrot.lane.b32.xlu0 %v540, 32
  %v543 = vpop.permute.xlu0 %542
  %s545 = scalar_lea.vmem [#allocation3], 40
  %546 = vst.msk [vmem:[%s545] sm:$0xff] %vm136, %v543
  %s547 = scalar_lea.vmem [#allocation2], 48
  %v548 = vld [vmem:[%s547] sm:$0xff]
  %v549 = vsel %vm136, %v543, 0
  %551 = vmatpush.msra.mxu0 0.0
  %552 = vmatpush.msra.mxu0 0.0
  %553 = vmatpush.msra.mxu0 0.0
  %554 = vmatpush.msra.mxu0 0.0
  %555 = vmatpush.msra.mxu0 0.0
  %556 = vmatpush.msra.mxu0 0.0
  %557 = vmatpush.msra.mxu0 0.0
  %558 = vmatpush.msra.mxu0 0.0
  %559 = vmatpush.msra.mxu0 0.0
  %560 = vmatpush.msra.mxu0 0.0
  %561 = vmatpush.msra.mxu0 0.0
  %562 = vmatpush.msra.mxu0 0.0
  %563 = vmatpush.msra.mxu0 %v46
  %564 = vmatpush.msra.mxu0 %v45
  %565 = vmatpush.msra.mxu0 %v44
  %566 = vmatpush.msra.mxu0 %v43
  %567 = vmatmul.f32.gmra.mxu0 %v549
  %v568 = vpop.f32.mrf.mxu0
  %v569 = vadd.f32 0.0, %v568
  %570 = vdwg.mxu0
  %v571 = vadd.f32 %v548, %v569
  %v572 = vxor.u32 %v571, 2147483648
  %v573 = vmul.f32 %v572, 1.442695
  %v574 = vpow.pop %v573
  %v575 = vadd.f32 %v574, 1.0
  %v576 = vrcp.pop %v575
  %v577 = vmul.f32 %v575, %v576
  %v578 = vsub.f32 1.0, %v577
  %v579 = vmul.f32 %v576, %v578
  %v580 = vadd.f32 %v576, %v579
  %vm581 = vweird.f32 %v575
  %vm582 = vweird.f32 %v576
  %vm583 = vmor %vm581, %vm582
  %v584 = vsel %vm583, %v576, %v580
  %v585 = vand.u32 2147483647, %v575
  %vm586 = vcmp.eq.f32.partialorder %v585, 8.507059e+37
  %v587 = vand.u32 %v575, 2147483648
  %v588 = vor.u32 1.1754944e-38, %v587
  %v589 = vsel %vm586, %v588, %v584
  %v590 = vmul.f32 1.0, %v589
  %v591 = vtanh.pop %v571
  %v592 = vmul.f32 %v590, %v534
  %594 = vrot.lane.b32.xlu0 %v591, 64
  %v595 = vpop.permute.xlu0 %594
  %v597 = vmul.f32 %v590, %v595
  %599 = vrot.lane.b32.xlu0 %v597, 32
  %v600 = vpop.permute.xlu0 %599
  %v602 = vadd.f32 %v592, %v600
  %v603 = vtanh.pop %v602
  %605 = vrot.lane.b32.xlu0 %v603, 64
  %v606 = vpop.permute.xlu0 %605
  %v608 = vmul.f32 %v590, %v606
  %610 = vrot.lane.b32.xlu0 %v608, 32
  %v611 = vpop.permute.xlu0 %610
  %s613 = scalar_lea.vmem [#allocation3], 48
  %614 = vst.msk [vmem:[%s613] sm:$0xff] %vm136, %v611
  %s615 = scalar_lea.vmem [#allocation2], 56
  %v616 = vld [vmem:[%s615] sm:$0xff]
  %v617 = vsel %vm136, %v611, 0
  %619 = vmatpush.msra.mxu0 0.0
  %620 = vmatpush.msra.mxu0 0.0
  %621 = vmatpush.msra.mxu0 0.0
  %622 = vmatpush.msra.mxu0 0.0
  %623 = vmatpush.msra.mxu0 0.0
  %624 = vmatpush.msra.mxu0 0.0
  %625 = vmatpush.msra.mxu0 0.0
  %626 = vmatpush.msra.mxu0 0.0
  %627 = vmatpush.msra.mxu0 0.0
  %628 = vmatpush.msra.mxu0 0.0
  %629 = vmatpush.msra.mxu0 0.0
  %630 = vmatpush.msra.mxu0 0.0
  %631 = vmatpush.msra.mxu0 %v46
  %632 = vmatpush.msra.mxu0 %v45
  %633 = vmatpush.msra.mxu0 %v44
  %634 = vmatpush.msra.mxu0 %v43
  %635 = vmatmul.f32.gmra.mxu0 %v617
  %v636 = vpop.f32.mrf.mxu0
  %v637 = vadd.f32 0.0, %v636
  %638 = vdwg.mxu0
  %v639 = vadd.f32 %v616, %v637
  %v640 = vxor.u32 %v639, 2147483648
  %v641 = vmul.f32 %v640, 1.442695
  %v642 = vpow.pop %v641
  %v643 = vadd.f32 %v642, 1.0
  %v644 = vrcp.pop %v643
  %v645 = vmul.f32 %v643, %v644
  %v646 = vsub.f32 1.0, %v645
  %v647 = vmul.f32 %v644, %v646
  %v648 = vadd.f32 %v644, %v647
  %vm649 = vweird.f32 %v643
  %vm650 = vweird.f32 %v644
  %vm651 = vmor %vm649, %vm650
  %v652 = vsel %vm651, %v644, %v648
  %v653 = vand.u32 2147483647, %v643
  %vm654 = vcmp.eq.f32.partialorder %v653, 8.507059e+37
  %v655 = vand.u32 %v643, 2147483648
  %v656 = vor.u32 1.1754944e-38, %v655
  %v657 = vsel %vm654, %v656, %v652
  %v658 = vmul.f32 1.0, %v657
  %v659 = vtanh.pop %v639
  %v660 = vmul.f32 %v658, %v602
  %662 = vrot.lane.b32.xlu0 %v659, 64
  %v663 = vpop.permute.xlu0 %662
  %v665 = vmul.f32 %v658, %v663
  %667 = vrot.lane.b32.xlu0 %v665, 32
  %v668 = vpop.permute.xlu0 %667
  %v670 = vadd.f32 %v660, %v668
  %v671 = vtanh.pop %v670
  %673 = vrot.lane.b32.xlu0 %v671, 64
  %v674 = vpop.permute.xlu0 %673
  %v676 = vmul.f32 %v658, %v674
  %678 = vrot.lane.b32.xlu0 %v676, 32
  %v679 = vpop.permute.xlu0 %678
  %s681 = scalar_lea.vmem [#allocation3], 56
  %682 = vst.msk [vmem:[%s681] sm:$0xff] %vm136, %v679
  %683 = vst.msk [vmem:[#allocation4] sm:$0xff] %vm136, %v679
  %685 = vrot.lane.b32.xlu0 %v670, 96
  %v686 = vpop.permute.xlu0 %685
  %688 = vst.msk [vmem:[#allocation5] sm:$0xff] %vm136, %v686
  %v689 = vld [vmem:[%s4] sm:$0xff]
  %v690 = vld [vmem:[%s4 + $0x8] sm:$0xff]
  %v691 = vld [vmem:[%s4 + $0x10] sm:$0xff]
  %v692 = vld [vmem:[%s4 + $0x18] sm:$0xff]
  %v693 = vld [vmem:[%s5] sm:$0xff]
  %v694 = vld [vmem:[%s5 + $0x8] sm:$0xff]
  %v695 = vld [vmem:[%s5 + $0x10] sm:$0xff]
  %v696 = vld [vmem:[%s5 + $0x18] sm:$0xff]
  %v697 = vld [vmem:[%s6] sm:$0x1]
  %v698 = vld [vmem:[#allocation3] sm:$0xff]
  %v699 = vld [vmem:[#allocation3 + $0x8] sm:$0xff]
  %v700 = vld [vmem:[#allocation3 + $0x10] sm:$0xff]
  %v701 = vld [vmem:[#allocation3 + $0x18] sm:$0xff]
  %v702 = vld [vmem:[#allocation3 + $0x20] sm:$0xff]
  %v703 = vld [vmem:[#allocation3 + $0x28] sm:$0xff]
  %v704 = vld [vmem:[#allocation3 + $0x30] sm:$0xff]
  %v705 = vld [vmem:[#allocation3 + $0x38] sm:$0xff]
  %v707 = vperm.slane %v697, 0
  %v710 = vsel %vm136, %v698, 0
  %v713 = vsel %vm136, %v699, 0
  %v716 = vsel %vm136, %v700, 0
  %v719 = vsel %vm136, %v701, 0
  %v722 = vsel %vm136, %v702, 0
  %v725 = vsel %vm136, %v703, 0
  %v728 = vsel %vm136, %v704, 0
  %v731 = vsel %vm136, %v705, 0
  %733 = vmatpush.msra.mxu0 0.0
  %734 = vmatpush.msra.mxu0 0.0
  %735 = vmatpush.msra.mxu0 0.0
  %736 = vmatpush.msra.mxu0 0.0
  %737 = vmatpush.msra.mxu0 0.0
  %738 = vmatpush.msra.mxu0 0.0
  %739 = vmatpush.msra.mxu0 0.0
  %740 = vmatpush.msra.mxu0 0.0
  %741 = vmatpush.msra.mxu0 0.0
  %742 = vmatpush.msra.mxu0 0.0
  %743 = vmatpush.msra.mxu0 0.0
  %744 = vmatpush.msra.mxu0 0.0
  %745 = vmatpush.msra.mxu0 %v692
  %746 = vmatpush.msra.mxu0 %v691
  %747 = vmatpush.msra.mxu0 %v690
  %748 = vmatpush.msra.mxu0 %v689
  %749 = vmatmul.f32.gmra.mxu0 %v710
  %v750 = vpop.f32.mrf.mxu0
  %v751 = vadd.f32 %v707, %v750
  %752 = vmatmul.f32.gmra.mxu0 %v713
  %v753 = vpop.f32.mrf.mxu0
  %v754 = vadd.f32 %v707, %v753
  %755 = vmatmul.f32.gmra.mxu0 %v716
  %v756 = vpop.f32.mrf.mxu0
  %v757 = vadd.f32 %v707, %v756
  %758 = vmatmul.f32.gmra.mxu0 %v719
  %v759 = vpop.f32.mrf.mxu0
  %v760 = vadd.f32 %v707, %v759
  %761 = vmatmul.f32.gmra.mxu0 %v722
  %v762 = vpop.f32.mrf.mxu0
  %v763 = vadd.f32 %v707, %v762
  %764 = vmatmul.f32.gmra.mxu0 %v725
  %v765 = vpop.f32.mrf.mxu0
  %v766 = vadd.f32 %v707, %v765
  %767 = vmatmul.f32.gmra.mxu0 %v728
  %v768 = vpop.f32.mrf.mxu0
  %v769 = vadd.f32 %v707, %v768
  %770 = vmatmul.f32.gmra.mxu0 %v731
  %v771 = vpop.f32.mrf.mxu0
  %v772 = vadd.f32 %v707, %v771
  %773 = vdwg.mxu0
  %774 = vst [vmem:[#allocation2] sm:$0xff] %v751
  %775 = vst [vmem:[#allocation2 + $0x8] sm:$0xff] %v754
  %776 = vst [vmem:[#allocation2 + $0x10] sm:$0xff] %v757
  %777 = vst [vmem:[#allocation2 + $0x18] sm:$0xff] %v760
  %778 = vst [vmem:[#allocation2 + $0x20] sm:$0xff] %v763
  %779 = vst [vmem:[#allocation2 + $0x28] sm:$0xff] %v766
  %780 = vst [vmem:[#allocation2 + $0x30] sm:$0xff] %v769
  %781 = vst [vmem:[#allocation2 + $0x38] sm:$0xff] %v772
  %s782 = scalar_lea.vmem [#allocation4], 8
  %v783 = vld [vmem:[%s782] sm:$0xff]
  %s784 = scalar_lea.vmem [#allocation5], 8
  %v785 = vld [vmem:[%s784] sm:$0xff]
  %v786 = vld [vmem:[#allocation2] sm:$0xff]
  %v788 = vsel %vm136, %v783, 0
  %790 = vmatpush.msra.mxu0 0.0
  %791 = vmatpush.msra.mxu0 0.0
  %792 = vmatpush.msra.mxu0 0.0
  %793 = vmatpush.msra.mxu0 0.0
  %794 = vmatpush.msra.mxu0 0.0
  %795 = vmatpush.msra.mxu0 0.0
  %796 = vmatpush.msra.mxu0 0.0
  %797 = vmatpush.msra.mxu0 0.0
  %798 = vmatpush.msra.mxu0 0.0
  %799 = vmatpush.msra.mxu0 0.0
  %800 = vmatpush.msra.mxu0 0.0
  %801 = vmatpush.msra.mxu0 0.0
  %802 = vmatpush.msra.mxu0 %v696
  %803 = vmatpush.msra.mxu0 %v695
  %804 = vmatpush.msra.mxu0 %v694
  %805 = vmatpush.msra.mxu0 %v693
  %806 = vmatmul.f32.gmra.mxu0 %v788
  %v807 = vpop.f32.mrf.mxu0
  %v808 = vadd.f32 0.0, %v807
  %809 = vdwg.mxu0
  %v810 = vadd.f32 %v786, %v808
  %v811 = vxor.u32 %v810, 2147483648
  %v812 = vmul.f32 %v811, 1.442695
  %v813 = vpow.pop %v812
  %v814 = vadd.f32 %v813, 1.0
  %v815 = vrcp.pop %v814
  %v816 = vmul.f32 %v814, %v815
  %v817 = vsub.f32 1.0, %v816
  %v818 = vmul.f32 %v815, %v817
  %v819 = vadd.f32 %v815, %v818
  %vm820 = vweird.f32 %v814
  %vm821 = vweird.f32 %v815
  %vm822 = vmor %vm820, %vm821
  %v823 = vsel %vm822, %v815, %v819
  %v824 = vand.u32 2147483647, %v814
  %vm825 = vcmp.eq.f32.partialorder %v824, 8.507059e+37
  %v826 = vand.u32 %v814, 2147483648
  %v827 = vor.u32 1.1754944e-38, %v826
  %v828 = vsel %vm825, %v827, %v823
  %v829 = vmul.f32 1.0, %v828
  %v830 = vtanh.pop %v810
  %832 = vrot.lane.b32.xlu0 %v785, 32
  %v833 = vpop.permute.xlu0 %832
  %v835 = vmul.f32 %v829, %v833
  %837 = vrot.lane.b32.xlu0 %v830, 64
  %v838 = vpop.permute.xlu0 %837
  %v840 = vmul.f32 %v829, %v838
  %842 = vrot.lane.b32.xlu0 %v840, 32
  %v843 = vpop.permute.xlu0 %842
  %v845 = vadd.f32 %v835, %v843
  %v846 = vtanh.pop %v845
  %848 = vrot.lane.b32.xlu0 %v846, 64
  %v849 = vpop.permute.xlu0 %848
  %v851 = vmul.f32 %v829, %v849
  %v852 = vld [vmem:[%s207] sm:$0xff]
  %854 = vrot.lane.b32.xlu0 %v851, 32
  %v855 = vpop.permute.xlu0 %854
  %v856 = vsel %vm136, %v855, 0
  %858 = vmatpush.msra.mxu0 0.0
  %859 = vmatpush.msra.mxu0 0.0
  %860 = vmatpush.msra.mxu0 0.0
  %861 = vmatpush.msra.mxu0 0.0
  %862 = vmatpush.msra.mxu0 0.0
  %863 = vmatpush.msra.mxu0 0.0
  %864 = vmatpush.msra.mxu0 0.0
  %865 = vmatpush.msra.mxu0 0.0
  %866 = vmatpush.msra.mxu0 0.0
  %867 = vmatpush.msra.mxu0 0.0
  %868 = vmatpush.msra.mxu0 0.0
  %869 = vmatpush.msra.mxu0 0.0
  %870 = vmatpush.msra.mxu0 %v696
  %871 = vmatpush.msra.mxu0 %v695
  %872 = vmatpush.msra.mxu0 %v694
  %873 = vmatpush.msra.mxu0 %v693
  %874 = vmatmul.f32.gmra.mxu0 %v856
  %v875 = vpop.f32.mrf.mxu0
  %v876 = vadd.f32 0.0, %v875
  %877 = vdwg.mxu0
  %v878 = vadd.f32 %v852, %v876
  %v879 = vxor.u32 %v878, 2147483648
  %v880 = vmul.f32 %v879, 1.442695
  %v881 = vpow.pop %v880
  %v882 = vadd.f32 %v881, 1.0
  %v883 = vrcp.pop %v882
  %v884 = vmul.f32 %v882, %v883
  %v885 = vsub.f32 1.0, %v884
  %v886 = vmul.f32 %v883, %v885
  %v887 = vadd.f32 %v883, %v886
  %vm888 = vweird.f32 %v882
  %vm889 = vweird.f32 %v883
  %vm890 = vmor %vm888, %vm889
  %v891 = vsel %vm890, %v883, %v887
  %v892 = vand.u32 2147483647, %v882
  %vm893 = vcmp.eq.f32.partialorder %v892, 8.507059e+37
  %v894 = vand.u32 %v882, 2147483648
  %v895 = vor.u32 1.1754944e-38, %v894
  %v896 = vsel %vm893, %v895, %v891
  %v897 = vmul.f32 1.0, %v896
  %v898 = vtanh.pop %v878
  %v899 = vmul.f32 %v897, %v845
  %901 = vrot.lane.b32.xlu0 %v898, 64
  %v902 = vpop.permute.xlu0 %901
  %v904 = vmul.f32 %v897, %v902
  %906 = vrot.lane.b32.xlu0 %v904, 32
  %v907 = vpop.permute.xlu0 %906
  %v909 = vadd.f32 %v899, %v907
  %v910 = vtanh.pop %v909
  %912 = vrot.lane.b32.xlu0 %v910, 64
  %v913 = vpop.permute.xlu0 %912
  %v915 = vmul.f32 %v897, %v913
  %v916 = vld [vmem:[%s275] sm:$0xff]
  %918 = vrot.lane.b32.xlu0 %v915, 32
  %v919 = vpop.permute.xlu0 %918
  %v920 = vsel %vm136, %v919, 0
  %922 = vmatpush.msra.mxu0 0.0
  %923 = vmatpush.msra.mxu0 0.0
  %924 = vmatpush.msra.mxu0 0.0
  %925 = vmatpush.msra.mxu0 0.0
  %926 = vmatpush.msra.mxu0 0.0
  %927 = vmatpush.msra.mxu0 0.0
  %928 = vmatpush.msra.mxu0 0.0
  %929 = vmatpush.msra.mxu0 0.0
  %930 = vmatpush.msra.mxu0 0.0
  %931 = vmatpush.msra.mxu0 0.0
  %932 = vmatpush.msra.mxu0 0.0
  %933 = vmatpush.msra.mxu0 0.0
  %934 = vmatpush.msra.mxu0 %v696
  %935 = vmatpush.msra.mxu0 %v695
  %936 = vmatpush.msra.mxu0 %v694
  %937 = vmatpush.msra.mxu0 %v693
  %938 = vmatmul.f32.gmra.mxu0 %v920
  %v939 = vpop.f32.mrf.mxu0
  %v940 = vadd.f32 0.0, %v939
  %941 = vdwg.mxu0
  %v942 = vadd.f32 %v916, %v940
  %v943 = vxor.u32 %v942, 2147483648
  %v944 = vmul.f32 %v943, 1.442695
  %v945 = vpow.pop %v944
  %v946 = vadd.f32 %v945, 1.0
  %v947 = vrcp.pop %v946
  %v948 = vmul.f32 %v946, %v947
  %v949 = vsub.f32 1.0, %v948
  %v950 = vmul.f32 %v947, %v949
  %v951 = vadd.f32 %v947, %v950
  %vm952 = vweird.f32 %v946
  %vm953 = vweird.f32 %v947
  %vm954 = vmor %vm952, %vm953
  %v955 = vsel %vm954, %v947, %v951
  %v956 = vand.u32 2147483647, %v946
  %vm957 = vcmp.eq.f32.partialorder %v956, 8.507059e+37
  %v958 = vand.u32 %v946, 2147483648
  %v959 = vor.u32 1.1754944e-38, %v958
  %v960 = vsel %vm957, %v959, %v955
  %v961 = vmul.f32 1.0, %v960
  %v962 = vtanh.pop %v942
  %v963 = vmul.f32 %v961, %v909
  %965 = vrot.lane.b32.xlu0 %v962, 64
  %v966 = vpop.permute.xlu0 %965
  %v968 = vmul.f32 %v961, %v966
  %970 = vrot.lane.b32.xlu0 %v968, 32
  %v971 = vpop.permute.xlu0 %970
  %v973 = vadd.f32 %v963, %v971
  %v974 = vtanh.pop %v973
  %976 = vrot.lane.b32.xlu0 %v974, 64
  %v977 = vpop.permute.xlu0 %976
  %v979 = vmul.f32 %v961, %v977
  %v980 = vld [vmem:[%s343] sm:$0xff]
  %982 = vrot.lane.b32.xlu0 %v979, 32
  %v983 = vpop.permute.xlu0 %982
  %v984 = vsel %vm136, %v983, 0
  %986 = vmatpush.msra.mxu0 0.0
  %987 = vmatpush.msra.mxu0 0.0
  %988 = vmatpush.msra.mxu0 0.0
  %989 = vmatpush.msra.mxu0 0.0
  %990 = vmatpush.msra.mxu0 0.0
  %991 = vmatpush.msra.mxu0 0.0
  %992 = vmatpush.msra.mxu0 0.0
  %993 = vmatpush.msra.mxu0 0.0
  %994 = vmatpush.msra.mxu0 0.0
  %995 = vmatpush.msra.mxu0 0.0
  %996 = vmatpush.msra.mxu0 0.0
  %997 = vmatpush.msra.mxu0 0.0
  %998 = vmatpush.msra.mxu0 %v696
  %999 = vmatpush.msra.mxu0 %v695
  %1000 = vmatpush.msra.mxu0 %v694
  %1001 = vmatpush.msra.mxu0 %v693
  %1002 = vmatmul.f32.gmra.mxu0 %v984
  %v1003 = vpop.f32.mrf.mxu0
  %v1004 = vadd.f32 0.0, %v1003
  %1005 = vdwg.mxu0
  %v1006 = vadd.f32 %v980, %v1004
  %v1007 = vxor.u32 %v1006, 2147483648
  %v1008 = vmul.f32 %v1007, 1.442695
  %v1009 = vpow.pop %v1008
  %v1010 = vadd.f32 %v1009, 1.0
  %v1011 = vrcp.pop %v1010
  %v1012 = vmul.f32 %v1010, %v1011
  %v1013 = vsub.f32 1.0, %v1012
  %v1014 = vmul.f32 %v1011, %v1013
  %v1015 = vadd.f32 %v1011, %v1014
  %vm1016 = vweird.f32 %v1010
  %vm1017 = vweird.f32 %v1011
  %vm1018 = vmor %vm1016, %vm1017
  %v1019 = vsel %vm1018, %v1011, %v1015
  %v1020 = vand.u32 2147483647, %v1010
  %vm1021 = vcmp.eq.f32.partialorder %v1020, 8.507059e+37
  %v1022 = vand.u32 %v1010, 2147483648
  %v1023 = vor.u32 1.1754944e-38, %v1022
  %v1024 = vsel %vm1021, %v1023, %v1019
  %v1025 = vmul.f32 1.0, %v1024
  %v1026 = vtanh.pop %v1006
  %v1027 = vmul.f32 %v1025, %v973
  %1029 = vrot.lane.b32.xlu0 %v1026, 64
  %v1030 = vpop.permute.xlu0 %1029
  %v1032 = vmul.f32 %v1025, %v1030
  %1034 = vrot.lane.b32.xlu0 %v1032, 32
  %v1035 = vpop.permute.xlu0 %1034
  %v1037 = vadd.f32 %v1027, %v1035
  %v1038 = vtanh.pop %v1037
  %1040 = vrot.lane.b32.xlu0 %v1038, 64
  %v1041 = vpop.permute.xlu0 %1040
  %v1043 = vmul.f32 %v1025, %v1041
  %v1044 = vld [vmem:[%s411] sm:$0xff]
  %1046 = vrot.lane.b32.xlu0 %v1043, 32
  %v1047 = vpop.permute.xlu0 %1046
  %v1048 = vsel %vm136, %v1047, 0
  %1050 = vmatpush.msra.mxu0 0.0
  %1051 = vmatpush.msra.mxu0 0.0
  %1052 = vmatpush.msra.mxu0 0.0
  %1053 = vmatpush.msra.mxu0 0.0
  %1054 = vmatpush.msra.mxu0 0.0
  %1055 = vmatpush.msra.mxu0 0.0
  %1056 = vmatpush.msra.mxu0 0.0
  %1057 = vmatpush.msra.mxu0 0.0
  %1058 = vmatpush.msra.mxu0 0.0
  %1059 = vmatpush.msra.mxu0 0.0
  %1060 = vmatpush.msra.mxu0 0.0
  %1061 = vmatpush.msra.mxu0 0.0
  %1062 = vmatpush.msra.mxu0 %v696
  %1063 = vmatpush.msra.mxu0 %v695
  %1064 = vmatpush.msra.mxu0 %v694
  %1065 = vmatpush.msra.mxu0 %v693
  %1066 = vmatmul.f32.gmra.mxu0 %v1048
  %v1067 = vpop.f32.mrf.mxu0
  %v1068 = vadd.f32 0.0, %v1067
  %1069 = vdwg.mxu0
  %v1070 = vadd.f32 %v1044, %v1068
  %v1071 = vxor.u32 %v1070, 2147483648
  %v1072 = vmul.f32 %v1071, 1.442695
  %v1073 = vpow.pop %v1072
  %v1074 = vadd.f32 %v1073, 1.0
  %v1075 = vrcp.pop %v1074
  %v1076 = vmul.f32 %v1074, %v1075
  %v1077 = vsub.f32 1.0, %v1076
  %v1078 = vmul.f32 %v1075, %v1077
  %v1079 = vadd.f32 %v1075, %v1078
  %vm1080 = vweird.f32 %v1074
  %vm1081 = vweird.f32 %v1075
  %vm1082 = vmor %vm1080, %vm1081
  %v1083 = vsel %vm1082, %v1075, %v1079
  %v1084 = vand.u32 2147483647, %v1074
  %vm1085 = vcmp.eq.f32.partialorder %v1084, 8.507059e+37
  %v1086 = vand.u32 %v1074, 2147483648
  %v1087 = vor.u32 1.1754944e-38, %v1086
  %v1088 = vsel %vm1085, %v1087, %v1083
  %v1089 = vmul.f32 1.0, %v1088
  %v1090 = vtanh.pop %v1070
  %v1091 = vmul.f32 %v1089, %v1037
  %1093 = vrot.lane.b32.xlu0 %v1090, 64
  %v1094 = vpop.permute.xlu0 %1093
  %v1096 = vmul.f32 %v1089, %v1094
  %1098 = vrot.lane.b32.xlu0 %v1096, 32
  %v1099 = vpop.permute.xlu0 %1098
  %v1101 = vadd.f32 %v1091, %v1099
  %v1102 = vtanh.pop %v1101
  %1104 = vrot.lane.b32.xlu0 %v1102, 64
  %v1105 = vpop.permute.xlu0 %1104
  %v1107 = vmul.f32 %v1089, %v1105
  %v1108 = vld [vmem:[%s479] sm:$0xff]
  %1110 = vrot.lane.b32.xlu0 %v1107, 32
  %v1111 = vpop.permute.xlu0 %1110
  %v1112 = vsel %vm136, %v1111, 0
  %1114 = vmatpush.msra.mxu0 0.0
  %1115 = vmatpush.msra.mxu0 0.0
  %1116 = vmatpush.msra.mxu0 0.0
  %1117 = vmatpush.msra.mxu0 0.0
  %1118 = vmatpush.msra.mxu0 0.0
  %1119 = vmatpush.msra.mxu0 0.0
  %1120 = vmatpush.msra.mxu0 0.0
  %1121 = vmatpush.msra.mxu0 0.0
  %1122 = vmatpush.msra.mxu0 0.0
  %1123 = vmatpush.msra.mxu0 0.0
  %1124 = vmatpush.msra.mxu0 0.0
  %1125 = vmatpush.msra.mxu0 0.0
  %1126 = vmatpush.msra.mxu0 %v696
  %1127 = vmatpush.msra.mxu0 %v695
  %1128 = vmatpush.msra.mxu0 %v694
  %1129 = vmatpush.msra.mxu0 %v693
  %1130 = vmatmul.f32.gmra.mxu0 %v1112
  %v1131 = vpop.f32.mrf.mxu0
  %v1132 = vadd.f32 0.0, %v1131
  %1133 = vdwg.mxu0
  %v1134 = vadd.f32 %v1108, %v1132
  %v1135 = vxor.u32 %v1134, 2147483648
  %v1136 = vmul.f32 %v1135, 1.442695
  %v1137 = vpow.pop %v1136
  %v1138 = vadd.f32 %v1137, 1.0
  %v1139 = vrcp.pop %v1138
  %v1140 = vmul.f32 %v1138, %v1139
  %v1141 = vsub.f32 1.0, %v1140
  %v1142 = vmul.f32 %v1139, %v1141
  %v1143 = vadd.f32 %v1139, %v1142
  %vm1144 = vweird.f32 %v1138
  %vm1145 = vweird.f32 %v1139
  %vm1146 = vmor %vm1144, %vm1145
  %v1147 = vsel %vm1146, %v1139, %v1143
  %v1148 = vand.u32 2147483647, %v1138
  %vm1149 = vcmp.eq.f32.partialorder %v1148, 8.507059e+37
  %v1150 = vand.u32 %v1138, 2147483648
  %v1151 = vor.u32 1.1754944e-38, %v1150
  %v1152 = vsel %vm1149, %v1151, %v1147
  %v1153 = vmul.f32 1.0, %v1152
  %v1154 = vtanh.pop %v1134
  %v1155 = vmul.f32 %v1153, %v1101
  %1157 = vrot.lane.b32.xlu0 %v1154, 64
  %v1158 = vpop.permute.xlu0 %1157
  %v1160 = vmul.f32 %v1153, %v1158
  %1162 = vrot.lane.b32.xlu0 %v1160, 32
  %v1163 = vpop.permute.xlu0 %1162
  %v1165 = vadd.f32 %v1155, %v1163
  %v1166 = vtanh.pop %v1165
  %1168 = vrot.lane.b32.xlu0 %v1166, 64
  %v1169 = vpop.permute.xlu0 %1168
  %v1171 = vmul.f32 %v1153, %v1169
  %v1172 = vld [vmem:[%s547] sm:$0xff]
  %1174 = vrot.lane.b32.xlu0 %v1171, 32
  %v1175 = vpop.permute.xlu0 %1174
  %v1176 = vsel %vm136, %v1175, 0
  %1178 = vmatpush.msra.mxu0 0.0
  %1179 = vmatpush.msra.mxu0 0.0
  %1180 = vmatpush.msra.mxu0 0.0
  %1181 = vmatpush.msra.mxu0 0.0
  %1182 = vmatpush.msra.mxu0 0.0
  %1183 = vmatpush.msra.mxu0 0.0
  %1184 = vmatpush.msra.mxu0 0.0
  %1185 = vmatpush.msra.mxu0 0.0
  %1186 = vmatpush.msra.mxu0 0.0
  %1187 = vmatpush.msra.mxu0 0.0
  %1188 = vmatpush.msra.mxu0 0.0
  %1189 = vmatpush.msra.mxu0 0.0
  %1190 = vmatpush.msra.mxu0 %v696
  %1191 = vmatpush.msra.mxu0 %v695
  %1192 = vmatpush.msra.mxu0 %v694
  %1193 = vmatpush.msra.mxu0 %v693
  %1194 = vmatmul.f32.gmra.mxu0 %v1176
  %v1195 = vpop.f32.mrf.mxu0
  %v1196 = vadd.f32 0.0, %v1195
  %1197 = vdwg.mxu0
  %v1198 = vadd.f32 %v1172, %v1196
  %v1199 = vxor.u32 %v1198, 2147483648
  %v1200 = vmul.f32 %v1199, 1.442695
  %v1201 = vpow.pop %v1200
  %v1202 = vadd.f32 %v1201, 1.0
  %v1203 = vrcp.pop %v1202
  %v1204 = vmul.f32 %v1202, %v1203
  %v1205 = vsub.f32 1.0, %v1204
  %v1206 = vmul.f32 %v1203, %v1205
  %v1207 = vadd.f32 %v1203, %v1206
  %vm1208 = vweird.f32 %v1202
  %vm1209 = vweird.f32 %v1203
  %vm1210 = vmor %vm1208, %vm1209
  %v1211 = vsel %vm1210, %v1203, %v1207
  %v1212 = vand.u32 2147483647, %v1202
  %vm1213 = vcmp.eq.f32.partialorder %v1212, 8.507059e+37
  %v1214 = vand.u32 %v1202, 2147483648
  %v1215 = vor.u32 1.1754944e-38, %v1214
  %v1216 = vsel %vm1213, %v1215, %v1211
  %v1217 = vmul.f32 1.0, %v1216
  %v1218 = vtanh.pop %v1198
  %v1219 = vmul.f32 %v1217, %v1165
  %1221 = vrot.lane.b32.xlu0 %v1218, 64
  %v1222 = vpop.permute.xlu0 %1221
  %v1224 = vmul.f32 %v1217, %v1222
  %1226 = vrot.lane.b32.xlu0 %v1224, 32
  %v1227 = vpop.permute.xlu0 %1226
  %v1229 = vadd.f32 %v1219, %v1227
  %v1230 = vtanh.pop %v1229
  %1232 = vrot.lane.b32.xlu0 %v1230, 64
  %v1233 = vpop.permute.xlu0 %1232
  %v1235 = vmul.f32 %v1217, %v1233
  %v1236 = vld [vmem:[%s615] sm:$0xff]
  %1238 = vrot.lane.b32.xlu0 %v1235, 32
  %v1239 = vpop.permute.xlu0 %1238
  %v1240 = vsel %vm136, %v1239, 0
  %1242 = vmatpush.msra.mxu0 0.0
  %1243 = vmatpush.msra.mxu0 0.0
  %1244 = vmatpush.msra.mxu0 0.0
  %1245 = vmatpush.msra.mxu0 0.0
  %1246 = vmatpush.msra.mxu0 0.0
  %1247 = vmatpush.msra.mxu0 0.0
  %1248 = vmatpush.msra.mxu0 0.0
  %1249 = vmatpush.msra.mxu0 0.0
  %1250 = vmatpush.msra.mxu0 0.0
  %1251 = vmatpush.msra.mxu0 0.0
  %1252 = vmatpush.msra.mxu0 0.0
  %1253 = vmatpush.msra.mxu0 0.0
  %1254 = vmatpush.msra.mxu0 %v696
  %1255 = vmatpush.msra.mxu0 %v695
  %1256 = vmatpush.msra.mxu0 %v694
  %1257 = vmatpush.msra.mxu0 %v693
  %1258 = vmatmul.f32.gmra.mxu0 %v1240
  %v1259 = vpop.f32.mrf.mxu0
  %v1260 = vadd.f32 0.0, %v1259
  %1261 = vdwg.mxu0
  %v1262 = vadd.f32 %v1236, %v1260
  %v1263 = vxor.u32 %v1262, 2147483648
  %v1264 = vmul.f32 %v1263, 1.442695
  %v1265 = vpow.pop %v1264
  %v1266 = vadd.f32 %v1265, 1.0
  %v1267 = vrcp.pop %v1266
  %v1268 = vmul.f32 %v1266, %v1267
  %v1269 = vsub.f32 1.0, %v1268
  %v1270 = vmul.f32 %v1267, %v1269
  %v1271 = vadd.f32 %v1267, %v1270
  %vm1272 = vweird.f32 %v1266
  %vm1273 = vweird.f32 %v1267
  %vm1274 = vmor %vm1272, %vm1273
  %v1275 = vsel %vm1274, %v1267, %v1271
  %v1276 = vand.u32 2147483647, %v1266
  %vm1277 = vcmp.eq.f32.partialorder %v1276, 8.507059e+37
  %v1278 = vand.u32 %v1266, 2147483648
  %v1279 = vor.u32 1.1754944e-38, %v1278
  %v1280 = vsel %vm1277, %v1279, %v1275
  %v1281 = vmul.f32 1.0, %v1280
  %v1282 = vtanh.pop %v1262
  %v1283 = vmul.f32 %v1281, %v1229
  %1285 = vrot.lane.b32.xlu0 %v1282, 64
  %v1286 = vpop.permute.xlu0 %1285
  %v1288 = vmul.f32 %v1281, %v1286
  %1290 = vrot.lane.b32.xlu0 %v1288, 32
  %v1291 = vpop.permute.xlu0 %1290
  %v1293 = vadd.f32 %v1283, %v1291
  %v1294 = vtanh.pop %v1293
  %1296 = vrot.lane.b32.xlu0 %v1294, 64
  %v1297 = vpop.permute.xlu0 %1296
  %v1299 = vmul.f32 %v1281, %v1297
  %1301 = vrot.lane.b32.xlu0 %v1299, 32
  %v1302 = vpop.permute.xlu0 %1301
  %1304 = vst.msk [vmem:[%s782] sm:$0xff] %vm136, %v1302
  %1306 = vrot.lane.b32.xlu0 %v1293, 96
  %v1307 = vpop.permute.xlu0 %1306
  %1309 = vst.msk [vmem:[%s784] sm:$0xff] %vm136, %v1307
  // Predicated region
  $region42: #{multi_step_lstm_forward.1} parent=0 // pred_check
    %p1310 = pneg %p32
  $region43: #{multi_step_lstm_forward.1} parent=0 // pred_check_branch
    %1312 = sbr.rel (%p1310) target = $region45
  $region44: #{multi_step_lstm_forward.1} parent=0 // pred_region
    %v1313 = vld [vmem:[%s782] sm:$0xff]
    %v1314 = vld [vmem:[%s7] sm:$0xff]
    %v1315 = vld [vmem:[%s7 + $0x8] sm:$0xff]
    %v1316 = vld [vmem:[%s7 + $0x10] sm:$0xff]
    %v1317 = vld [vmem:[%s7 + $0x18] sm:$0xff]
    %v1318 = vld [vmem:[%s8] sm:$0x1]
    %v1320 = vperm.slane %v1318, 0
    %v1323 = vsel %vm136, %v1313, 0
    %1325 = vmatpush.msra.mxu0 0.0
    %1326 = vmatpush.msra.mxu0 0.0
    %1327 = vmatpush.msra.mxu0 0.0
    %1328 = vmatpush.msra.mxu0 0.0
    %1329 = vmatpush.msra.mxu0 0.0
    %1330 = vmatpush.msra.mxu0 0.0
    %1331 = vmatpush.msra.mxu0 0.0
    %1332 = vmatpush.msra.mxu0 0.0
    %1333 = vmatpush.msra.mxu0 0.0
    %1334 = vmatpush.msra.mxu0 0.0
    %1335 = vmatpush.msra.mxu0 0.0
    %1336 = vmatpush.msra.mxu0 0.0
    %1337 = vmatpush.msra.mxu0 %v1317
    %1338 = vmatpush.msra.mxu0 %v1316
    %1339 = vmatpush.msra.mxu0 %v1315
    %1340 = vmatpush.msra.mxu0 %v1314
    %1341 = vmatmul.f32.gmra.mxu0 %v1323
    %v1342 = vpop.f32.mrf.mxu0
    %v1343 = vadd.f32 %v1320, %v1342
    %1344 = vdwg.mxu0
    %1345 = vst [vmem:[%s9] sm:$0xff] %v1343
  $region45: #{multi_step_lstm_forward.1} parent=0 // pred_fallthru
    _
  // Predicated region
  $region46: #{multi_step_lstm_forward.1} parent=0 // pred_check
    _
  $region47: #{multi_step_lstm_forward.1} parent=0 // pred_check_branch
    %1347 = sbr.rel (0) target = $region49
  $region48: #{multi_step_lstm_forward.1} parent=0 // pred_region
    _
  $region49: #{multi_step_lstm_forward.1} parent=0 // pred_fallthru
    _
  // Predicated region
  $region50: #{multi_step_lstm_forward.1} parent=0 // pred_check
    _
  $region51: #{multi_step_lstm_forward.1} parent=0 // pred_check_branch
    %1349 = sbr.rel (0) target = $region53
  $region52: #{multi_step_lstm_forward.1} parent=0 // pred_region
    _
  $region53: #{multi_step_lstm_forward.1} parent=0 // pred_fallthru
    _

// kernel: multi_step_lstm_forward.1
$region0: #{multi_step_lstm_forward.1}
  #allocation0 [shape = 'u32[]', space=smem, size = 0x4, offset = 0x4, fixed_abs, tag = 'smem constant byte address 0x4 - core index']
  #allocation1 [shape = 'u32[72,128]{1,0:T(1,128)}', space=vmem, size = 0x9000, scoped, tag = 'internal scratch']
  #allocation2 [shape = 'f32[8,8,128]{2,1,0:T(8,128)}', space=vmem, size = 0x8000, scoped, tag = 'scratch operand']
  #allocation3 [shape = 'f32[8,8,32]{2,1,0:T(8,128)}', space=vmem, size = 0x8000, scoped, tag = 'scratch operand']
  #allocation4 [shape = 'f32[2,8,32]{2,1,0:T(8,128)}', space=vmem, size = 0x2000, scoped, tag = 'scratch operand']
  #allocation5 [shape = 'f32[2,8,32]{2,1,0:T(8,128)}', space=vmem, size = 0x2000, scoped, tag = 'scratch operand']
  %s0 = inlined_call_operand.vmem [shape: f32[8,8,16], index: 0, kind: input, shape index: {}]
  %s1 = inlined_call_operand.vmem [shape: f32[16,128], index: 1, kind: input, shape index: {}]
  %s2 = inlined_call_operand.vmem [shape: f32[32,128], index: 2, kind: input, shape index: {}]
  %s3 = inlined_call_operand.vmem [shape: f32[1,128], index: 3, kind: input, shape index: {}]
  %s4 = inlined_call_operand.vmem [shape: f32[32,128], index: 4, kind: input, shape index: {}]
  %s5 = inlined_call_operand.vmem [shape: f32[32,128], index: 5, kind: input, shape index: {}]
  %s6 = inlined_call_operand.vmem [shape: f32[1,128], index: 6, kind: input, shape index: {}]
  %s7 = inlined_call_operand.vmem [shape: f32[32,128], index: 7, kind: input, shape index: {}]
  %s8 = inlined_call_operand.vmem [shape: f32[1,128], index: 8, kind: input, shape index: {}]
  %s9 = inlined_call_operand.vmem [shape: f32[8,128], index: 9, kind: output, shape index: {}]
  %s10 = sld [smem:[#allocation0]]
  $region54: #{multi_step_lstm_forward.1} parent=0
    _
  %s12 = ssub.s32 1, %s10
  %s13 = scalar_select 0, %s12, %s10
  // Predicated region
  $region2: #{multi_step_lstm_forward.1} parent=0 // pred_check
    _
  $region3: #{multi_step_lstm_forward.1} parent=0 // pred_check_branch
    %15 = sbr.rel (0) target = $region5
  $region4: #{multi_step_lstm_forward.1} parent=0 // pred_region
    _
  $region5: #{multi_step_lstm_forward.1} parent=0 // pred_fallthru
    _
  // Predicated region
  $region6: #{multi_step_lstm_forward.1} parent=0 // pred_check
    _
  $region7: #{multi_step_lstm_forward.1} parent=0 // pred_check_branch
    %17 = sbr.rel (0) target = $region9
  $region8: #{multi_step_lstm_forward.1} parent=0 // pred_region
    _
  $region9: #{multi_step_lstm_forward.1} parent=0 // pred_fallthru
    _
  // Predicated region
  $region10: #{multi_step_lstm_forward.1} parent=0 // pred_check
    _
  $region11: #{multi_step_lstm_forward.1} parent=0 // pred_check_branch
    %19 = sbr.rel (0) target = $region13
  $region12: #{multi_step_lstm_forward.1} parent=0 // pred_region
    _
  $region13: #{multi_step_lstm_forward.1} parent=0 // pred_fallthru
    _
  // Predicated region
  $region14: #{multi_step_lstm_forward.1} parent=0 // pred_check
    _
  $region15: #{multi_step_lstm_forward.1} parent=0 // pred_check_branch
    %21 = sbr.rel (0) target = $region17
  $region16: #{multi_step_lstm_forward.1} parent=0 // pred_region
    _
  $region17: #{multi_step_lstm_forward.1} parent=0 // pred_fallthru
    _
  // Predicated region
  $region18: #{multi_step_lstm_forward.1} parent=0 // pred_check
    _
  $region19: #{multi_step_lstm_forward.1} parent=0 // pred_check_branch
    %23 = sbr.rel (0) target = $region21
  $region20: #{multi_step_lstm_forward.1} parent=0 // pred_region
    _
  $region21: #{multi_step_lstm_forward.1} parent=0 // pred_fallthru
    _
  // Predicated region
  $region22: #{multi_step_lstm_forward.1} parent=0 // pred_check
    _
  $region23: #{multi_step_lstm_forward.1} parent=0 // pred_check_branch
    %25 = sbr.rel (0) target = $region25
  $region24: #{multi_step_lstm_forward.1} parent=0 // pred_region
    _
  $region25: #{multi_step_lstm_forward.1} parent=0 // pred_fallthru
    _
  // Predicated region
  $region26: #{multi_step_lstm_forward.1} parent=0 // pred_check
    _
  $region27: #{multi_step_lstm_forward.1} parent=0 // pred_check_branch
    %27 = sbr.rel (0) target = $region29
  $region28: #{multi_step_lstm_forward.1} parent=0 // pred_region
    _
  $region29: #{multi_step_lstm_forward.1} parent=0 // pred_fallthru
    _
  // Predicated region
  $region30: #{multi_step_lstm_forward.1} parent=0 // pred_check
    _
  $region31: #{multi_step_lstm_forward.1} parent=0 // pred_check_branch
    %29 = sbr.rel (0) target = $region33
  $region32: #{multi_step_lstm_forward.1} parent=0 // pred_region
    _
  $region33: #{multi_step_lstm_forward.1} parent=0 // pred_fallthru
    _
  // Predicated region
  $region34: #{multi_step_lstm_forward.1} parent=0 // pred_check
    _
  $region35: #{multi_step_lstm_forward.1} parent=0 // pred_check_branch
    %31 = sbr.rel (0) target = $region37
  $region36: #{multi_step_lstm_forward.1} parent=0 // pred_region
    _
  $region37: #{multi_step_lstm_forward.1} parent=0 // pred_fallthru
    _
  %p32 = scmp.eq.s32.totalorder 0, 0
  // Predicated region
  $region38: #{multi_step_lstm_forward.1} parent=0 // pred_check
    %p33 = pneg %p32
  $region39: #{multi_step_lstm_forward.1} parent=0 // pred_check_branch
    %35 = sbr.rel (%p33) target = $region41
  $region40: #{multi_step_lstm_forward.1} parent=0 // pred_region
    %vm36 = vcmask 261120
    %37 = vst.msk [vmem:[#allocation4] sm:$0xff] %vm36, 0.0
    %38 = vst.msk [vmem:[#allocation4 + $0x8] sm:$0xff] %vm36, 0.0
    %39 = vst.msk [vmem:[#allocation5] sm:$0xff] %vm36, 0.0
    %40 = vst.msk [vmem:[#allocation5 + $0x8] sm:$0xff] %vm36, 0.0
  $region41: #{multi_step_lstm_forward.1} parent=0 // pred_fallthru
    _
  %v41 = vld [vmem:[%s1] sm:$0xff]
  %v42 = vld [vmem:[%s1 + $0x8] sm:$0xff]
  %v43 = vld [vmem:[%s2] sm:$0xff]
  %v44 = vld [vmem:[%s2 + $0x8] sm:$0xff]
  %v45 = vld [vmem:[%s2 + $0x10] sm:$0xff]
  %v46 = vld [vmem:[%s2 + $0x18] sm:$0xff]
  %v47 = vld [vmem:[%s3] sm:$0x1]
  %v48 = vld [vmem:[%s0] sm:$0xff]
  %v49 = vld [vmem:[%s0 + $0x8] sm:$0xff]
  %v50 = vld [vmem:[%s0 + $0x10] sm:$0xff]
  %v51 = vld [vmem:[%s0 + $0x18] sm:$0xff]
  %v52 = vld [vmem:[%s0 + $0x20] sm:$0xff]
  %v53 = vld [vmem:[%s0 + $0x28] sm:$0xff]
  %v54 = vld [vmem:[%s0 + $0x30] sm:$0xff]
  %v55 = vld [vmem:[%s0 + $0x38] sm:$0xff]
  %v57 = vperm.slane %v47, 0
  %vm59 = vcmask 130048
  %v61 = vsel %vm59, %v48, 0
  %v64 = vsel %vm59, %v49, 0
  %v67 = vsel %vm59, %v50, 0
  %v70 = vsel %vm59, %v51, 0
  %v73 = vsel %vm59, %v52, 0
  %v76 = vsel %vm59, %v53, 0
  %v79 = vsel %vm59, %v54, 0
  %v82 = vsel %vm59, %v55, 0
  %84 = vmatpush.msra.mxu0 0.0
  %85 = vmatpush.msra.mxu0 0.0
  %86 = vmatpush.msra.mxu0 0.0
  %87 = vmatpush.msra.mxu0 0.0
  %88 = vmatpush.msra.mxu0 0.0
  %89 = vmatpush.msra.mxu0 0.0
  %90 = vmatpush.msra.mxu0 0.0
  %91 = vmatpush.msra.mxu0 0.0
  %92 = vmatpush.msra.mxu0 0.0
  %93 = vmatpush.msra.mxu0 0.0
  %94 = vmatpush.msra.mxu0 0.0
  %95 = vmatpush.msra.mxu0 0.0
  %96 = vmatpush.msra.mxu0 0.0
  %97 = vmatpush.msra.mxu0 0.0
  %98 = vmatpush.msra.mxu0 %v42
  %99 = vmatpush.msra.mxu0 %v41
  %100 = vmatmul.f32.gmra.mxu0 %v61
  %v101 = vpop.f32.mrf.mxu0
  %v102 = vadd.f32 %v57, %v101
  %103 = vmatmul.f32.gmra.mxu0 %v64
  %v104 = vpop.f32.mrf.mxu0
  %v105 = vadd.f32 %v57, %v104
  %106 = vmatmul.f32.gmra.mxu0 %v67
  %v107 = vpop.f32.mrf.mxu0
  %v108 = vadd.f32 %v57, %v107
  %109 = vmatmul.f32.gmra.mxu0 %v70
  %v110 = vpop.f32.mrf.mxu0
  %v111 = vadd.f32 %v57, %v110
  %112 = vmatmul.f32.gmra.mxu0 %v73
  %v113 = vpop.f32.mrf.mxu0
  %v114 = vadd.f32 %v57, %v113
  %115 = vmatmul.f32.gmra.mxu0 %v76
  %v116 = vpop.f32.mrf.mxu0
  %v117 = vadd.f32 %v57, %v116
  %118 = vmatmul.f32.gmra.mxu0 %v79
  %v119 = vpop.f32.mrf.mxu0
  %v120 = vadd.f32 %v57, %v119
  %121 = vmatmul.f32.gmra.mxu0 %v82
  %v122 = vpop.f32.mrf.mxu0
  %v123 = vadd.f32 %v57, %v122
  %124 = vdwg.mxu0
  %125 = vst [vmem:[#allocation2] sm:$0xff] %v102
  %126 = vst [vmem:[#allocation2 + $0x8] sm:$0xff] %v105
  %127 = vst [vmem:[#allocation2 + $0x10] sm:$0xff] %v108
  %128 = vst [vmem:[#allocation2 + $0x18] sm:$0xff] %v111
  %129 = vst [vmem:[#allocation2 + $0x20] sm:$0xff] %v114
  %130 = vst [vmem:[#allocation2 + $0x28] sm:$0xff] %v117
  %131 = vst [vmem:[#allocation2 + $0x30] sm:$0xff] %v120
  %132 = vst [vmem:[#allocation2 + $0x38] sm:$0xff] %v123
  %v133 = vld [vmem:[#allocation4] sm:$0xff]
  %v134 = vld [vmem:[#allocation5] sm:$0xff]
  %v135 = vld [vmem:[#allocation2] sm:$0xff]
  %vm136 = vcmask 261120
  %v138 = vsel %vm136, %v133, 0
  %140 = vmatpush.msra.mxu0 0.0
  %141 = vmatpush.msra.mxu0 0.0
  %142 = vmatpush.msra.mxu0 0.0
  %143 = vmatpush.msra.mxu0 0.0
  %144 = vmatpush.msra.mxu0 0.0
  %145 = vmatpush.msra.mxu0 0.0
  %146 = vmatpush.msra.mxu0 0.0
  %147 = vmatpush.msra.mxu0 0.0
  %148 = vmatpush.msra.mxu0 0.0
  %149 = vmatpush.msra.mxu0 0.0
  %150 = vmatpush.msra.mxu0 0.0
  %151 = vmatpush.msra.mxu0 0.0
  %152 = vmatpush.msra.mxu0 %v46
  %153 = vmatpush.msra.mxu0 %v45
  %154 = vmatpush.msra.mxu0 %v44
  %155 = vmatpush.msra.mxu0 %v43
  %156 = vmatmul.f32.gmra.mxu0 %v138
  %v157 = vpop.f32.mrf.mxu0
  %v158 = vadd.f32 0.0, %v157
  %159 = vdwg.mxu0
  %v160 = vadd.f32 %v135, %v158
  %v161 = vxor.u32 %v160, 2147483648
  %v162 = vmul.f32 %v161, 1.442695
  %v163 = vpow.pop %v162
  %v164 = vadd.f32 %v163, 1.0
  %v165 = vrcp.pop %v164
  %v166 = vmul.f32 %v164, %v165
  %v167 = vsub.f32 1.0, %v166
  %v168 = vmul.f32 %v165, %v167
  %v169 = vadd.f32 %v165, %v168
  %vm170 = vweird.f32 %v164
  %vm171 = vweird.f32 %v165
  %vm172 = vmor %vm170, %vm171
  %v173 = vsel %vm172, %v165, %v169
  %v174 = vand.u32 2147483647, %v164
  %vm175 = vcmp.eq.f32.partialorder %v174, 8.507059e+37
  %v176 = vand.u32 %v164, 2147483648
  %v177 = vor.u32 1.1754944e-38, %v176
  %v178 = vsel %vm175, %v177, %v173
  %v179 = vmul.f32 1.0, %v178
  %v180 = vtanh.pop %v160
  %182 = vrot.lane.b32.xlu0 %v134, 32
  %v183 = vpop.permute.xlu0 %182
  %v185 = vmul.f32 %v179, %v183
  %187 = vrot.lane.b32.xlu0 %v180, 64
  %v188 = vpop.permute.xlu0 %187
  %v190 = vmul.f32 %v179, %v188
  %192 = vrot.lane.b32.xlu0 %v190, 32
  %v193 = vpop.permute.xlu0 %192
  %v195 = vadd.f32 %v185, %v193
  %v196 = vtanh.pop %v195
  %198 = vrot.lane.b32.xlu0 %v196, 64
  %v199 = vpop.permute.xlu0 %198
  %v201 = vmul.f32 %v179, %v199
  %203 = vrot.lane.b32.xlu0 %v201, 32
  %v204 = vpop.permute.xlu0 %203
  %206 = vst.msk [vmem:[#allocation3] sm:$0xff] %vm136, %v204
  %s207 = scalar_lea.vmem [#allocation2], 8
  %v208 = vld [vmem:[%s207] sm:$0xff]
  %v209 = vsel %vm136, %v204, 0
  %211 = vmatpush.msra.mxu0 0.0
  %212 = vmatpush.msra.mxu0 0.0
  %213 = vmatpush.msra.mxu0 0.0
  %214 = vmatpush.msra.mxu0 0.0
  %215 = vmatpush.msra.mxu0 0.0
  %216 = vmatpush.msra.mxu0 0.0
  %217 = vmatpush.msra.mxu0 0.0
  %218 = vmatpush.msra.mxu0 0.0
  %219 = vmatpush.msra.mxu0 0.0
  %220 = vmatpush.msra.mxu0 0.0
  %221 = vmatpush.msra.mxu0 0.0
  %222 = vmatpush.msra.mxu0 0.0
  %223 = vmatpush.msra.mxu0 %v46
  %224 = vmatpush.msra.mxu0 %v45
  %225 = vmatpush.msra.mxu0 %v44
  %226 = vmatpush.msra.mxu0 %v43
  %227 = vmatmul.f32.gmra.mxu0 %v209
  %v228 = vpop.f32.mrf.mxu0
  %v229 = vadd.f32 0.0, %v228
  %230 = vdwg.mxu0
  %v231 = vadd.f32 %v208, %v229
  %v232 = vxor.u32 %v231, 2147483648
  %v233 = vmul.f32 %v232, 1.442695
  %v234 = vpow.pop %v233
  %v235 = vadd.f32 %v234, 1.0
  %v236 = vrcp.pop %v235
  %v237 = vmul.f32 %v235, %v236
  %v238 = vsub.f32 1.0, %v237
  %v239 = vmul.f32 %v236, %v238
  %v240 = vadd.f32 %v236, %v239
  %vm241 = vweird.f32 %v235
  %vm242 = vweird.f32 %v236
  %vm243 = vmor %vm241, %vm242
  %v244 = vsel %vm243, %v236, %v240
  %v245 = vand.u32 2147483647, %v235
  %vm246 = vcmp.eq.f32.partialorder %v245, 8.507059e+37
  %v247 = vand.u32 %v235, 2147483648
  %v248 = vor.u32 1.1754944e-38, %v247
  %v249 = vsel %vm246, %v248, %v244
  %v250 = vmul.f32 1.0, %v249
  %v251 = vtanh.pop %v231
  %v252 = vmul.f32 %v250, %v195
  %254 = vrot.lane.b32.xlu0 %v251, 64
  %v255 = vpop.permute.xlu0 %254
  %v257 = vmul.f32 %v250, %v255
  %259 = vrot.lane.b32.xlu0 %v257, 32
  %v260 = vpop.permute.xlu0 %259
  %v262 = vadd.f32 %v252, %v260
  %v263 = vtanh.pop %v262
  %265 = vrot.lane.b32.xlu0 %v263, 64
  %v266 = vpop.permute.xlu0 %265
  %v268 = vmul.f32 %v250, %v266
  %270 = vrot.lane.b32.xlu0 %v268, 32
  %v271 = vpop.permute.xlu0 %270
  %s273 = scalar_lea.vmem [#allocation3], 8
  %274 = vst.msk [vmem:[%s273] sm:$0xff] %vm136, %v271
  %s275 = scalar_lea.vmem [#allocation2], 16
  %v276 = vld [vmem:[%s275] sm:$0xff]
  %v277 = vsel %vm136, %v271, 0
  %279 = vmatpush.msra.mxu0 0.0
  %280 = vmatpush.msra.mxu0 0.0
  %281 = vmatpush.msra.mxu0 0.0
  %282 = vmatpush.msra.mxu0 0.0
  %283 = vmatpush.msra.mxu0 0.0
  %284 = vmatpush.msra.mxu0 0.0
  %285 = vmatpush.msra.mxu0 0.0
  %286 = vmatpush.msra.mxu0 0.0
  %287 = vmatpush.msra.mxu0 0.0
  %288 = vmatpush.msra.mxu0 0.0
  %289 = vmatpush.msra.mxu0 0.0
  %290 = vmatpush.msra.mxu0 0.0
  %291 = vmatpush.msra.mxu0 %v46
  %292 = vmatpush.msra.mxu0 %v45
  %293 = vmatpush.msra.mxu0 %v44
  %294 = vmatpush.msra.mxu0 %v43
  %295 = vmatmul.f32.gmra.mxu0 %v277
  %v296 = vpop.f32.mrf.mxu0
  %v297 = vadd.f32 0.0, %v296
  %298 = vdwg.mxu0
  %v299 = vadd.f32 %v276, %v297
  %v300 = vxor.u32 %v299, 2147483648
  %v301 = vmul.f32 %v300, 1.442695
  %v302 = vpow.pop %v301
  %v303 = vadd.f32 %v302, 1.0
  %v304 = vrcp.pop %v303
  %v305 = vmul.f32 %v303, %v304
  %v306 = vsub.f32 1.0, %v305
  %v307 = vmul.f32 %v304, %v306
  %v308 = vadd.f32 %v304, %v307
  %vm309 = vweird.f32 %v303
  %vm310 = vweird.f32 %v304
  %vm311 = vmor %vm309, %vm310
  %v312 = vsel %vm311, %v304, %v308
  %v313 = vand.u32 2147483647, %v303
  %vm314 = vcmp.eq.f32.partialorder %v313, 8.507059e+37
  %v315 = vand.u32 %v303, 2147483648
  %v316 = vor.u32 1.1754944e-38, %v315
  %v317 = vsel %vm314, %v316, %v312
  %v318 = vmul.f32 1.0, %v317
  %v319 = vtanh.pop %v299
  %v320 = vmul.f32 %v318, %v262
  %322 = vrot.lane.b32.xlu0 %v319, 64
  %v323 = vpop.permute.xlu0 %322
  %v325 = vmul.f32 %v318, %v323
  %327 = vrot.lane.b32.xlu0 %v325, 32
  %v328 = vpop.permute.xlu0 %327
  %v330 = vadd.f32 %v320, %v328
  %v331 = vtanh.pop %v330
  %333 = vrot.lane.b32.xlu0 %v331, 64
  %v334 = vpop.permute.xlu0 %333
  %v336 = vmul.f32 %v318, %v334
  %338 = vrot.lane.b32.xlu0 %v336, 32
  %v339 = vpop.permute.xlu0 %338
  %s341 = scalar_lea.vmem [#allocation3], 16
  %342 = vst.msk [vmem:[%s341] sm:$0xff] %vm136, %v339
  %s343 = scalar_lea.vmem [#allocation2], 24
  %v344 = vld [vmem:[%s343] sm:$0xff]
  %v345 = vsel %vm136, %v339, 0
  %347 = vmatpush.msra.mxu0 0.0
  %348 = vmatpush.msra.mxu0 0.0
  %349 = vmatpush.msra.mxu0 0.0
  %350 = vmatpush.msra.mxu0 0.0
  %351 = vmatpush.msra.mxu0 0.0
  %352 = vmatpush.msra.mxu0 0.0
  %353 = vmatpush.msra.mxu0 0.0
  %354 = vmatpush.msra.mxu0 0.0
  %355 = vmatpush.msra.mxu0 0.0
  %356 = vmatpush.msra.mxu0 0.0
  %357 = vmatpush.msra.mxu0 0.0
  %358 = vmatpush.msra.mxu0 0.0
  %359 = vmatpush.msra.mxu0 %v46
  %360 = vmatpush.msra.mxu0 %v45
  %361 = vmatpush.msra.mxu0 %v44
  %362 = vmatpush.msra.mxu0 %v43
  %363 = vmatmul.f32.gmra.mxu0 %v345
  %v364 = vpop.f32.mrf.mxu0
  %v365 = vadd.f32 0.0, %v364
  %366 = vdwg.mxu0
  %v367 = vadd.f32 %v344, %v365
  %v368 = vxor.u32 %v367, 2147483648
  %v369 = vmul.f32 %v368, 1.442695
  %v370 = vpow.pop %v369
  %v371 = vadd.f32 %v370, 1.0
  %v372 = vrcp.pop %v371
  %v373 = vmul.f32 %v371, %v372
  %v374 = vsub.f32 1.0, %v373
  %v375 = vmul.f32 %v372, %v374
  %v376 = vadd.f32 %v372, %v375
  %vm377 = vweird.f32 %v371
  %vm378 = vweird.f32 %v372
  %vm379 = vmor %vm377, %vm378
  %v380 = vsel %vm379, %v372, %v376
  %v381 = vand.u32 2147483647, %v371
  %vm382 = vcmp.eq.f32.partialorder %v381, 8.507059e+37
  %v383 = vand.u32 %v371, 2147483648
  %v384 = vor.u32 1.1754944e-38, %v383
  %v385 = vsel %vm382, %v384, %v380
  %v386 = vmul.f32 1.0, %v385
  %v387 = vtanh.pop %v367
  %v388 = vmul.f32 %v386, %v330
  %390 = vrot.lane.b32.xlu0 %v387, 64
  %v391 = vpop.permute.xlu0 %390
  %v393 = vmul.f32 %v386, %v391
  %395 = vrot.lane.b32.xlu0 %v393, 32
  %v396 = vpop.permute.xlu0 %395
  %v398 = vadd.f32 %v388, %v396
  %v399 = vtanh.pop %v398
  %401 = vrot.lane.b32.xlu0 %v399, 64
  %v402 = vpop.permute.xlu0 %401
  %v404 = vmul.f32 %v386, %v402
  %406 = vrot.lane.b32.xlu0 %v404, 32
  %v407 = vpop.permute.xlu0 %406
  %s409 = scalar_lea.vmem [#allocation3], 24
  %410 = vst.msk [vmem:[%s409] sm:$0xff] %vm136, %v407
  %s411 = scalar_lea.vmem [#allocation2], 32
  %v412 = vld [vmem:[%s411] sm:$0xff]
  %v413 = vsel %vm136, %v407, 0
  %415 = vmatpush.msra.mxu0 0.0
  %416 = vmatpush.msra.mxu0 0.0
  %417 = vmatpush.msra.mxu0 0.0
  %418 = vmatpush.msra.mxu0 0.0
  %419 = vmatpush.msra.mxu0 0.0
  %420 = vmatpush.msra.mxu0 0.0
  %421 = vmatpush.msra.mxu0 0.0
  %422 = vmatpush.msra.mxu0 0.0
  %423 = vmatpush.msra.mxu0 0.0
  %424 = vmatpush.msra.mxu0 0.0
  %425 = vmatpush.msra.mxu0 0.0
  %426 = vmatpush.msra.mxu0 0.0
  %427 = vmatpush.msra.mxu0 %v46
  %428 = vmatpush.msra.mxu0 %v45
  %429 = vmatpush.msra.mxu0 %v44
  %430 = vmatpush.msra.mxu0 %v43
  %431 = vmatmul.f32.gmra.mxu0 %v413
  %v432 = vpop.f32.mrf.mxu0
  %v433 = vadd.f32 0.0, %v432
  %434 = vdwg.mxu0
  %v435 = vadd.f32 %v412, %v433
  %v436 = vxor.u32 %v435, 2147483648
  %v437 = vmul.f32 %v436, 1.442695
  %v438 = vpow.pop %v437
  %v439 = vadd.f32 %v438, 1.0
  %v440 = vrcp.pop %v439
  %v441 = vmul.f32 %v439, %v440
  %v442 = vsub.f32 1.0, %v441
  %v443 = vmul.f32 %v440, %v442
  %v444 = vadd.f32 %v440, %v443
  %vm445 = vweird.f32 %v439
  %vm446 = vweird.f32 %v440
  %vm447 = vmor %vm445, %vm446
  %v448 = vsel %vm447, %v440, %v444
  %v449 = vand.u32 2147483647, %v439
  %vm450 = vcmp.eq.f32.partialorder %v449, 8.507059e+37
  %v451 = vand.u32 %v439, 2147483648
  %v452 = vor.u32 1.1754944e-38, %v451
  %v453 = vsel %vm450, %v452, %v448
  %v454 = vmul.f32 1.0, %v453
  %v455 = vtanh.pop %v435
  %v456 = vmul.f32 %v454, %v398
  %458 = vrot.lane.b32.xlu0 %v455, 64
  %v459 = vpop.permute.xlu0 %458
  %v461 = vmul.f32 %v454, %v459
  %463 = vrot.lane.b32.xlu0 %v461, 32
  %v464 = vpop.permute.xlu0 %463
  %v466 = vadd.f32 %v456, %v464
  %v467 = vtanh.pop %v466
  %469 = vrot.lane.b32.xlu0 %v467, 64
  %v470 = vpop.permute.xlu0 %469
  %v472 = vmul.f32 %v454, %v470
  %474 = vrot.lane.b32.xlu0 %v472, 32
  %v475 = vpop.permute.xlu0 %474
  %s477 = scalar_lea.vmem [#allocation3], 32
  %478 = vst.msk [vmem:[%s477] sm:$0xff] %vm136, %v475
  %s479 = scalar_lea.vmem [#allocation2], 40
  %v480 = vld [vmem:[%s479] sm:$0xff]
  %v481 = vsel %vm136, %v475, 0
  %483 = vmatpush.msra.mxu0 0.0
  %484 = vmatpush.msra.mxu0 0.0
  %485 = vmatpush.msra.mxu0 0.0
  %486 = vmatpush.msra.mxu0 0.0
  %487 = vmatpush.msra.mxu0 0.0
  %488 = vmatpush.msra.mxu0 0.0
  %489 = vmatpush.msra.mxu0 0.0
  %490 = vmatpush.msra.mxu0 0.0
  %491 = vmatpush.msra.mxu0 0.0
  %492 = vmatpush.msra.mxu0 0.0
  %493 = vmatpush.msra.mxu0 0.0
  %494 = vmatpush.msra.mxu0 0.0
  %495 = vmatpush.msra.mxu0 %v46
  %496 = vmatpush.msra.mxu0 %v45
  %497 = vmatpush.msra.mxu0 %v44
  %498 = vmatpush.msra.mxu0 %v43
  %499 = vmatmul.f32.gmra.mxu0 %v481
  %v500 = vpop.f32.mrf.mxu0
  %v501 = vadd.f32 0.0, %v500
  %502 = vdwg.mxu0
  %v503 = vadd.f32 %v480, %v501
  %v504 = vxor.u32 %v503, 2147483648
  %v505 = vmul.f32 %v504, 1.442695
  %v506 = vpow.pop %v505
  %v507 = vadd.f32 %v506, 1.0
  %v508 = vrcp.pop %v507
  %v509 = vmul.f32 %v507, %v508
  %v510 = vsub.f32 1.0, %v509
  %v511 = vmul.f32 %v508, %v510
  %v512 = vadd.f32 %v508, %v511
  %vm513 = vweird.f32 %v507
  %vm514 = vweird.f32 %v508
  %vm515 = vmor %vm513, %vm514
  %v516 = vsel %vm515, %v508, %v512
  %v517 = vand.u32 2147483647, %v507
  %vm518 = vcmp.eq.f32.partialorder %v517, 8.507059e+37
  %v519 = vand.u32 %v507, 2147483648
  %v520 = vor.u32 1.1754944e-38, %v519
  %v521 = vsel %vm518, %v520, %v516
  %v522 = vmul.f32 1.0, %v521
  %v523 = vtanh.pop %v503
  %v524 = vmul.f32 %v522, %v466
  %526 = vrot.lane.b32.xlu0 %v523, 64
  %v527 = vpop.permute.xlu0 %526
  %v529 = vmul.f32 %v522, %v527
  %531 = vrot.lane.b32.xlu0 %v529, 32
  %v532 = vpop.permute.xlu0 %531
  %v534 = vadd.f32 %v524, %v532
  %v535 = vtanh.pop %v534
  %537 = vrot.lane.b32.xlu0 %v535, 64
  %v538 = vpop.permute.xlu0 %537
  %v540 = vmul.f32 %v522, %v538
  %542 = vrot.lane.b32.xlu0 %v540, 32
  %v543 = vpop.permute.xlu0 %542
  %s545 = scalar_lea.vmem [#allocation3], 40
  %546 = vst.msk [vmem:[%s545] sm:$0xff] %vm136, %v543
  %s547 = scalar_lea.vmem [#allocation2], 48
  %v548 = vld [vmem:[%s547] sm:$0xff]
  %v549 = vsel %vm136, %v543, 0
  %551 = vmatpush.msra.mxu0 0.0
  %552 = vmatpush.msra.mxu0 0.0
  %553 = vmatpush.msra.mxu0 0.0
  %554 = vmatpush.msra.mxu0 0.0
  %555 = vmatpush.msra.mxu0 0.0
  %556 = vmatpush.msra.mxu0 0.0
  %557 = vmatpush.msra.mxu0 0.0
  %558 = vmatpush.msra.mxu0 0.0
  %559 = vmatpush.msra.mxu0 0.0
  %560 = vmatpush.msra.mxu0 0.0
  %561 = vmatpush.msra.mxu0 0.0
  %562 = vmatpush.msra.mxu0 0.0
  %563 = vmatpush.msra.mxu0 %v46
  %564 = vmatpush.msra.mxu0 %v45
  %565 = vmatpush.msra.mxu0 %v44
  %566 = vmatpush.msra.mxu0 %v43
  %567 = vmatmul.f32.gmra.mxu0 %v549
  %v568 = vpop.f32.mrf.mxu0
  %v569 = vadd.f32 0.0, %v568
  %570 = vdwg.mxu0
  %v571 = vadd.f32 %v548, %v569
  %v572 = vxor.u32 %v571, 2147483648
  %v573 = vmul.f32 %v572, 1.442695
  %v574 = vpow.pop %v573
  %v575 = vadd.f32 %v574, 1.0
  %v576 = vrcp.pop %v575
  %v577 = vmul.f32 %v575, %v576
  %v578 = vsub.f32 1.0, %v577
  %v579 = vmul.f32 %v576, %v578
  %v580 = vadd.f32 %v576, %v579
  %vm581 = vweird.f32 %v575
  %vm582 = vweird.f32 %v576
  %vm583 = vmor %vm581, %vm582
  %v584 = vsel %vm583, %v576, %v580
  %v585 = vand.u32 2147483647, %v575
  %vm586 = vcmp.eq.f32.partialorder %v585, 8.507059e+37
  %v587 = vand.u32 %v575, 2147483648
  %v588 = vor.u32 1.1754944e-38, %v587
  %v589 = vsel %vm586, %v588, %v584
  %v590 = vmul.f32 1.0, %v589
  %v591 = vtanh.pop %v571
  %v592 = vmul.f32 %v590, %v534
  %594 = vrot.lane.b32.xlu0 %v591, 64
  %v595 = vpop.permute.xlu0 %594
  %v597 = vmul.f32 %v590, %v595
  %599 = vrot.lane.b32.xlu0 %v597, 32
  %v600 = vpop.permute.xlu0 %599
  %v602 = vadd.f32 %v592, %v600
  %v603 = vtanh.pop %v602
  %605 = vrot.lane.b32.xlu0 %v603, 64
  %v606 = vpop.permute.xlu0 %605
  %v608 = vmul.f32 %v590, %v606
  %610 = vrot.lane.b32.xlu0 %v608, 32
  %v611 = vpop.permute.xlu0 %610
  %s613 = scalar_lea.vmem [#allocation3], 48
  %614 = vst.msk [vmem:[%s613] sm:$0xff] %vm136, %v611
  %s615 = scalar_lea.vmem [#allocation2], 56
  %v616 = vld [vmem:[%s615] sm:$0xff]
  %v617 = vsel %vm136, %v611, 0
  %619 = vmatpush.msra.mxu0 0.0
  %620 = vmatpush.msra.mxu0 0.0
  %621 = vmatpush.msra.mxu0 0.0
  %622 = vmatpush.msra.mxu0 0.0
  %623 = vmatpush.msra.mxu0 0.0
  %624 = vmatpush.msra.mxu0 0.0
  %625 = vmatpush.msra.mxu0 0.0
  %626 = vmatpush.msra.mxu0 0.0
  %627 = vmatpush.msra.mxu0 0.0
  %628 = vmatpush.msra.mxu0 0.0
  %629 = vmatpush.msra.mxu0 0.0
  %630 = vmatpush.msra.mxu0 0.0
  %631 = vmatpush.msra.mxu0 %v46
  %632 = vmatpush.msra.mxu0 %v45
  %633 = vmatpush.msra.mxu0 %v44
  %634 = vmatpush.msra.mxu0 %v43
  %635 = vmatmul.f32.gmra.mxu0 %v617
  %v636 = vpop.f32.mrf.mxu0
  %v637 = vadd.f32 0.0, %v636
  %638 = vdwg.mxu0
  %v639 = vadd.f32 %v616, %v637
  %v640 = vxor.u32 %v639, 2147483648
  %v641 = vmul.f32 %v640, 1.442695
  %v642 = vpow.pop %v641
  %v643 = vadd.f32 %v642, 1.0
  %v644 = vrcp.pop %v643
  %v645 = vmul.f32 %v643, %v644
  %v646 = vsub.f32 1.0, %v645
  %v647 = vmul.f32 %v644, %v646
  %v648 = vadd.f32 %v644, %v647
  %vm649 = vweird.f32 %v643
  %vm650 = vweird.f32 %v644
  %vm651 = vmor %vm649, %vm650
  %v652 = vsel %vm651, %v644, %v648
  %v653 = vand.u32 2147483647, %v643
  %vm654 = vcmp.eq.f32.partialorder %v653, 8.507059e+37
  %v655 = vand.u32 %v643, 2147483648
  %v656 = vor.u32 1.1754944e-38, %v655
  %v657 = vsel %vm654, %v656, %v652
  %v658 = vmul.f32 1.0, %v657
  %v659 = vtanh.pop %v639
  %v660 = vmul.f32 %v658, %v602
  %662 = vrot.lane.b32.xlu0 %v659, 64
  %v663 = vpop.permute.xlu0 %662
  %v665 = vmul.f32 %v658, %v663
  %667 = vrot.lane.b32.xlu0 %v665, 32
  %v668 = vpop.permute.xlu0 %667
  %v670 = vadd.f32 %v660, %v668
  %v671 = vtanh.pop %v670
  %673 = vrot.lane.b32.xlu0 %v671, 64
  %v674 = vpop.permute.xlu0 %673
  %v676 = vmul.f32 %v658, %v674
  %678 = vrot.lane.b32.xlu0 %v676, 32
  %v679 = vpop.permute.xlu0 %678
  %s681 = scalar_lea.vmem [#allocation3], 56
  %682 = vst.msk [vmem:[%s681] sm:$0xff] %vm136, %v679
  %683 = vst.msk [vmem:[#allocation4] sm:$0xff] %vm136, %v679
  %685 = vrot.lane.b32.xlu0 %v670, 96
  %v686 = vpop.permute.xlu0 %685
  %688 = vst.msk [vmem:[#allocation5] sm:$0xff] %vm136, %v686
  %v689 = vld [vmem:[%s4] sm:$0xff]
  %v690 = vld [vmem:[%s4 + $0x8] sm:$0xff]
  %v691 = vld [vmem:[%s4 + $0x10] sm:$0xff]
  %v692 = vld [vmem:[%s4 + $0x18] sm:$0xff]
  %v693 = vld [vmem:[%s5] sm:$0xff]
  %v694 = vld [vmem:[%s5 + $0x8] sm:$0xff]
  %v695 = vld [vmem:[%s5 + $0x10] sm:$0xff]
  %v696 = vld [vmem:[%s5 + $0x18] sm:$0xff]
  %v697 = vld [vmem:[%s6] sm:$0x1]
  %v698 = vld [vmem:[#allocation3] sm:$0xff]
  %v699 = vld [vmem:[#allocation3 + $0x8] sm:$0xff]
  %v700 = vld [vmem:[#allocation3 + $0x10] sm:$0xff]
  %v701 = vld [vmem:[#allocation3 + $0x18] sm:$0xff]
  %v702 = vld [vmem:[#allocation3 + $0x20] sm:$0xff]
  %v703 = vld [vmem:[#allocation3 + $0x28] sm:$0xff]
  %v704 = vld [vmem:[#allocation3 + $0x30] sm:$0xff]
  %v705 = vld [vmem:[#allocation3 + $0x38] sm:$0xff]
  %v707 = vperm.slane %v697, 0
  %v710 = vsel %vm136, %v698, 0
  %v713 = vsel %vm136, %v699, 0
  %v716 = vsel %vm136, %v700, 0
  %v719 = vsel %vm136, %v701, 0
  %v722 = vsel %vm136, %v702, 0
  %v725 = vsel %vm136, %v703, 0
  %v728 = vsel %vm136, %v704, 0
  %v731 = vsel %vm136, %v705, 0
  %733 = vmatpush.msra.mxu0 0.0
  %734 = vmatpush.msra.mxu0 0.0
  %735 = vmatpush.msra.mxu0 0.0
  %736 = vmatpush.msra.mxu0 0.0
  %737 = vmatpush.msra.mxu0 0.0
  %738 = vmatpush.msra.mxu0 0.0
  %739 = vmatpush.msra.mxu0 0.0
  %740 = vmatpush.msra.mxu0 0.0
  %741 = vmatpush.msra.mxu0 0.0
  %742 = vmatpush.msra.mxu0 0.0
  %743 = vmatpush.msra.mxu0 0.0
  %744 = vmatpush.msra.mxu0 0.0
  %745 = vmatpush.msra.mxu0 %v692
  %746 = vmatpush.msra.mxu0 %v691
  %747 = vmatpush.msra.mxu0 %v690
  %748 = vmatpush.msra.mxu0 %v689
  %749 = vmatmul.f32.gmra.mxu0 %v710
  %v750 = vpop.f32.mrf.mxu0
  %v751 = vadd.f32 %v707, %v750
  %752 = vmatmul.f32.gmra.mxu0 %v713
  %v753 = vpop.f32.mrf.mxu0
  %v754 = vadd.f32 %v707, %v753
  %755 = vmatmul.f32.gmra.mxu0 %v716
  %v756 = vpop.f32.mrf.mxu0
  %v757 = vadd.f32 %v707, %v756
  %758 = vmatmul.f32.gmra.mxu0 %v719
  %v759 = vpop.f32.mrf.mxu0
  %v760 = vadd.f32 %v707, %v759
  %761 = vmatmul.f32.gmra.mxu0 %v722
  %v762 = vpop.f32.mrf.mxu0
  %v763 = vadd.f32 %v707, %v762
  %764 = vmatmul.f32.gmra.mxu0 %v725
  %v765 = vpop.f32.mrf.mxu0
  %v766 = vadd.f32 %v707, %v765
  %767 = vmatmul.f32.gmra.mxu0 %v728
  %v768 = vpop.f32.mrf.mxu0
  %v769 = vadd.f32 %v707, %v768
  %770 = vmatmul.f32.gmra.mxu0 %v731
  %v771 = vpop.f32.mrf.mxu0
  %v772 = vadd.f32 %v707, %v771
  %773 = vdwg.mxu0
  %774 = vst [vmem:[#allocation2] sm:$0xff] %v751
  %775 = vst [vmem:[#allocation2 + $0x8] sm:$0xff] %v754
  %776 = vst [vmem:[#allocation2 + $0x10] sm:$0xff] %v757
  %777 = vst [vmem:[#allocation2 + $0x18] sm:$0xff] %v760
  %778 = vst [vmem:[#allocation2 + $0x20] sm:$0xff] %v763
  %779 = vst [vmem:[#allocation2 + $0x28] sm:$0xff] %v766
  %780 = vst [vmem:[#allocation2 + $0x30] sm:$0xff] %v769
  %781 = vst [vmem:[#allocation2 + $0x38] sm:$0xff] %v772
  %s782 = scalar_lea.vmem [#allocation4], 8
  %v783 = vld [vmem:[%s782] sm:$0xff]
  %s784 = scalar_lea.vmem [#allocation5], 8
  %v785 = vld [vmem:[%s784] sm:$0xff]
  %v786 = vld [vmem:[#allocation2] sm:$0xff]
  %v788 = vsel %vm136, %v783, 0
  %790 = vmatpush.msra.mxu0 0.0
  %791 = vmatpush.msra.mxu0 0.0
  %792 = vmatpush.msra.mxu0 0.0
  %793 = vmatpush.msra.mxu0 0.0
  %794 = vmatpush.msra.mxu0 0.0
  %795 = vmatpush.msra.mxu0 0.0
  %796 = vmatpush.msra.mxu0 0.0
  %797 = vmatpush.msra.mxu0 0.0
  %798 = vmatpush.msra.mxu0 0.0
  %799 = vmatpush.msra.mxu0 0.0
  %800 = vmatpush.msra.mxu0 0.0
  %801 = vmatpush.msra.mxu0 0.0
  %802 = vmatpush.msra.mxu0 %v696
  %803 = vmatpush.msra.mxu0 %v695
  %804 = vmatpush.msra.mxu0 %v694
  %805 = vmatpush.msra.mxu0 %v693
  %806 = vmatmul.f32.gmra.mxu0 %v788
  %v807 = vpop.f32.mrf.mxu0
  %v808 = vadd.f32 0.0, %v807
  %809 = vdwg.mxu0
  %v810 = vadd.f32 %v786, %v808
  %v811 = vxor.u32 %v810, 2147483648
  %v812 = vmul.f32 %v811, 1.442695
  %v813 = vpow.pop %v812
  %v814 = vadd.f32 %v813, 1.0
  %v815 = vrcp.pop %v814
  %v816 = vmul.f32 %v814, %v815
  %v817 = vsub.f32 1.0, %v816
  %v818 = vmul.f32 %v815, %v817
  %v819 = vadd.f32 %v815, %v818
  %vm820 = vweird.f32 %v814
  %vm821 = vweird.f32 %v815
  %vm822 = vmor %vm820, %vm821
  %v823 = vsel %vm822, %v815, %v819
  %v824 = vand.u32 2147483647, %v814
  %vm825 = vcmp.eq.f32.partialorder %v824, 8.507059e+37
  %v826 = vand.u32 %v814, 2147483648
  %v827 = vor.u32 1.1754944e-38, %v826
  %v828 = vsel %vm825, %v827, %v823
  %v829 = vmul.f32 1.0, %v828
  %v830 = vtanh.pop %v810
  %832 = vrot.lane.b32.xlu0 %v785, 32
  %v833 = vpop.permute.xlu0 %832
  %v835 = vmul.f32 %v829, %v833
  %837 = vrot.lane.b32.xlu0 %v830, 64
  %v838 = vpop.permute.xlu0 %837
  %v840 = vmul.f32 %v829, %v838
  %842 = vrot.lane.b32.xlu0 %v840, 32
  %v843 = vpop.permute.xlu0 %842
  %v845 = vadd.f32 %v835, %v843
  %v846 = vtanh.pop %v845
  %848 = vrot.lane.b32.xlu0 %v846, 64
  %v849 = vpop.permute.xlu0 %848
  %v851 = vmul.f32 %v829, %v849
  %v852 = vld [vmem:[%s207] sm:$0xff]
  %854 = vrot.lane.b32.xlu0 %v851, 32
  %v855 = vpop.permute.xlu0 %854
  %v856 = vsel %vm136, %v855, 0
  %858 = vmatpush.msra.mxu0 0.0
  %859 = vmatpush.msra.mxu0 0.0
  %860 = vmatpush.msra.mxu0 0.0
  %861 = vmatpush.msra.mxu0 0.0
  %862 = vmatpush.msra.mxu0 0.0
  %863 = vmatpush.msra.mxu0 0.0
  %864 = vmatpush.msra.mxu0 0.0
  %865 = vmatpush.msra.mxu0 0.0
  %866 = vmatpush.msra.mxu0 0.0
  %867 = vmatpush.msra.mxu0 0.0
  %868 = vmatpush.msra.mxu0 0.0
  %869 = vmatpush.msra.mxu0 0.0
  %870 = vmatpush.msra.mxu0 %v696
  %871 = vmatpush.msra.mxu0 %v695
  %872 = vmatpush.msra.mxu0 %v694
  %873 = vmatpush.msra.mxu0 %v693
  %874 = vmatmul.f32.gmra.mxu0 %v856
  %v875 = vpop.f32.mrf.mxu0
  %v876 = vadd.f32 0.0, %v875
  %877 = vdwg.mxu0
  %v878 = vadd.f32 %v852, %v876
  %v879 = vxor.u32 %v878, 2147483648
  %v880 = vmul.f32 %v879, 1.442695
  %v881 = vpow.pop %v880
  %v882 = vadd.f32 %v881, 1.0
  %v883 = vrcp.pop %v882
  %v884 = vmul.f32 %v882, %v883
  %v885 = vsub.f32 1.0, %v884
  %v886 = vmul.f32 %v883, %v885
  %v887 = vadd.f32 %v883, %v886
  %vm888 = vweird.f32 %v882
  %vm889 = vweird.f32 %v883
  %vm890 = vmor %vm888, %vm889
  %v891 = vsel %vm890, %v883, %v887
  %v892 = vand.u32 2147483647, %v882
  %vm893 = vcmp.eq.f32.partialorder %v892, 8.507059e+37
  %v894 = vand.u32 %v882, 2147483648
  %v895 = vor.u32 1.1754944e-38, %v894
  %v896 = vsel %vm893, %v895, %v891
  %v897 = vmul.f32 1.0, %v896
  %v898 = vtanh.pop %v878
  %v899 = vmul.f32 %v897, %v845
  %901 = vrot.lane.b32.xlu0 %v898, 64
  %v902 = vpop.permute.xlu0 %901
  %v904 = vmul.f32 %v897, %v902
  %906 = vrot.lane.b32.xlu0 %v904, 32
  %v907 = vpop.permute.xlu0 %906
  %v909 = vadd.f32 %v899, %v907
  %v910 = vtanh.pop %v909
  %912 = vrot.lane.b32.xlu0 %v910, 64
  %v913 = vpop.permute.xlu0 %912
  %v915 = vmul.f32 %v897, %v913
  %v916 = vld [vmem:[%s275] sm:$0xff]
  %918 = vrot.lane.b32.xlu0 %v915, 32
  %v919 = vpop.permute.xlu0 %918
  %v920 = vsel %vm136, %v919, 0
  %922 = vmatpush.msra.mxu0 0.0
  %923 = vmatpush.msra.mxu0 0.0
  %924 = vmatpush.msra.mxu0 0.0
  %925 = vmatpush.msra.mxu0 0.0
  %926 = vmatpush.msra.mxu0 0.0
  %927 = vmatpush.msra.mxu0 0.0
  %928 = vmatpush.msra.mxu0 0.0
  %929 = vmatpush.msra.mxu0 0.0
  %930 = vmatpush.msra.mxu0 0.0
  %931 = vmatpush.msra.mxu0 0.0
  %932 = vmatpush.msra.mxu0 0.0
  %933 = vmatpush.msra.mxu0 0.0
  %934 = vmatpush.msra.mxu0 %v696
  %935 = vmatpush.msra.mxu0 %v695
  %936 = vmatpush.msra.mxu0 %v694
  %937 = vmatpush.msra.mxu0 %v693
  %938 = vmatmul.f32.gmra.mxu0 %v920
  %v939 = vpop.f32.mrf.mxu0
  %v940 = vadd.f32 0.0, %v939
  %941 = vdwg.mxu0
  %v942 = vadd.f32 %v916, %v940
  %v943 = vxor.u32 %v942, 2147483648
  %v944 = vmul.f32 %v943, 1.442695
  %v945 = vpow.pop %v944
  %v946 = vadd.f32 %v945, 1.0
  %v947 = vrcp.pop %v946
  %v948 = vmul.f32 %v946, %v947
  %v949 = vsub.f32 1.0, %v948
  %v950 = vmul.f32 %v947, %v949
  %v951 = vadd.f32 %v947, %v950
  %vm952 = vweird.f32 %v946
  %vm953 = vweird.f32 %v947
  %vm954 = vmor %vm952, %vm953
  %v955 = vsel %vm954, %v947, %v951
  %v956 = vand.u32 2147483647, %v946
  %vm957 = vcmp.eq.f32.partialorder %v956, 8.507059e+37
  %v958 = vand.u32 %v946, 2147483648
  %v959 = vor.u32 1.1754944e-38, %v958
  %v960 = vsel %vm957, %v959, %v955
  %v961 = vmul.f32 1.0, %v960
  %v962 = vtanh.pop %v942
  %v963 = vmul.f32 %v961, %v909
  %965 = vrot.lane.b32.xlu0 %v962, 64
  %v966 = vpop.permute.xlu0 %965
  %v968 = vmul.f32 %v961, %v966
  %970 = vrot.lane.b32.xlu0 %v968, 32
  %v971 = vpop.permute.xlu0 %970
  %v973 = vadd.f32 %v963, %v971
  %v974 = vtanh.pop %v973
  %976 = vrot.lane.b32.xlu0 %v974, 64
  %v977 = vpop.permute.xlu0 %976
  %v979 = vmul.f32 %v961, %v977
  %v980 = vld [vmem:[%s343] sm:$0xff]
  %982 = vrot.lane.b32.xlu0 %v979, 32
  %v983 = vpop.permute.xlu0 %982
  %v984 = vsel %vm136, %v983, 0
  %986 = vmatpush.msra.mxu0 0.0
  %987 = vmatpush.msra.mxu0 0.0
  %988 = vmatpush.msra.mxu0 0.0
  %989 = vmatpush.msra.mxu0 0.0
  %990 = vmatpush.msra.mxu0 0.0
  %991 = vmatpush.msra.mxu0 0.0
  %992 = vmatpush.msra.mxu0 0.0
  %993 = vmatpush.msra.mxu0 0.0
  %994 = vmatpush.msra.mxu0 0.0
  %995 = vmatpush.msra.mxu0 0.0
  %996 = vmatpush.msra.mxu0 0.0
  %997 = vmatpush.msra.mxu0 0.0
  %998 = vmatpush.msra.mxu0 %v696
  %999 = vmatpush.msra.mxu0 %v695
  %1000 = vmatpush.msra.mxu0 %v694
  %1001 = vmatpush.msra.mxu0 %v693
  %1002 = vmatmul.f32.gmra.mxu0 %v984
  %v1003 = vpop.f32.mrf.mxu0
  %v1004 = vadd.f32 0.0, %v1003
  %1005 = vdwg.mxu0
  %v1006 = vadd.f32 %v980, %v1004
  %v1007 = vxor.u32 %v1006, 2147483648
  %v1008 = vmul.f32 %v1007, 1.442695
  %v1009 = vpow.pop %v1008
  %v1010 = vadd.f32 %v1009, 1.0
  %v1011 = vrcp.pop %v1010
  %v1012 = vmul.f32 %v1010, %v1011
  %v1013 = vsub.f32 1.0, %v1012
  %v1014 = vmul.f32 %v1011, %v1013
  %v1015 = vadd.f32 %v1011, %v1014
  %vm1016 = vweird.f32 %v1010
  %vm1017 = vweird.f32 %v1011
  %vm1018 = vmor %vm1016, %vm1017
  %v1019 = vsel %vm1018, %v1011, %v1015
  %v1020 = vand.u32 2147483647, %v1010
  %vm1021 = vcmp.eq.f32.partialorder %v1020, 8.507059e+37
  %v1022 = vand.u32 %v1010, 2147483648
  %v1023 = vor.u32 1.1754944e-38, %v1022
  %v1024 = vsel %vm1021, %v1023, %v1019
  %v1025 = vmul.f32 1.0, %v1024
  %v1026 = vtanh.pop %v1006
  %v1027 = vmul.f32 %v1025, %v973
  %1029 = vrot.lane.b32.xlu0 %v1026, 64
  %v1030 = vpop.permute.xlu0 %1029
  %v1032 = vmul.f32 %v1025, %v1030
  %1034 = vrot.lane.b32.xlu0 %v1032, 32
  %v1035 = vpop.permute.xlu0 %1034
  %v1037 = vadd.f32 %v1027, %v1035
  %v1038 = vtanh.pop %v1037
  %1040 = vrot.lane.b32.xlu0 %v1038, 64
  %v1041 = vpop.permute.xlu0 %1040
  %v1043 = vmul.f32 %v1025, %v1041
  %v1044 = vld [vmem:[%s411] sm:$0xff]
  %1046 = vrot.lane.b32.xlu0 %v1043, 32
  %v1047 = vpop.permute.xlu0 %1046
  %v1048 = vsel %vm136, %v1047, 0
  %1050 = vmatpush.msra.mxu0 0.0
  %1051 = vmatpush.msra.mxu0 0.0
  %1052 = vmatpush.msra.mxu0 0.0
  %1053 = vmatpush.msra.mxu0 0.0
  %1054 = vmatpush.msra.mxu0 0.0
  %1055 = vmatpush.msra.mxu0 0.0
  %1056 = vmatpush.msra.mxu0 0.0
  %1057 = vmatpush.msra.mxu0 0.0
  %1058 = vmatpush.msra.mxu0 0.0
  %1059 = vmatpush.msra.mxu0 0.0
  %1060 = vmatpush.msra.mxu0 0.0
  %1061 = vmatpush.msra.mxu0 0.0
  %1062 = vmatpush.msra.mxu0 %v696
  %1063 = vmatpush.msra.mxu0 %v695
  %1064 = vmatpush.msra.mxu0 %v694
  %1065 = vmatpush.msra.mxu0 %v693
  %1066 = vmatmul.f32.gmra.mxu0 %v1048
  %v1067 = vpop.f32.mrf.mxu0
  %v1068 = vadd.f32 0.0, %v1067
  %1069 = vdwg.mxu0
  %v1070 = vadd.f32 %v1044, %v1068
  %v1071 = vxor.u32 %v1070, 2147483648
  %v1072 = vmul.f32 %v1071, 1.442695
  %v1073 = vpow.pop %v1072
  %v1074 = vadd.f32 %v1073, 1.0
  %v1075 = vrcp.pop %v1074
  %v1076 = vmul.f32 %v1074, %v1075
  %v1077 = vsub.f32 1.0, %v1076
  %v1078 = vmul.f32 %v1075, %v1077
  %v1079 = vadd.f32 %v1075, %v1078
  %vm1080 = vweird.f32 %v1074
  %vm1081 = vweird.f32 %v1075
  %vm1082 = vmor %vm1080, %vm1081
  %v1083 = vsel %vm1082, %v1075, %v1079
  %v1084 = vand.u32 2147483647, %v1074
  %vm1085 = vcmp.eq.f32.partialorder %v1084, 8.507059e+37
  %v1086 = vand.u32 %v1074, 2147483648
  %v1087 = vor.u32 1.1754944e-38, %v1086
  %v1088 = vsel %vm1085, %v1087, %v1083
  %v1089 = vmul.f32 1.0, %v1088
  %v1090 = vtanh.pop %v1070
  %v1091 = vmul.f32 %v1089, %v1037
  %1093 = vrot.lane.b32.xlu0 %v1090, 64
  %v1094 = vpop.permute.xlu0 %1093
  %v1096 = vmul.f32 %v1089, %v1094
  %1098 = vrot.lane.b32.xlu0 %v1096, 32
  %v1099 = vpop.permute.xlu0 %1098
  %v1101 = vadd.f32 %v1091, %v1099
  %v1102 = vtanh.pop %v1101
  %1104 = vrot.lane.b32.xlu0 %v1102, 64
  %v1105 = vpop.permute.xlu0 %1104
  %v1107 = vmul.f32 %v1089, %v1105
  %v1108 = vld [vmem:[%s479] sm:$0xff]
  %1110 = vrot.lane.b32.xlu0 %v1107, 32
  %v1111 = vpop.permute.xlu0 %1110
  %v1112 = vsel %vm136, %v1111, 0
  %1114 = vmatpush.msra.mxu0 0.0
  %1115 = vmatpush.msra.mxu0 0.0
  %1116 = vmatpush.msra.mxu0 0.0
  %1117 = vmatpush.msra.mxu0 0.0
  %1118 = vmatpush.msra.mxu0 0.0
  %1119 = vmatpush.msra.mxu0 0.0
  %1120 = vmatpush.msra.mxu0 0.0
  %1121 = vmatpush.msra.mxu0 0.0
  %1122 = vmatpush.msra.mxu0 0.0
  %1123 = vmatpush.msra.mxu0 0.0
  %1124 = vmatpush.msra.mxu0 0.0
  %1125 = vmatpush.msra.mxu0 0.0
  %1126 = vmatpush.msra.mxu0 %v696
  %1127 = vmatpush.msra.mxu0 %v695
  %1128 = vmatpush.msra.mxu0 %v694
  %1129 = vmatpush.msra.mxu0 %v693
  %1130 = vmatmul.f32.gmra.mxu0 %v1112
  %v1131 = vpop.f32.mrf.mxu0
  %v1132 = vadd.f32 0.0, %v1131
  %1133 = vdwg.mxu0
  %v1134 = vadd.f32 %v1108, %v1132
  %v1135 = vxor.u32 %v1134, 2147483648
  %v1136 = vmul.f32 %v1135, 1.442695
  %v1137 = vpow.pop %v1136
  %v1138 = vadd.f32 %v1137, 1.0
  %v1139 = vrcp.pop %v1138
  %v1140 = vmul.f32 %v1138, %v1139
  %v1141 = vsub.f32 1.0, %v1140
  %v1142 = vmul.f32 %v1139, %v1141
  %v1143 = vadd.f32 %v1139, %v1142
  %vm1144 = vweird.f32 %v1138
  %vm1145 = vweird.f32 %v1139
  %vm1146 = vmor %vm1144, %vm1145
  %v1147 = vsel %vm1146, %v1139, %v1143
  %v1148 = vand.u32 2147483647, %v1138
  %vm1149 = vcmp.eq.f32.partialorder %v1148, 8.507059e+37
  %v1150 = vand.u32 %v1138, 2147483648
  %v1151 = vor.u32 1.1754944e-38, %v1150
  %v1152 = vsel %vm1149, %v1151, %v1147
  %v1153 = vmul.f32 1.0, %v1152
  %v1154 = vtanh.pop %v1134
  %v1155 = vmul.f32 %v1153, %v1101
  %1157 = vrot.lane.b32.xlu0 %v1154, 64
  %v1158 = vpop.permute.xlu0 %1157
  %v1160 = vmul.f32 %v1153, %v1158
  %1162 = vrot.lane.b32.xlu0 %v1160, 32
  %v1163 = vpop.permute.xlu0 %1162
  %v1165 = vadd.f32 %v1155, %v1163
  %v1166 = vtanh.pop %v1165
  %1168 = vrot.lane.b32.xlu0 %v1166, 64
  %v1169 = vpop.permute.xlu0 %1168
  %v1171 = vmul.f32 %v1153, %v1169
  %v1172 = vld [vmem:[%s547] sm:$0xff]
  %1174 = vrot.lane.b32.xlu0 %v1171, 32
  %v1175 = vpop.permute.xlu0 %1174
  %v1176 = vsel %vm136, %v1175, 0
  %1178 = vmatpush.msra.mxu0 0.0
  %1179 = vmatpush.msra.mxu0 0.0
  %1180 = vmatpush.msra.mxu0 0.0
  %1181 = vmatpush.msra.mxu0 0.0
  %1182 = vmatpush.msra.mxu0 0.0
  %1183 = vmatpush.msra.mxu0 0.0
  %1184 = vmatpush.msra.mxu0 0.0
  %1185 = vmatpush.msra.mxu0 0.0
  %1186 = vmatpush.msra.mxu0 0.0
  %1187 = vmatpush.msra.mxu0 0.0
  %1188 = vmatpush.msra.mxu0 0.0
  %1189 = vmatpush.msra.mxu0 0.0
  %1190 = vmatpush.msra.mxu0 %v696
  %1191 = vmatpush.msra.mxu0 %v695
  %1192 = vmatpush.msra.mxu0 %v694
  %1193 = vmatpush.msra.mxu0 %v693
  %1194 = vmatmul.f32.gmra.mxu0 %v1176
  %v1195 = vpop.f32.mrf.mxu0
  %v1196 = vadd.f32 0.0, %v1195
  %1197 = vdwg.mxu0
  %v1198 = vadd.f32 %v1172, %v1196
  %v1199 = vxor.u32 %v1198, 2147483648
  %v1200 = vmul.f32 %v1199, 1.442695
  %v1201 = vpow.pop %v1200
  %v1202 = vadd.f32 %v1201, 1.0
  %v1203 = vrcp.pop %v1202
  %v1204 = vmul.f32 %v1202, %v1203
  %v1205 = vsub.f32 1.0, %v1204
  %v1206 = vmul.f32 %v1203, %v1205
  %v1207 = vadd.f32 %v1203, %v1206
  %vm1208 = vweird.f32 %v1202
  %vm1209 = vweird.f32 %v1203
  %vm1210 = vmor %vm1208, %vm1209
  %v1211 = vsel %vm1210, %v1203, %v1207
  %v1212 = vand.u32 2147483647, %v1202
  %vm1213 = vcmp.eq.f32.partialorder %v1212, 8.507059e+37
  %v1214 = vand.u32 %v1202, 2147483648
  %v1215 = vor.u32 1.1754944e-38, %v1214
  %v1216 = vsel %vm1213, %v1215, %v1211
  %v1217 = vmul.f32 1.0, %v1216
  %v1218 = vtanh.pop %v1198
  %v1219 = vmul.f32 %v1217, %v1165
  %1221 = vrot.lane.b32.xlu0 %v1218, 64
  %v1222 = vpop.permute.xlu0 %1221
  %v1224 = vmul.f32 %v1217, %v1222
  %1226 = vrot.lane.b32.xlu0 %v1224, 32
  %v1227 = vpop.permute.xlu0 %1226
  %v1229 = vadd.f32 %v1219, %v1227
  %v1230 = vtanh.pop %v1229
  %1232 = vrot.lane.b32.xlu0 %v1230, 64
  %v1233 = vpop.permute.xlu0 %1232
  %v1235 = vmul.f32 %v1217, %v1233
  %v1236 = vld [vmem:[%s615] sm:$0xff]
  %1238 = vrot.lane.b32.xlu0 %v1235, 32
  %v1239 = vpop.permute.xlu0 %1238
  %v1240 = vsel %vm136, %v1239, 0
  %1242 = vmatpush.msra.mxu0 0.0
  %1243 = vmatpush.msra.mxu0 0.0
  %1244 = vmatpush.msra.mxu0 0.0
  %1245 = vmatpush.msra.mxu0 0.0
  %1246 = vmatpush.msra.mxu0 0.0
  %1247 = vmatpush.msra.mxu0 0.0
  %1248 = vmatpush.msra.mxu0 0.0
  %1249 = vmatpush.msra.mxu0 0.0
  %1250 = vmatpush.msra.mxu0 0.0
  %1251 = vmatpush.msra.mxu0 0.0
  %1252 = vmatpush.msra.mxu0 0.0
  %1253 = vmatpush.msra.mxu0 0.0
  %1254 = vmatpush.msra.mxu0 %v696
  %1255 = vmatpush.msra.mxu0 %v695
  %1256 = vmatpush.msra.mxu0 %v694
  %1257 = vmatpush.msra.mxu0 %v693
  %1258 = vmatmul.f32.gmra.mxu0 %v1240
  %v1259 = vpop.f32.mrf.mxu0
  %v1260 = vadd.f32 0.0, %v1259
  %1261 = vdwg.mxu0
  %v1262 = vadd.f32 %v1236, %v1260
  %v1263 = vxor.u32 %v1262, 2147483648
  %v1264 = vmul.f32 %v1263, 1.442695
  %v1265 = vpow.pop %v1264
  %v1266 = vadd.f32 %v1265, 1.0
  %v1267 = vrcp.pop %v1266
  %v1268 = vmul.f32 %v1266, %v1267
  %v1269 = vsub.f32 1.0, %v1268
  %v1270 = vmul.f32 %v1267, %v1269
  %v1271 = vadd.f32 %v1267, %v1270
  %vm1272 = vweird.f32 %v1266
  %vm1273 = vweird.f32 %v1267
  %vm1274 = vmor %vm1272, %vm1273
  %v1275 = vsel %vm1274, %v1267, %v1271
  %v1276 = vand.u32 2147483647, %v1266
  %vm1277 = vcmp.eq.f32.partialorder %v1276, 8.507059e+37
  %v1278 = vand.u32 %v1266, 2147483648
  %v1279 = vor.u32 1.1754944e-38, %v1278
  %v1280 = vsel %vm1277, %v1279, %v1275
  %v1281 = vmul.f32 1.0, %v1280
  %v1282 = vtanh.pop %v1262
  %v1283 = vmul.f32 %v1281, %v1229
  %1285 = vrot.lane.b32.xlu0 %v1282, 64
  %v1286 = vpop.permute.xlu0 %1285
  %v1288 = vmul.f32 %v1281, %v1286
  %1290 = vrot.lane.b32.xlu0 %v1288, 32
  %v1291 = vpop.permute.xlu0 %1290
  %v1293 = vadd.f32 %v1283, %v1291
  %v1294 = vtanh.pop %v1293
  %1296 = vrot.lane.b32.xlu0 %v1294, 64
  %v1297 = vpop.permute.xlu0 %1296
  %v1299 = vmul.f32 %v1281, %v1297
  %1301 = vrot.lane.b32.xlu0 %v1299, 32
  %v1302 = vpop.permute.xlu0 %1301
  %1304 = vst.msk [vmem:[%s782] sm:$0xff] %vm136, %v1302
  %1306 = vrot.lane.b32.xlu0 %v1293, 96
  %v1307 = vpop.permute.xlu0 %1306
  %1309 = vst.msk [vmem:[%s784] sm:$0xff] %vm136, %v1307
  // Predicated region
  $region42: #{multi_step_lstm_forward.1} parent=0 // pred_check
    %p1310 = pneg %p32
  $region43: #{multi_step_lstm_forward.1} parent=0 // pred_check_branch
    %1312 = sbr.rel (%p1310) target = $region45
  $region44: #{multi_step_lstm_forward.1} parent=0 // pred_region
    %v1313 = vld [vmem:[%s782] sm:$0xff]
    %v1314 = vld [vmem:[%s7] sm:$0xff]
    %v1315 = vld [vmem:[%s7 + $0x8] sm:$0xff]
    %v1316 = vld [vmem:[%s7 + $0x10] sm:$0xff]
    %v1317 = vld [vmem:[%s7 + $0x18] sm:$0xff]
    %v1318 = vld [vmem:[%s8] sm:$0x1]
    %v1320 = vperm.slane %v1318, 0
    %v1323 = vsel %vm136, %v1313, 0
    %1325 = vmatpush.msra.mxu0 0.0
    %1326 = vmatpush.msra.mxu0 0.0
    %1327 = vmatpush.msra.mxu0 0.0
    %1328 = vmatpush.msra.mxu0 0.0
    %1329 = vmatpush.msra.mxu0 0.0
    %1330 = vmatpush.msra.mxu0 0.0
    %1331 = vmatpush.msra.mxu0 0.0
    %1332 = vmatpush.msra.mxu0 0.0
    %1333 = vmatpush.msra.mxu0 0.0
    %1334 = vmatpush.msra.mxu0 0.0
    %1335 = vmatpush.msra.mxu0 0.0
    %1336 = vmatpush.msra.mxu0 0.0
    %1337 = vmatpush.msra.mxu0 %v1317
    %1338 = vmatpush.msra.mxu0 %v1316
    %1339 = vmatpush.msra.mxu0 %v1315
    %1340 = vmatpush.msra.mxu0 %v1314
    %1341 = vmatmul.f32.gmra.mxu0 %v1323
    %v1342 = vpop.f32.mrf.mxu0
    %v1343 = vadd.f32 %v1320, %v1342
    %1344 = vdwg.mxu0
    %1345 = vst [vmem:[%s9] sm:$0xff] %v1343
  $region45: #{multi_step_lstm_forward.1} parent=0 // pred_fallthru
    _
  // Predicated region
  $region46: #{multi_step_lstm_forward.1} parent=0 // pred_check
    _
  $region47: #{multi_step_lstm_forward.1} parent=0 // pred_check_branch
    %1347 = sbr.rel (0) target = $region49
  $region48: #{multi_step_lstm_forward.1} parent=0 // pred_region
    _
  $region49: #{multi_step_lstm_forward.1} parent=0 // pred_fallthru
    _
  // Predicated region
  $region50: #{multi_step_lstm_forward.1} parent=0 // pred_check
    _
  $region51: #{multi_step_lstm_forward.1} parent=0 // pred_check_branch
    %1349 = sbr.rel (0) target = $region53
  $region52: #{multi_step_lstm_forward.1} parent=0 // pred_region
    _
  $region53: #{multi_step_lstm_forward.1} parent=0 // pred_fallthru
    _

</llo_original>
